<compile_context>
chip_gen: v7x
topology: tpu7x:2x2x1
jax: 0.10.0
libtpu: 0.0.40
codegen_flags: <defaults>
</compile_context>

<pallas_src>
import functools

import jax
import jax.numpy as jnp
import numpy as np
from jax.experimental import pallas as pl
from jax.experimental.pallas import tpu as pltpu


# ---------------------------------------------------------------------------
# Pallas kernel: one block of Bt graphs per grid step.
# ---------------------------------------------------------------------------
def context_gat_kernel(hid_ref, fn_ref, fe_ref, adj_ref, nmask_ref,
                       wp_ref, wsc_ref, wnode_ref, io_ref, *, k_update_steps):
    # Block shapes:
    #   hid_ref   (Bt, 1, C)      f32    fn_ref  (Bt*N, F)     bf16
    #   fe_ref    (Bt, N, N, F)   bf16   adj_ref (Bt, N, N)    int8
    #   nmask_ref (Bt*N, 1)       int8
    #   wp_ref    (C, F)          bf16   wsc_ref (4, F)        f32   wnode_ref (2F, F) bf16
    #   io_ref    (Bt*N, F)       bf16
    Bt, N, _, F = fe_ref.shape
    NEG = jnp.float32(-1e30)

    # ------------- loop-invariant work (hoisted out of the k-step loop) -------------
    # h_t = input_proj(input_hidden): bf16 operands on the MXU, f32 accumulation.
    hid = hid_ref[...].reshape(Bt, hid_ref.shape[-1])                     # (Bt, C) f32
    h = jnp.dot(hid.astype(jnp.bfloat16), wp_ref[...],
                preferred_element_type=jnp.float32)                       # (Bt, F) f32

    # Packed score weights: rows = [wobj_h, wobj_x, wrel_h, wrel_e].
    wsc = wsc_ref[...]                                                    # (4, F) f32
    w_obj_h, w_obj_x = wsc[0:1, :], wsc[1:2, :]                           # (1, F) f32
    w_rel_h = wsc[2:3, :]                                                 # (1, F) f32
    w_rel_e_bf = wsc[3:4, :].astype(jnp.bfloat16)                         # (1, F) bf16

    # h-dependent halves of the two width-1 score heads (one scalar per graph).
    sc_h_obj = jnp.sum(h * w_obj_h, axis=-1, keepdims=True)               # (Bt, 1)
    sc_h_rel = jnp.sum(h * w_rel_h, axis=-1, keepdims=True)               # (Bt, 1)

    adj_pos = adj_ref[...].astype(jnp.int32) > 0                          # (Bt, N, N) bool
    # Additive softmax mask (replaces 2 post-exp selects per element per step).
    bias = jnp.where(adj_pos, 0.0, NEG).astype(jnp.float32)               # (Bt, N, N)

    nmask_pos = nmask_ref[...].astype(jnp.int32) > 0                      # (Bt*N, 1) bool

    # Edge features stay bf16 end-to-end; only reductions accumulate in f32.
    fe = fe_ref[...]                                                      # (Bt, N, N, F) bf16
    # Relation score s_e is loop-invariant (update_relations=False): width-1 head as a
    # bf16 VPU multiply + f32-accumulated lane reduction (no MXU 1-column push).
    s_e = (jnp.sum(fe * w_rel_e_bf, axis=-1, dtype=jnp.float32)
           + sc_h_rel[:, :, None])                                        # (Bt, N, N) f32
    se_biased = s_e + bias                                                # (Bt, N, N)
    m_e = jnp.max(se_biased, axis=-1, keepdims=True)                      # (Bt, N, 1), hoisted

    fn_t = fn_ref[...].astype(jnp.float32).reshape(Bt, N, F)              # (Bt, N, F) f32
    wnode = wnode_ref[...]                                                # (2F, F) bf16

    # TODO(synk): if k_update_steps grows beyond ~2, switch to lax.fori_loop
    # (unroll=True) carrying fn_t to bound vreg live ranges.
    for _ in range(k_update_steps):
        fn_bf = fn_t.astype(jnp.bfloat16)                                 # (Bt, N, F)

        # ---- object score: s_n[b, j] = W_obj . [h_b ; F_n[b, j]] --------------------
        s_n = jnp.sum(fn_t * w_obj_x, axis=-1) + sc_h_obj                 # (Bt, N) f32

        # ---- masked softmax over incoming {node msgs} U {edge msgs} per dst i -------
        sn_biased = s_n[:, None, :] + bias                                # [b,i,j] = s_n[b,j] (+mask)
        m = jnp.maximum(jnp.max(sn_biased, axis=-1, keepdims=True), m_e)  # (Bt, N, 1)
        en = jnp.exp(sn_biased - m)                                       # masked entries underflow to 0
        ee = jnp.exp(se_biased - m)
        denom = (jnp.sum(en, axis=-1, keepdims=True) +
                 jnp.sum(ee, axis=-1, keepdims=True))                     # (Bt, N, 1)
        inv = 1.0 / jnp.maximum(denom, 1e-20)
        alpha_n = (en * inv).astype(jnp.bfloat16)                         # (Bt, N, N)
        alpha_e = (ee * inv).astype(jnp.bfloat16)

        # ---- applied_alpha = sum over messages of alpha * F_{n|e} -------------------
        # Both node and edge message aggregation on the VPU: bf16 products, f32
        # accumulation. K=M=8 batched matmuls would waste the MXU at these shapes.
        applied = (
            jnp.sum(alpha_n[..., None] * fn_bf[:, None, :, :],
                    axis=2, dtype=jnp.float32)
            + jnp.sum(alpha_e[..., None] * fe, axis=2, dtype=jnp.float32)
        )                                                                 # (Bt, N, F) f32

        # ---- F_i(t+1) = relu(W_node . [applied ; F_i]) -------------------------------
        # Single fused K=2F matmul (fills the 256-deep MXU on v6e/v7x); M = Bt*N rows.
        cat = jnp.concatenate([applied, fn_t], axis=-1)                   # (Bt, N, 2F) f32
        cat2 = cat.reshape(Bt * N, 2 * F).astype(jnp.bfloat16)
        fn_t = jax.nn.relu(
            jnp.dot(cat2, wnode, preferred_element_type=jnp.float32)
        ).reshape(Bt, N, F)

    # pad_sequence semantics: zero rows for padded nodes. Flat (Bt*N, F) bf16 store,
    # last dim = F (multiple of 128) so the store is lane-dense.
    io_ref[...] = jnp.where(nmask_pos, fn_t.reshape(Bt * N, F), 0.0).astype(io_ref.dtype)


# ---------------------------------------------------------------------------
# Wrapper
# ---------------------------------------------------------------------------
def context_gat_forward(hidden, f_n, f_e, adj, node_mask, params,
                        k_update_steps=1, block_graphs=4):
    B, N, F = f_n.shape
    C = hidden.shape[-1]
    Bt = min(block_graphs, B)
    assert B % Bt == 0, "batch must be divisible by the graph block size"

    # bf16 operands for the MXU / DMA; int8 adjacency + node mask; scores stay f32.
    hidden3 = hidden.astype(jnp.float32).reshape(B, 1, C)      # unit axis keeps block dims legal
    f_n_flat = f_n.astype(jnp.bfloat16).reshape(B * N, F)      # sublane-dense bf16
    f_e_bf = f_e.astype(jnp.bfloat16)
    adj_i8 = (adj != 0).astype(jnp.int8)
    nmask_i8 = (node_mask != 0).astype(jnp.int8).reshape(B * N, 1)

    wp_bf = params["wp"].astype(jnp.bfloat16)                  # (C, F)
    wnode_bf = params["wnode"].astype(jnp.bfloat16)            # (2F, F)
    # Pack both width-1 score heads into one (4, F) slab:
    #   row 0: wobj (h part)  row 1: wobj (F_n part)  row 2: wrel (h part)  row 3: wrel (F_e part)
    wobj, wrel = params["wobj"], params["wrel"]
    w_scores = jnp.concatenate(
        [wobj[:F].T, wobj[F:].T, wrel[:F].T, wrel[F:].T], axis=0).astype(jnp.float32)

    kernel = functools.partial(context_gat_kernel, k_update_steps=k_update_steps)

    # Explicit VMEM budget: double-buffered inputs/outputs + headroom, capped for v7x (64 MiB VMEM).
    fe_blk = Bt * N * N * F * 2
    fn_blk = Bt * N * F * 2
    io_blk = Bt * N * F * 2
    adj_blk = Bt * N * N
    nm_blk = Bt * N
    hid_blk = Bt * C * 4
    w_blk = C * F * 2 + 4 * F * 4 + 2 * F * F * 2
    block_bytes = 2 * (fe_blk + fn_blk + io_blk + adj_blk + nm_blk + hid_blk + w_blk)
    vmem_limit = int(min(48 * 1024 * 1024, max(16 * 1024 * 1024, 6 * block_bytes)))

    io_flat = pl.pallas_call(
        kernel,
        out_shape=jax.ShapeDtypeStruct((B * N, F), jnp.bfloat16),
        grid_spec=pltpu.PrefetchScalarGridSpec(
            num_scalar_prefetch=0,
            grid=(B // Bt,),
            in_specs=[
                pl.BlockSpec((Bt, 1, C), lambda b: (b, 0, 0)),             # hidden      f32
                pl.BlockSpec((Bt * N, F), lambda b: (b, 0)),               # F_n (flat)  bf16
                pl.BlockSpec((Bt, N, N, F), lambda b: (b, 0, 0, 0)),       # F_e         bf16
                pl.BlockSpec((Bt, N, N), lambda b: (b, 0, 0)),             # adjacency   int8
                pl.BlockSpec((Bt * N, 1), lambda b: (b, 0)),               # node mask   int8
                pl.BlockSpec((C, F), lambda b: (0, 0)),                    # W_proj^T    bf16
                pl.BlockSpec((4, F), lambda b: (0, 0)),                    # packed score weights f32
                pl.BlockSpec((2 * F, F), lambda b: (0, 0)),                # W_node^T    bf16
            ],
            out_specs=pl.BlockSpec((Bt * N, F), lambda b: (b, 0)),
        ),
        compiler_params=pltpu.CompilerParams(
            dimension_semantics=("parallel",),      # graph-block axis -> both v7x TCs
            vmem_limit_bytes=vmem_limit,
        ),
    )(hidden3, f_n_flat, f_e_bf, adj_i8, nmask_i8, wp_bf, w_scores, wnode_bf)

    io = io_flat.reshape(B, N, F)
    # io_mask = io.sum(-1) != 0  (derived outside so the kernel's only store is the
    # lane-dense bf16 io slab).
    io_mask = jnp.sum(io.astype(jnp.float32), axis=-1) != 0
    return io, io_mask


# ---------------------------------------------------------------------------
# Pure-JAX reference (mirrors the PyTorch forward on the dense graph layout)
# ---------------------------------------------------------------------------
def context_gat_reference(hidden, f_n, f_e, adj, node_mask, params, k_update_steps=1):
    B, N, F = f_n.shape
    wp, wobj, wrel, wnode = params["wp"], params["wobj"], params["wrel"], params["wnode"]
    adjf = adj.astype(jnp.float32)
    NEG = -1e30

    h = hidden @ wp                                                # (B, F)
    h_nodes = jnp.broadcast_to(h[:, None, :], (B, N, F))
    fn_t = f_n
    for _ in range(k_update_steps):
        s_n = h_nodes @ wobj[:F] + fn_t @ wobj[F:]                 # (B, N, 1)
        s_e = (f_e @ wrel[F:])[..., 0] + (h @ wrel[:F])[:, None]   # (B, N, N)
        scores_n = jnp.broadcast_to(jnp.swapaxes(s_n, 1, 2), (B, N, N))
        sn_m = jnp.where(adjf > 0, scores_n, NEG)
        se_m = jnp.where(adjf > 0, s_e, NEG)
        m = jnp.maximum(sn_m.max(-1, keepdims=True), se_m.max(-1, keepdims=True))
        en = jnp.where(adjf > 0, jnp.exp(sn_m - m), 0.0)
        ee = jnp.where(adjf > 0, jnp.exp(se_m - m), 0.0)
        denom = en.sum(-1, keepdims=True) + ee.sum(-1, keepdims=True)
        inv = 1.0 / jnp.maximum(denom, 1e-20)
        alpha_n, alpha_e = en * inv, ee * inv
        applied = (jnp.einsum("bij,bjf->bif", alpha_n, fn_t) +
                   jnp.einsum("bij,bijf->bif", alpha_e, f_e))
        fn_t = jax.nn.relu(applied @ wnode[:F] + fn_t @ wnode[F:])
    io = fn_t * node_mask[..., None].astype(jnp.float32)
    io_mask = io.sum(-1) != 0
    return io, io_mask


# ---------------------------------------------------------------------------
# Demo
# ---------------------------------------------------------------------------
if __name__ == "__main__":
    B = 16           # number of graphs in the batch (4 grid steps of 4 graphs)
    N = 8            # max nodes per graph
    C = 128          # context_dim
    F = 128          # feature_dim
    num_nodes = [8, 6, 5, 8, 7, 4, 8, 6, 8, 5, 6, 7, 8, 4, 8, 6]  # real nodes per graph

    key = jax.random.PRNGKey(0)
    k_hid, k_fn, k_fe, k_wp, k_wo, k_wr, k_wn = jax.random.split(key, 7)

    hidden = jax.random.normal(k_hid, (B, C), jnp.float32)
    f_n = jax.random.normal(k_fn, (B, N, F), jnp.float32)
    f_e = jax.random.normal(k_fe, (B, N, N, F), jnp.float32)

    # Deterministic parameters (nn.Linear weights, stored transposed: y = x @ W^T).
    params = {
        "wp":    jax.random.normal(k_wp, (C, F), jnp.float32) / np.sqrt(C),
        "wobj":  jax.random.normal(k_wo, (2 * F, 1), jnp.float32) / np.sqrt(2 * F),
        "wrel":  jax.random.normal(k_wr, (2 * F, 1), jnp.float32) / np.sqrt(2 * F),
        "wnode": jax.random.normal(k_wn, (2 * F, F), jnp.float32) / np.sqrt(2 * F),
    }

    # Deterministic bidirectional-ring graphs; adj[b, dst, src].
    adj_np = np.zeros((B, N, N), np.float32)
    mask_np = np.zeros((B, N), np.float32)
    for b, nb in enumerate(num_nodes):
        mask_np[b, :nb] = 1.0
        for j in range(nb):
            adj_np[b, (j + 1) % nb, j] = 1.0
            adj_np[b, (j - 1) % nb, j] = 1.0
    adj = jnp.asarray(adj_np)
    node_mask = jnp.asarray(mask_np)
    # zero node/edge features on padding so they can't leak in (matches DGL: pads don't exist)
    f_n = f_n * node_mask[..., None]
    f_e = f_e * adj[..., None]

    io, io_mask = context_gat_forward(hidden, f_n, f_e, adj, node_mask, params,
                                      k_update_steps=1, block_graphs=4)
    io = jax.block_until_ready(io)
    io_mask = jax.block_until_ready(io_mask)

    # Reference gets the same bf16-rounded F_n / F_e the kernel consumes, so the
    # comparison isolates algorithmic differences from input quantization.
    f_n_r = f_n.astype(jnp.bfloat16).astype(jnp.float32)
    f_e_r = f_e.astype(jnp.bfloat16).astype(jnp.float32)
    io_ref, io_mask_ref = context_gat_reference(hidden, f_n_r, f_e_r, adj, node_mask,
                                                params, k_update_steps=1)
    io_f32 = np.asarray(io.astype(jnp.float32))
    np.testing.assert_allclose(io_f32, np.asarray(io_ref), rtol=2e-2, atol=3e-2)
    assert np.array_equal(np.asarray(io_mask), np.asarray(io_mask_ref))

    print("KERNEL_OK")
</pallas_src>

<mosaic_0001>
module attributes {stable_mosaic.version = 11 : i64} {
  func.func @context_gat_kernel(%arg0: i32, %arg1: memref<4x1x128xf32, #tpu.memory_space<vmem>>, %arg2: memref<32x128xbf16, #tpu.memory_space<vmem>>, %arg3: memref<4x8x8x128xbf16, #tpu.memory_space<vmem>>, %arg4: memref<4x8x8xi8, #tpu.memory_space<vmem>>, %arg5: memref<32x1xi8, #tpu.memory_space<vmem>>, %arg6: memref<128x128xbf16, #tpu.memory_space<vmem>>, %arg7: memref<4x128xf32, #tpu.memory_space<vmem>>, %arg8: memref<256x128xbf16, #tpu.memory_space<vmem>>, %arg9: memref<32x128xbf16, #tpu.memory_space<vmem>>) attributes {dimension_semantics = [#tpu.dimension_semantics<parallel>], iteration_bounds = array<i64: 4>, scalar_prefetch = 0 : i64, scratch_operands = 0 : i64, tpu.core_type = #tpu.core_type<tc>, window_params = [{transform_indices = @transform_0, window_bounds = array<i64: 4, 1, 128>}, {transform_indices = @transform_1, window_bounds = array<i64: 32, 128>}, {transform_indices = @transform_2, window_bounds = array<i64: 4, 8, 8, 128>}, {transform_indices = @transform_3, window_bounds = array<i64: 4, 8, 8>}, {transform_indices = @transform_4, window_bounds = array<i64: 32, 1>}, {pipeline_mode = #tpu.pipeline_mode<synchronous>, transform_indices = @transform_5, window_bounds = array<i64: 128, 128>}, {pipeline_mode = #tpu.pipeline_mode<synchronous>, transform_indices = @transform_6, window_bounds = array<i64: 4, 128>}, {pipeline_mode = #tpu.pipeline_mode<synchronous>, transform_indices = @transform_7, window_bounds = array<i64: 256, 128>}, {transform_indices = @transform_8, window_bounds = array<i64: 32, 128>}]} {
    %c0 = arith.constant 0 : index
    %c0_0 = arith.constant 0 : index
    %c0_1 = arith.constant 0 : index
    %0 = vector.load %arg1[%c0, %c0_0, %c0_1] : memref<4x1x128xf32, #tpu.memory_space<vmem>>, vector<4x1x128xf32>
    %1 = vector.shape_cast %0 : vector<4x1x128xf32> to vector<4x128xf32>
    %2 = arith.truncf %1 : vector<4x128xf32> to vector<4x128xbf16>
    %c0_2 = arith.constant 0 : index
    %c0_3 = arith.constant 0 : index
    %3 = vector.load %arg6[%c0_2, %c0_3] : memref<128x128xbf16, #tpu.memory_space<vmem>>, vector<128x128xbf16>
    %cst = arith.constant dense<0.000000e+00> : vector<4x128xf32>
    %4 = tpu.matmul %2, %3, %cst {dimension_numbers = #tpu.dot_dimension_numbers<[1], [0], [0], [1], [0, 0, 1, 1], [], []>} : vector<4x128xbf16>, vector<128x128xbf16>, vector<4x128xf32> -> vector<4x128xf32>
    %c0_4 = arith.constant 0 : index
    %c0_5 = arith.constant 0 : index
    %5 = vector.load %arg7[%c0_4, %c0_5] : memref<4x128xf32, #tpu.memory_space<vmem>>, vector<4x128xf32>
    %6 = vector.extract_strided_slice %5 {offsets = [0, 0], sizes = [1, 128], strides = [1, 1]} : vector<4x128xf32> to vector<1x128xf32>
    %7 = vector.extract_strided_slice %5 {offsets = [1, 0], sizes = [1, 128], strides = [1, 1]} : vector<4x128xf32> to vector<1x128xf32>
    %8 = vector.extract_strided_slice %5 {offsets = [2, 0], sizes = [1, 128], strides = [1, 1]} : vector<4x128xf32> to vector<1x128xf32>
    %9 = vector.extract_strided_slice %5 {offsets = [3, 0], sizes = [1, 128], strides = [1, 1]} : vector<4x128xf32> to vector<1x128xf32>
    %10 = arith.truncf %9 : vector<1x128xf32> to vector<1x128xbf16>
    %11 = vector.broadcast %6 : vector<1x128xf32> to vector<4x128xf32>
    %12 = arith.mulf %4, %11 : vector<4x128xf32>
    %cst_6 = arith.constant dense<0.000000e+00> : vector<4xf32>
    %13 = vector.multi_reduction <add>, %12, %cst_6 [1] : vector<4x128xf32> to vector<4xf32>
    %14 = vector.shape_cast %13 : vector<4xf32> to vector<4x1xf32>
    %15 = vector.broadcast %8 : vector<1x128xf32> to vector<4x128xf32>
    %16 = arith.mulf %4, %15 : vector<4x128xf32>
    %cst_7 = arith.constant dense<0.000000e+00> : vector<4xf32>
    %17 = vector.multi_reduction <add>, %16, %cst_7 [1] : vector<4x128xf32> to vector<4xf32>
    %18 = vector.shape_cast %17 : vector<4xf32> to vector<4x1xf32>
    %c0_8 = arith.constant 0 : index
    %c0_9 = arith.constant 0 : index
    %c0_10 = arith.constant 0 : index
    %19 = vector.load %arg4[%c0_8, %c0_9, %c0_10] : memref<4x8x8xi8, #tpu.memory_space<vmem>>, vector<4x8x8xi8>
    %20 = arith.extsi %19 : vector<4x8x8xi8> to vector<4x8x8xi32>
    %c0_i32 = arith.constant 0 : i32
    %21 = vector.broadcast %c0_i32 : i32 to vector<4x8x8xi32>
    %22 = arith.cmpi sgt, %20, %21 : vector<4x8x8xi32>
    %cst_11 = arith.constant 0.000000e+00 : f32
    %cst_12 = arith.constant -1.000000e+30 : f32
    %23 = vector.broadcast %cst_11 : f32 to vector<4x8x8xf32>
    %24 = vector.broadcast %cst_12 : f32 to vector<4x8x8xf32>
    %25 = arith.select %22, %23, %24 : vector<4x8x8xi1>, vector<4x8x8xf32>
    %c0_13 = arith.constant 0 : index
    %c0_14 = arith.constant 0 : index
    %26 = vector.load %arg5[%c0_13, %c0_14] : memref<32x1xi8, #tpu.memory_space<vmem>>, vector<32x1xi8>
    %27 = arith.extsi %26 : vector<32x1xi8> to vector<32x1xi32>
    %c0_i32_15 = arith.constant 0 : i32
    %28 = vector.broadcast %c0_i32_15 : i32 to vector<32x1xi32>
    %29 = arith.cmpi sgt, %27, %28 : vector<32x1xi32>
    %c0_16 = arith.constant 0 : index
    %c0_17 = arith.constant 0 : index
    %c0_18 = arith.constant 0 : index
    %c0_19 = arith.constant 0 : index
    %30 = vector.load %arg3[%c0_16, %c0_17, %c0_18, %c0_19] : memref<4x8x8x128xbf16, #tpu.memory_space<vmem>>, vector<4x8x8x128xbf16>
    %31 = vector.shape_cast %10 : vector<1x128xbf16> to vector<1x1x1x128xbf16>
    %32 = vector.broadcast %31 : vector<1x1x1x128xbf16> to vector<4x8x8x128xbf16>
    %33 = arith.mulf %30, %32 : vector<4x8x8x128xbf16>
    %34 = arith.extf %33 : vector<4x8x8x128xbf16> to vector<4x8x8x128xf32>
    %cst_20 = arith.constant dense<0.000000e+00> : vector<4x8x8xf32>
    %35 = vector.multi_reduction <add>, %34, %cst_20 [3] : vector<4x8x8x128xf32> to vector<4x8x8xf32>
    %36 = vector.shape_cast %18 : vector<4x1xf32> to vector<4x1x1xf32>
    %37 = vector.broadcast %36 : vector<4x1x1xf32> to vector<4x8x8xf32>
    %38 = arith.addf %35, %37 : vector<4x8x8xf32>
    %39 = arith.addf %38, %25 : vector<4x8x8xf32>
    %cst_21 = arith.constant dense<0xFF800000> : vector<4x8xf32>
    %40 = vector.multi_reduction <maximumf>, %39, %cst_21 [2] : vector<4x8x8xf32> to vector<4x8xf32>
    %41 = vector.shape_cast %40 : vector<4x8xf32> to vector<4x8x1xf32>
    %c0_22 = arith.constant 0 : index
    %c0_23 = arith.constant 0 : index
    %42 = vector.load %arg2[%c0_22, %c0_23] : memref<32x128xbf16, #tpu.memory_space<vmem>>, vector<32x128xbf16>
    %43 = arith.extf %42 : vector<32x128xbf16> to vector<32x128xf32>
    %44 = vector.shape_cast %43 : vector<32x128xf32> to vector<4x8x128xf32>
    %c0_24 = arith.constant 0 : index
    %c0_25 = arith.constant 0 : index
    %45 = vector.load %arg8[%c0_24, %c0_25] : memref<256x128xbf16, #tpu.memory_space<vmem>>, vector<256x128xbf16>
    %46 = arith.truncf %44 : vector<4x8x128xf32> to vector<4x8x128xbf16>
    %47 = vector.shape_cast %7 : vector<1x128xf32> to vector<1x1x128xf32>
    %48 = vector.broadcast %47 : vector<1x1x128xf32> to vector<4x8x128xf32>
    %49 = arith.mulf %44, %48 : vector<4x8x128xf32>
    %cst_26 = arith.constant dense<0.000000e+00> : vector<4x8xf32>
    %50 = vector.multi_reduction <add>, %49, %cst_26 [2] : vector<4x8x128xf32> to vector<4x8xf32>
    %51 = vector.broadcast %14 : vector<4x1xf32> to vector<4x8xf32>
    %52 = arith.addf %50, %51 : vector<4x8xf32>
    %53 = vector.shape_cast %52 : vector<4x8xf32> to vector<4x1x8xf32>
    %54 = vector.broadcast %53 : vector<4x1x8xf32> to vector<4x8x8xf32>
    %55 = arith.addf %54, %25 : vector<4x8x8xf32>
    %cst_27 = arith.constant dense<0xFF800000> : vector<4x8xf32>
    %56 = vector.multi_reduction <maximumf>, %55, %cst_27 [2] : vector<4x8x8xf32> to vector<4x8xf32>
    %57 = vector.shape_cast %56 : vector<4x8xf32> to vector<4x8x1xf32>
    %58 = arith.maximumf %57, %41 : vector<4x8x1xf32>
    %59 = vector.broadcast %58 : vector<4x8x1xf32> to vector<4x8x8xf32>
    %60 = arith.subf %55, %59 : vector<4x8x8xf32>
    %61 = math.exp %60 : vector<4x8x8xf32>
    %62 = vector.broadcast %58 : vector<4x8x1xf32> to vector<4x8x8xf32>
    %63 = arith.subf %39, %62 : vector<4x8x8xf32>
    %64 = math.exp %63 : vector<4x8x8xf32>
    %cst_28 = arith.constant dense<0.000000e+00> : vector<4x8xf32>
    %65 = vector.multi_reduction <add>, %61, %cst_28 [2] : vector<4x8x8xf32> to vector<4x8xf32>
    %66 = vector.shape_cast %65 : vector<4x8xf32> to vector<4x8x1xf32>
    %cst_29 = arith.constant dense<0.000000e+00> : vector<4x8xf32>
    %67 = vector.multi_reduction <add>, %64, %cst_29 [2] : vector<4x8x8xf32> to vector<4x8xf32>
    %68 = vector.shape_cast %67 : vector<4x8xf32> to vector<4x8x1xf32>
    %69 = arith.addf %66, %68 : vector<4x8x1xf32>
    %cst_30 = arith.constant 9.99999968E-21 : f32
    %70 = vector.broadcast %cst_30 : f32 to vector<4x8x1xf32>
    %71 = arith.maximumf %69, %70 : vector<4x8x1xf32>
    %cst_31 = arith.constant 1.000000e+00 : f32
    %72 = vector.broadcast %cst_31 : f32 to vector<4x8x1xf32>
    %73 = arith.divf %72, %71 : vector<4x8x1xf32>
    %74 = vector.broadcast %73 : vector<4x8x1xf32> to vector<4x8x8xf32>
    %75 = arith.mulf %61, %74 : vector<4x8x8xf32>
    %76 = arith.truncf %75 : vector<4x8x8xf32> to vector<4x8x8xbf16>
    %77 = vector.broadcast %73 : vector<4x8x1xf32> to vector<4x8x8xf32>
    %78 = arith.mulf %64, %77 : vector<4x8x8xf32>
    %79 = arith.truncf %78 : vector<4x8x8xf32> to vector<4x8x8xbf16>
    %80 = vector.shape_cast %76 : vector<4x8x8xbf16> to vector<4x8x8x1xbf16>
    %81 = vector.shape_cast %46 : vector<4x8x128xbf16> to vector<4x1x8x128xbf16>
    %82 = vector.broadcast %80 : vector<4x8x8x1xbf16> to vector<4x8x8x128xbf16>
    %83 = vector.broadcast %81 : vector<4x1x8x128xbf16> to vector<4x8x8x128xbf16>
    %84 = arith.mulf %82, %83 : vector<4x8x8x128xbf16>
    %85 = arith.extf %84 : vector<4x8x8x128xbf16> to vector<4x8x8x128xf32>
    %cst_32 = arith.constant dense<0.000000e+00> : vector<4x8x128xf32>
    %86 = vector.multi_reduction <add>, %85, %cst_32 [2] : vector<4x8x8x128xf32> to vector<4x8x128xf32>
    %87 = vector.shape_cast %79 : vector<4x8x8xbf16> to vector<4x8x8x1xbf16>
    %88 = vector.broadcast %87 : vector<4x8x8x1xbf16> to vector<4x8x8x128xbf16>
    %89 = arith.mulf %88, %30 : vector<4x8x8x128xbf16>
    %90 = arith.extf %89 : vector<4x8x8x128xbf16> to vector<4x8x8x128xf32>
    %cst_33 = arith.constant dense<0.000000e+00> : vector<4x8x128xf32>
    %91 = vector.multi_reduction <add>, %90, %cst_33 [2] : vector<4x8x8x128xf32> to vector<4x8x128xf32>
    %92 = arith.addf %86, %91 : vector<4x8x128xf32>
    %93 = tpu.concatenate %92, %44 in 2 : vector<4x8x128xf32>, vector<4x8x128xf32> -> vector<4x8x256xf32>
    %94 = vector.shape_cast %93 : vector<4x8x256xf32> to vector<32x256xf32>
    %95 = arith.truncf %94 : vector<32x256xf32> to vector<32x256xbf16>
    %cst_34 = arith.constant dense<0.000000e+00> : vector<32x128xf32>
    %96 = tpu.matmul %95, %45, %cst_34 {dimension_numbers = #tpu.dot_dimension_numbers<[1], [0], [0], [1], [0, 0, 1, 1], [], []>} : vector<32x256xbf16>, vector<256x128xbf16>, vector<32x128xf32> -> vector<32x128xf32>
    %cst_35 = arith.constant 0.000000e+00 : f32
    %97 = vector.broadcast %cst_35 : f32 to vector<32x128xf32>
    %98 = arith.maximumf %96, %97 : vector<32x128xf32>
    %99 = vector.shape_cast %98 : vector<32x128xf32> to vector<4x8x128xf32>
    %100 = vector.shape_cast %99 : vector<4x8x128xf32> to vector<32x128xf32>
    %cst_36 = arith.constant 0.000000e+00 : f32
    %101 = vector.shape_cast %29 : vector<32x1xi1> to vector<32x1xi1>
    %102 = vector.broadcast %101 : vector<32x1xi1> to vector<32x128xi1>
    %103 = vector.broadcast %cst_36 : f32 to vector<32x128xf32>
    %104 = arith.select %102, %100, %103 : vector<32x128xi1>, vector<32x128xf32>
    %105 = arith.truncf %104 : vector<32x128xf32> to vector<32x128xbf16>
    %c0_37 = arith.constant 0 : index
    %c0_38 = arith.constant 0 : index
    %106 = vector.load %arg9[%c0_37, %c0_38] : memref<32x128xbf16, #tpu.memory_space<vmem>>, vector<32x128xbf16>
    tpu.vector_store %arg9[%c0_37, %c0_38], %105 {strides = array<i32>} : memref<32x128xbf16, #tpu.memory_space<vmem>>, vector<32x128xbf16>,
    return
  }
  func.func @transform_0(%arg0: i32) -> (i32, i32, i32) {
    %c0_i32 = arith.constant 0 : i32
    %c0_i32_0 = arith.constant 0 : i32
    %c0_i32_1 = arith.constant 0 : i32
    return %arg0, %c0_i32, %c0_i32_0 : i32, i32, i32
  }
  func.func @transform_1(%arg0: i32) -> (i32, i32) {
    %c0_i32 = arith.constant 0 : i32
    %c0_i32_0 = arith.constant 0 : i32
    return %arg0, %c0_i32 : i32, i32
  }
  func.func @transform_2(%arg0: i32) -> (i32, i32, i32, i32) {
    %c0_i32 = arith.constant 0 : i32
    %c0_i32_0 = arith.constant 0 : i32
    %c0_i32_1 = arith.constant 0 : i32
    %c0_i32_2 = arith.constant 0 : i32
    return %arg0, %c0_i32, %c0_i32_0, %c0_i32_1 : i32, i32, i32, i32
  }
  func.func @transform_3(%arg0: i32) -> (i32, i32, i32) {
    %c0_i32 = arith.constant 0 : i32
    %c0_i32_0 = arith.constant 0 : i32
    %c0_i32_1 = arith.constant 0 : i32
    return %arg0, %c0_i32, %c0_i32_0 : i32, i32, i32
  }
  func.func @transform_4(%arg0: i32) -> (i32, i32) {
    %c0_i32 = arith.constant 0 : i32
    %c0_i32_0 = arith.constant 0 : i32
    return %arg0, %c0_i32 : i32, i32
  }
  func.func @transform_5(%arg0: i32) -> (i32, i32) {
    %c0_i32 = arith.constant 0 : i32
    %c0_i32_0 = arith.constant 0 : i32
    %c0_i32_1 = arith.constant 0 : i32
    return %c0_i32, %c0_i32_0 : i32, i32
  }
  func.func @transform_6(%arg0: i32) -> (i32, i32) {
    %c0_i32 = arith.constant 0 : i32
    %c0_i32_0 = arith.constant 0 : i32
    %c0_i32_1 = arith.constant 0 : i32
    return %c0_i32, %c0_i32_0 : i32, i32
  }
  func.func @transform_7(%arg0: i32) -> (i32, i32) {
    %c0_i32 = arith.constant 0 : i32
    %c0_i32_0 = arith.constant 0 : i32
    %c0_i32_1 = arith.constant 0 : i32
    return %c0_i32, %c0_i32_0 : i32, i32
  }
  func.func @transform_8(%arg0: i32) -> (i32, i32) {
    %c0_i32 = arith.constant 0 : i32
    %c0_i32_0 = arith.constant 0 : i32
    return %arg0, %c0_i32 : i32, i32
  }
}

</mosaic_0001>

<llo_original>
// kernel: tpu_custom_call.1
$region0: #{tpu_custom_call.1}
  #allocation0 [shape = 'u32[]', space=smem, size = 0x4, offset = 0x4, fixed_abs, tag = 'smem constant byte address 0x4 - core index']
  #allocation1 [shape = 'u32[144,128]{1,0:T(1,128)}', space=vmem, size = 0x12000, scoped, tag = 'internal scratch']
  %s0 = inlined_call_operand.vmem [shape: f32[16,1,128], index: 0, kind: input, shape index: {}]
  %s1 = inlined_call_operand.vmem [shape: bf16[128,128], index: 1, kind: input, shape index: {}]
  %s2 = inlined_call_operand.hbm [shape: bf16[16,8,8,128], index: 2, kind: input, shape index: {}]
  %s3 = inlined_call_operand.vmem [shape: s8[16,8,8], index: 3, kind: input, shape index: {}]
  %s4 = inlined_call_operand.vmem [shape: s8[128,1], index: 4, kind: input, shape index: {}]
  %s5 = inlined_call_operand.hbm [shape: bf16[128,128], index: 5, kind: input, shape index: {}]
  %s6 = inlined_call_operand.vmem [shape: f32[4,128], index: 6, kind: input, shape index: {}]
  %s7 = inlined_call_operand.hbm [shape: bf16[256,128], index: 7, kind: input, shape index: {}]
  %s8 = inlined_call_operand.hbm [shape: bf16[128,128], index: 8, kind: output, shape index: {}]
  %s9 = sld [smem:[#allocation0]]
  $region77: #{tpu_custom_call.1} parent=0
    _
  %s11 = ssub.s32 1, %s9
  %s12 = scalar_select 0, %s11, %s9
  $region1: #{tpu_custom_call.1} parent=0
    #allocation2 [shape = 'u8[131072]{0}', space=vmem, size = 0x20000, scoped, tag = 'input window, operand 2']
    #allocation3 [shape = 's32[2]{0}', space=sflag, size = 0x8, scoped, tag = 'scoped memory for tpu_custom_call.1']
    #allocation4 [shape = 's32[2]{0}', space=sflag, size = 0x8, scoped, tag = 'scoped memory for tpu_custom_call.1']
    #allocation5 [shape = 'u8[32768]{0}', space=vmem, size = 0x8000, scoped, tag = 'input window, operand 5, single buffered']
    #allocation6 [shape = 's32[1]{0}', space=sflag, size = 0x4, scoped, tag = 'scoped memory for tpu_custom_call.1']
    #allocation7 [shape = 'u8[65536]{0}', space=vmem, size = 0x10000, scoped, tag = 'input window, operand 7, single buffered']
    #allocation8 [shape = 'u8[16384]{0}', space=vmem, size = 0x4000, scoped, tag = 'output window, operand 0']
    %13 = vsyncpa [#allocation3], 0
    %s14 = scalar_lea.sflag [#allocation3], 1
    %15 = vsyncpa %s14, 0
    %16 = vsyncpa [#allocation6], 0
    %17 = vsyncpa [#allocation4], 0
    %s18 = scalar_lea.sflag [#allocation4], 1
    %19 = vsyncpa %s18, 0
    loop: start=0, step=1, limit=6
    $region2: #{tpu_custom_call.1} parent=1 // loop_pre_header
      _
    $region3: #{tpu_custom_call.1} parent=1 // loop_header
      %s21 = sphi 0, %s25
      %p22 = scmp.ge.s32.totalorder %s21, 6
      %s31 = sphi 0, %s33
      %s34 = sphi 0, %s31
      %s35 = sphi 0, %s34
      %s51 = sphi 0, %s35
      %s57 = sphi 0, %s59
      %s60 = sphi 0, %s57
      %s61 = sphi 0, %s60
      %s77 = sphi 0, %s61
      %s83 = sphi 0, %s85
      %s86 = sphi 0, %s83
      %s87 = sphi 0, %s86
      %s103 = sphi 0, %s87
      %s109 = sphi 0, %s111
      %s112 = sphi 0, %s109
      %s113 = sphi 0, %s112
      %s129 = sphi 0, %s113
      %s135 = sphi 0, %s137
      %s138 = sphi 0, %s135
      %s139 = sphi 0, %s138
      %s155 = sphi 0, %s139
      %s159 = sphi 0, %s159
      %s161 = sphi 0, %s159
      %s162 = sphi 0, %s161
      %s176 = sphi 0, %s162
      %s180 = sphi 0, %s180
      %s182 = sphi 0, %s180
      %s183 = sphi 0, %s182
      %s197 = sphi 0, %s183
      %s201 = sphi 0, %s201
      %s203 = sphi 0, %s201
      %s204 = sphi 0, %s203
      %s218 = sphi 0, %s204
      %s224 = sphi 0, %s226
      %s227 = sphi 0, %s224
      %s228 = sphi 0, %s227
      %s244 = sphi 0, %s228
    $region4: #{tpu_custom_call.1} parent=1 // loop_header_branch
      %24 = sbr.rel (%p22) target = $region8
    $region5: #{tpu_custom_call.1} parent=1 // loop_body
      %s26 = ssub.s32 %s21, 1
      %s27 = ssub.s32 %s21, 2
      %s28 = sadd.s32 %s21, 1
      %s29 = ssub.s32 %s21, %s28
      %p30 = scmp.eq.s32.totalorder %s29, 0
      %s32 = sadd.s32 %s31, 1
      %s33 = scalar_select %p30, %s31, %s32
      %p36 = pneg %p30
      %p37 = scmp.eq.s32.totalorder %s21, 3
      %p38 = por %p36, %p37
      %p39 = scmp.ne.s32.totalorder %s31, %s34
      %p40 = scmp.eq.s32.totalorder %s21, 0
      %p41 = por %p39, %p40
      %p42 = scmp.ne.s32.totalorder %s31, %s34
      %p43 = scmp.eq.s32.totalorder %s26, 3
      %p44 = por %p42, %p43
      %p45 = scmp.ne.s32.totalorder %s34, %s35
      %p46 = scmp.eq.s32.totalorder %s26, 0
      %p47 = por %p45, %p46
      %p48 = scmp.ne.s32.totalorder %s34, %s35
      %p49 = scmp.eq.s32.totalorder %s27, 3
      %p50 = por %p48, %p49
      %p52 = scmp.ne.s32.totalorder %s35, %s51
      %p53 = scmp.eq.s32.totalorder %s27, 0
      %p54 = por %p52, %p53
      %s55 = ssub.s32 %s21, %s28
      %p56 = scmp.eq.s32.totalorder %s55, 0
      %s58 = sadd.s32 %s57, 1
      %s59 = scalar_select %p56, %s57, %s58
      %p62 = pneg %p56
      %p63 = scmp.eq.s32.totalorder %s21, 3
      %p64 = por %p62, %p63
      %p65 = scmp.ne.s32.totalorder %s57, %s60
      %p66 = scmp.eq.s32.totalorder %s21, 0
      %p67 = por %p65, %p66
      %p68 = scmp.ne.s32.totalorder %s57, %s60
      %p69 = scmp.eq.s32.totalorder %s26, 3
      %p70 = por %p68, %p69
      %p71 = scmp.ne.s32.totalorder %s60, %s61
      %p72 = scmp.eq.s32.totalorder %s26, 0
      %p73 = por %p71, %p72
      %p74 = scmp.ne.s32.totalorder %s60, %s61
      %p75 = scmp.eq.s32.totalorder %s27, 3
      %p76 = por %p74, %p75
      %p78 = scmp.ne.s32.totalorder %s61, %s77
      %p79 = scmp.eq.s32.totalorder %s27, 0
      %p80 = por %p78, %p79
      %s81 = ssub.s32 %s21, %s28
      %p82 = scmp.eq.s32.totalorder %s81, 0
      %s84 = sadd.s32 %s83, 1
      %s85 = scalar_select %p82, %s83, %s84
      %p88 = pneg %p82
      %p89 = scmp.eq.s32.totalorder %s21, 3
      %p90 = por %p88, %p89
      %p91 = scmp.ne.s32.totalorder %s83, %s86
      %p92 = scmp.eq.s32.totalorder %s21, 0
      %p93 = por %p91, %p92
      %p94 = scmp.ne.s32.totalorder %s83, %s86
      %p95 = scmp.eq.s32.totalorder %s26, 3
      %p96 = por %p94, %p95
      %p97 = scmp.ne.s32.totalorder %s86, %s87
      %p98 = scmp.eq.s32.totalorder %s26, 0
      %p99 = por %p97, %p98
      %p100 = scmp.ne.s32.totalorder %s86, %s87
      %p101 = scmp.eq.s32.totalorder %s27, 3
      %p102 = por %p100, %p101
      %p104 = scmp.ne.s32.totalorder %s87, %s103
      %p105 = scmp.eq.s32.totalorder %s27, 0
      %p106 = por %p104, %p105
      %s107 = ssub.s32 %s21, %s28
      %p108 = scmp.eq.s32.totalorder %s107, 0
      %s110 = sadd.s32 %s109, 1
      %s111 = scalar_select %p108, %s109, %s110
      %p114 = pneg %p108
      %p115 = scmp.eq.s32.totalorder %s21, 3
      %p116 = por %p114, %p115
      %p117 = scmp.ne.s32.totalorder %s109, %s112
      %p118 = scmp.eq.s32.totalorder %s21, 0
      %p119 = por %p117, %p118
      %p120 = scmp.ne.s32.totalorder %s109, %s112
      %p121 = scmp.eq.s32.totalorder %s26, 3
      %p122 = por %p120, %p121
      %p123 = scmp.ne.s32.totalorder %s112, %s113
      %p124 = scmp.eq.s32.totalorder %s26, 0
      %p125 = por %p123, %p124
      %p126 = scmp.ne.s32.totalorder %s112, %s113
      %p127 = scmp.eq.s32.totalorder %s27, 3
      %p128 = por %p126, %p127
      %p130 = scmp.ne.s32.totalorder %s113, %s129
      %p131 = scmp.eq.s32.totalorder %s27, 0
      %p132 = por %p130, %p131
      %s133 = ssub.s32 %s21, %s28
      %p134 = scmp.eq.s32.totalorder %s133, 0
      %s136 = sadd.s32 %s135, 1
      %s137 = scalar_select %p134, %s135, %s136
      %p140 = pneg %p134
      %p141 = scmp.eq.s32.totalorder %s21, 3
      %p142 = por %p140, %p141
      %p143 = scmp.ne.s32.totalorder %s135, %s138
      %p144 = scmp.eq.s32.totalorder %s21, 0
      %p145 = por %p143, %p144
      %p146 = scmp.ne.s32.totalorder %s135, %s138
      %p147 = scmp.eq.s32.totalorder %s26, 3
      %p148 = por %p146, %p147
      %p149 = scmp.ne.s32.totalorder %s138, %s139
      %p150 = scmp.eq.s32.totalorder %s26, 0
      %p151 = por %p149, %p150
      %p152 = scmp.ne.s32.totalorder %s138, %s139
      %p153 = scmp.eq.s32.totalorder %s27, 3
      %p154 = por %p152, %p153
      %p156 = scmp.ne.s32.totalorder %s139, %s155
      %p157 = scmp.eq.s32.totalorder %s27, 0
      %p158 = por %p156, %p157
      %s160 = sadd.s32 %s159, 1
      %p163 = scmp.eq.s32.totalorder %s21, 3
      %p164 = scmp.ne.s32.totalorder %s159, %s161
      %p165 = scmp.eq.s32.totalorder %s21, 0
      %p166 = por %p164, %p165
      %p167 = scmp.ne.s32.totalorder %s159, %s161
      %p168 = scmp.eq.s32.totalorder %s26, 3
      %p169 = por %p167, %p168
      %p170 = scmp.ne.s32.totalorder %s161, %s162
      %p171 = scmp.eq.s32.totalorder %s26, 0
      %p172 = por %p170, %p171
      %p173 = scmp.ne.s32.totalorder %s161, %s162
      %p174 = scmp.eq.s32.totalorder %s27, 3
      %p175 = por %p173, %p174
      %p177 = scmp.ne.s32.totalorder %s162, %s176
      %p178 = scmp.eq.s32.totalorder %s27, 0
      %p179 = por %p177, %p178
      %s181 = sadd.s32 %s180, 1
      %p184 = scmp.eq.s32.totalorder %s21, 3
      %p185 = scmp.ne.s32.totalorder %s180, %s182
      %p186 = scmp.eq.s32.totalorder %s21, 0
      %p187 = por %p185, %p186
      %p188 = scmp.ne.s32.totalorder %s180, %s182
      %p189 = scmp.eq.s32.totalorder %s26, 3
      %p190 = por %p188, %p189
      %p191 = scmp.ne.s32.totalorder %s182, %s183
      %p192 = scmp.eq.s32.totalorder %s26, 0
      %p193 = por %p191, %p192
      %p194 = scmp.ne.s32.totalorder %s182, %s183
      %p195 = scmp.eq.s32.totalorder %s27, 3
      %p196 = por %p194, %p195
      %p198 = scmp.ne.s32.totalorder %s183, %s197
      %p199 = scmp.eq.s32.totalorder %s27, 0
      %p200 = por %p198, %p199
      %s202 = sadd.s32 %s201, 1
      %p205 = scmp.eq.s32.totalorder %s21, 3
      %p206 = scmp.ne.s32.totalorder %s201, %s203
      %p207 = scmp.eq.s32.totalorder %s21, 0
      %p208 = por %p206, %p207
      %p209 = scmp.ne.s32.totalorder %s201, %s203
      %p210 = scmp.eq.s32.totalorder %s26, 3
      %p211 = por %p209, %p210
      %p212 = scmp.ne.s32.totalorder %s203, %s204
      %p213 = scmp.eq.s32.totalorder %s26, 0
      %p214 = por %p212, %p213
      %p215 = scmp.ne.s32.totalorder %s203, %s204
      %p216 = scmp.eq.s32.totalorder %s27, 3
      %p217 = por %p215, %p216
      %p219 = scmp.ne.s32.totalorder %s204, %s218
      %p220 = scmp.eq.s32.totalorder %s27, 0
      %p221 = por %p219, %p220
      %s222 = ssub.s32 %s21, %s28
      %p223 = scmp.eq.s32.totalorder %s222, 0
      %s225 = sadd.s32 %s224, 1
      %s226 = scalar_select %p223, %s224, %s225
      %p229 = pneg %p223
      %p230 = scmp.eq.s32.totalorder %s21, 3
      %p231 = por %p229, %p230
      %p232 = scmp.ne.s32.totalorder %s224, %s227
      %p233 = scmp.eq.s32.totalorder %s21, 0
      %p234 = por %p232, %p233
      %p235 = scmp.ne.s32.totalorder %s224, %s227
      %p236 = scmp.eq.s32.totalorder %s26, 3
      %p237 = por %p235, %p236
      %p238 = scmp.ne.s32.totalorder %s227, %s228
      %p239 = scmp.eq.s32.totalorder %s26, 0
      %p240 = por %p238, %p239
      %p241 = scmp.ne.s32.totalorder %s227, %s228
      %p242 = scmp.eq.s32.totalorder %s27, 3
      %p243 = por %p241, %p242
      %p245 = scmp.ne.s32.totalorder %s228, %s244
      %p246 = scmp.eq.s32.totalorder %s27, 0
      %p247 = por %p245, %p246
      %p248 = scmp.le.s32.totalorder 1, %s21
      %p249 = scmp.lt.s32.totalorder %s21, 5
      %p250 = pnand %p248, %p249
      %p251 = pneg %p250
      // Predicated region
      $region9: #{tpu_custom_call.1} parent=5 // pred_check
        _
      $region10: #{tpu_custom_call.1} parent=5 // pred_check_branch
        %253 = sbr.rel (%p250) target = $region12
      $region11: #{tpu_custom_call.1} parent=5 // pred_region
        %s254 = ssub.s32 %s21, 1
        // Predicated region
        $region13: #{tpu_custom_call.1} parent=11 // pred_check
          %p255 = pneg %p172
        $region14: #{tpu_custom_call.1} parent=11 // pred_check_branch
          %257 = sbr.rel (%p255) target = $region16
        $region15: #{tpu_custom_call.1} parent=11 // pred_region
          %s259 = ssub.s32 1024, 1024
          %260 = vsyncadd [#allocation6], %s259
          %s261 = sshll.u32 [#allocation5], 4
          %s262 = int_to_ptr.vmem [resolvable:$true] %s261
          %267 = dma.hbm_to_vmem [thread:$0]  %s5, 1024, %s262, [#allocation6], 64, 64, 4
        $region16: #{tpu_custom_call.1} parent=11 // pred_fallthru
          _
        // Predicated region
        $region17: #{tpu_custom_call.1} parent=11 // pred_check
          %p268 = pneg %p193
        $region18: #{tpu_custom_call.1} parent=11 // pred_check_branch
          %270 = sbr.rel (%p268) target = $region20
        $region19: #{tpu_custom_call.1} parent=11 // pred_region
          _
        $region20: #{tpu_custom_call.1} parent=11 // pred_fallthru
          _
        // Predicated region
        $region21: #{tpu_custom_call.1} parent=11 // pred_check
          %p271 = pneg %p214
        $region22: #{tpu_custom_call.1} parent=11 // pred_check_branch
          %273 = sbr.rel (%p271) target = $region24
        $region23: #{tpu_custom_call.1} parent=11 // pred_region
          %s275 = ssub.s32 2048, 2048
          %276 = vsyncadd [#allocation6], %s275
          %s277 = sshll.u32 [#allocation7], 4
          %s278 = int_to_ptr.vmem [resolvable:$true] %s277
          %283 = dma.hbm_to_vmem [thread:$0]  %s7, 2048, %s278, [#allocation6], 64, 64, 4
        $region24: #{tpu_custom_call.1} parent=11 // pred_fallthru
          _
      $region12: #{tpu_custom_call.1} parent=5 // pred_fallthru
        _
      %p284 = scmp.lt.s32.totalorder %s21, 4
      // Predicated region
      $region25: #{tpu_custom_call.1} parent=5 // pred_check
        %p285 = pneg %p284
      $region26: #{tpu_custom_call.1} parent=5 // pred_check_branch
        %287 = sbr.rel (%p285) target = $region28
      $region27: #{tpu_custom_call.1} parent=5 // pred_region
        // Predicated region
        $region29: #{tpu_custom_call.1} parent=27 // pred_check
          %p288 = pneg %p41
        $region30: #{tpu_custom_call.1} parent=27 // pred_check_branch
          %290 = sbr.rel (%p288) target = $region32
        $region31: #{tpu_custom_call.1} parent=27 // pred_region
          %s291 = smul.u32 4, %s21
          %p292 = scmp.lt.s32.totalorder %s291, 15
          %s293 = scalar_select %p292, %s291, 15
          %s294 = scalar_lea.vmem %s0, %s293
          %s295 = smul.u32 4, %s21
        $region32: #{tpu_custom_call.1} parent=27 // pred_fallthru
          _
        // Predicated region
        $region33: #{tpu_custom_call.1} parent=27 // pred_check
          %p296 = pneg %p67
        $region34: #{tpu_custom_call.1} parent=27 // pred_check_branch
          %298 = sbr.rel (%p296) target = $region36
        $region35: #{tpu_custom_call.1} parent=27 // pred_region
          %s299 = smul.u32 4, %s21
          %p300 = scmp.lt.s32.totalorder %s299, 15
          %s301 = scalar_select %p300, %s299, 15
          %s302 = smul.addr %s301, 4
          %s303 = scalar_lea.vmem %s1, %s302
          %s304 = smul.u32 4, %s21
        $region36: #{tpu_custom_call.1} parent=27 // pred_fallthru
          _
        // Predicated region
        $region37: #{tpu_custom_call.1} parent=27 // pred_check
          %p305 = pneg %p93
        $region38: #{tpu_custom_call.1} parent=27 // pred_check_branch
          %307 = sbr.rel (%p305) target = $region40
        $region39: #{tpu_custom_call.1} parent=27 // pred_region
          %s308 = sand.u32 %s83, 1
          %s309 = scalar_lea.sflag [#allocation3], %s308
          %s310 = sand.u32 %s83, 1
          %s311 = smul.addr %s310, 128
          %s312 = scalar_lea.vmem [#allocation2], %s311
          %s313 = smul.u32 4, %s21
          %s315 = ssub.s32 2048, 2048
          %316 = vsyncadd %s309, %s315
          %s317 = smul.addr %s313, 8
          %s318 = smul.addr %s317, 64
          %s319 = scalar_lea.hbm %s2, %s318
          %s320 = sshll.u32 %s312, 4
          %s321 = int_to_ptr.vmem [resolvable:$true] %s320
          %326 = dma.hbm_to_vmem [thread:$0]  %s319, 2048, %s321, %s309, 64, 64, 4
        $region40: #{tpu_custom_call.1} parent=27 // pred_fallthru
          _
        // Predicated region
        $region41: #{tpu_custom_call.1} parent=27 // pred_check
          %p327 = pneg %p119
        $region42: #{tpu_custom_call.1} parent=27 // pred_check_branch
          %329 = sbr.rel (%p327) target = $region44
        $region43: #{tpu_custom_call.1} parent=27 // pred_region
          %s330 = smul.u32 4, %s21
          %p331 = scmp.lt.s32.totalorder %s330, 15
          %s332 = scalar_select %p331, %s330, 15
          %s333 = smul.addr %s332, 2
          %s334 = scalar_lea.vmem %s3, %s333
          %s335 = smul.u32 4, %s21
        $region44: #{tpu_custom_call.1} parent=27 // pred_fallthru
          _
        // Predicated region
        $region45: #{tpu_custom_call.1} parent=27 // pred_check
          %p336 = pneg %p145
        $region46: #{tpu_custom_call.1} parent=27 // pred_check_branch
          %338 = sbr.rel (%p336) target = $region48
        $region47: #{tpu_custom_call.1} parent=27 // pred_region
          %s339 = smul.u32 4, %s21
          %p340 = scmp.lt.s32.totalorder %s339, 15
          %s341 = scalar_select %p340, %s339, 15
          %s342 = smul.addr %s341, 2
          %s343 = scalar_lea.vmem %s4, %s342
          %s344 = smul.u32 4, %s21
        $region48: #{tpu_custom_call.1} parent=27 // pred_fallthru
          _
      $region28: #{tpu_custom_call.1} parent=5 // pred_fallthru
        _
      %p345 = scmp.le.s32.totalorder 1, %s21
      %p346 = scmp.lt.s32.totalorder %s21, 5
      %p347 = pnand %p345, %p346
      %p348 = pneg %p347
      // Predicated region
      $region49: #{tpu_custom_call.1} parent=5 // pred_check
        _
      $region50: #{tpu_custom_call.1} parent=5 // pred_check_branch
        %350 = sbr.rel (%p347) target = $region52
      $region51: #{tpu_custom_call.1} parent=5 // pred_region
        %s351 = ssub.s32 %s21, 1
        %s352 = sand.u32 %s86, 1
        %s353 = scalar_lea.sflag [#allocation3], %s352
        %s354 = sand.u32 %s86, 1
        %s355 = smul.addr %s354, 128
        %s356 = scalar_lea.vmem [#allocation2], %s355
        // Predicated region
        $region53: #{tpu_custom_call.1} parent=51 // pred_check
          %p357 = pneg %p99
        $region54: #{tpu_custom_call.1} parent=51 // pred_check_branch
          %359 = sbr.rel (%p357) target = $region56
        $region55: #{tpu_custom_call.1} parent=51 // pred_region
          %360 = dma.done %s353, 2048
        $region56: #{tpu_custom_call.1} parent=51 // pred_fallthru
          _
        // Predicated region
        $region57: #{tpu_custom_call.1} parent=51 // pred_check
          %p361 = pneg %p172
        $region58: #{tpu_custom_call.1} parent=51 // pred_check_branch
          %363 = sbr.rel (%p361) target = $region60
        $region59: #{tpu_custom_call.1} parent=51 // pred_region
          %364 = dma.done [#allocation6], 1024
        $region60: #{tpu_custom_call.1} parent=51 // pred_fallthru
          _
        // Predicated region
        $region61: #{tpu_custom_call.1} parent=51 // pred_check
          %p365 = pneg %p214
        $region62: #{tpu_custom_call.1} parent=51 // pred_check_branch
          %367 = sbr.rel (%p365) target = $region64
        $region63: #{tpu_custom_call.1} parent=51 // pred_region
          %368 = dma.done [#allocation6], 2048
        $region64: #{tpu_custom_call.1} parent=51 // pred_fallthru
          _
        %s369 = smul.u32 4, %s26
        %p370 = scmp.lt.s32.totalorder %s369, 15
        %s371 = scalar_select %p370, %s369, 15
        %s372 = scalar_lea.vmem %s0, %s371
        %p373 = pneg %p47
        %p374 = pneg %p44
        %s375 = smul.u32 4, %s26
        %p376 = scmp.lt.s32.totalorder %s375, 15
        %s377 = scalar_select %p376, %s375, 15
        %s378 = smul.addr %s377, 4
        %s379 = scalar_lea.vmem %s1, %s378
        %p380 = pneg %p73
        %p381 = pneg %p70
        %s382 = sand.u32 %s86, 1
        %s383 = scalar_lea.sflag [#allocation3], %s382
        %s384 = sand.u32 %s86, 1
        %s385 = smul.addr %s384, 128
        %s386 = scalar_lea.vmem [#allocation2], %s385
        %p387 = pneg %p99
        %p388 = pneg %p96
        %s389 = smul.u32 4, %s26
        %p390 = scmp.lt.s32.totalorder %s389, 15
        %s391 = scalar_select %p390, %s389, 15
        %s392 = smul.addr %s391, 2
        %s393 = scalar_lea.vmem %s3, %s392
        %p394 = pneg %p125
        %p395 = pneg %p122
        %s396 = smul.u32 4, %s26
        %p397 = scmp.lt.s32.totalorder %s396, 15
        %s398 = scalar_select %p397, %s396, 15
        %s399 = smul.addr %s398, 2
        %s400 = scalar_lea.vmem %s4, %s399
        %p401 = pneg %p151
        %p402 = pneg %p148
        %p403 = pneg %p172
        %p404 = pneg %p169
        %p405 = pneg %p193
        %p406 = pneg %p190
        %p407 = pneg %p214
        %p408 = pneg %p211
        %p409 = pneg %p240
        %p410 = pneg %p237
        %s411 = sand.u32 %s227, 1
        %s412 = scalar_lea.sflag [#allocation4], %s411
        %s413 = sand.u32 %s227, 1
        %s414 = smul.addr %s413, 16
        %s415 = scalar_lea.vmem [#allocation8], %s414
        %s416 = smul.u32 4, %s26
        %p417 = scmp.lt.s32.totalorder %s416, 15
        %s418 = scalar_select %p417, %s416, 15
        %s419 = scalar_lea.vmem %s0, %s418
        %s420 = smul.u32 4, %s26
        %s421 = smul.u32 4, %s26
        %p422 = scmp.lt.s32.totalorder %s421, 15
        %s423 = scalar_select %p422, %s421, 15
        %s424 = smul.addr %s423, 4
        %s425 = scalar_lea.vmem %s1, %s424
        %s426 = smul.u32 4, %s26
        %s427 = smul.u32 4, %s26
        %s428 = smul.u32 4, %s26
        %p429 = scmp.lt.s32.totalorder %s428, 15
        %s430 = scalar_select %p429, %s428, 15
        %s431 = smul.addr %s430, 2
        %s432 = scalar_lea.vmem %s3, %s431
        %s433 = smul.u32 4, %s26
        %s434 = smul.u32 4, %s26
        %p435 = scmp.lt.s32.totalorder %s434, 15
        %s436 = scalar_select %p435, %s434, 15
        %s437 = smul.addr %s436, 2
        %s438 = scalar_lea.vmem %s4, %s437
        %s439 = smul.u32 4, %s26
        %s440 = smul.u32 4, %s26
        %v442 = vld [vmem:[%s419] sm:$0x1]
        %v443 = vld [vmem:[%s419 + $0x1] sm:$0x1]
        %v444 = vld [vmem:[%s419 + $0x2] sm:$0x1]
        %v445 = vld [vmem:[%s419 + $0x3] sm:$0x1]
        %v446 = vpack.c.bf16 %v442, %v442
        %v447 = vpack.c.bf16 %v443, %v443
        %v448 = vpack.c.bf16 %v444, %v444
        %v449 = vpack.c.bf16 %v445, %v445
        %v450 = vld [vmem:[#allocation5] sm:$0xf]
        %v451 = vld [vmem:[#allocation5 + $0x4] sm:$0xf]
        %v452 = vld [vmem:[#allocation5 + $0x8] sm:$0xf]
        %v453 = vld [vmem:[#allocation5 + $0xc] sm:$0xf]
        %v454 = vld [vmem:[#allocation5 + $0x10] sm:$0xf]
        %v455 = vld [vmem:[#allocation5 + $0x14] sm:$0xf]
        %v456 = vld [vmem:[#allocation5 + $0x18] sm:$0xf]
        %v457 = vld [vmem:[#allocation5 + $0x1c] sm:$0xf]
        %v458 = vld [vmem:[#allocation5 + $0x20] sm:$0xf]
        %v459 = vld [vmem:[#allocation5 + $0x24] sm:$0xf]
        %v460 = vld [vmem:[#allocation5 + $0x28] sm:$0xf]
        %v461 = vld [vmem:[#allocation5 + $0x2c] sm:$0xf]
        %v462 = vld [vmem:[#allocation5 + $0x30] sm:$0xf]
        %v463 = vld [vmem:[#allocation5 + $0x34] sm:$0xf]
        %v464 = vld [vmem:[#allocation5 + $0x38] sm:$0xf]
        %v465 = vld [vmem:[#allocation5 + $0x3c] sm:$0xf]
        %v470 = vunpack.c.l.b16 %v446
        %v471 = vunpack.c.l.b16 %v447
        %v472 = vunpack.c.l.b16 %v448
        %v473 = vunpack.c.l.b16 %v449
        %v474 = vrot.slane %v471, 7
        %vm475 = vcmask 1041409
        %v476 = vsel %vm475, %v474, %v470
        %v477 = vrot.slane %v472, 6
        %vm478 = vcmask 1042434
        %v479 = vsel %vm478, %v477, %v476
        %v480 = vrot.slane %v473, 5
        %vm481 = vcmask 1043459
        %v482 = vsel %vm481, %v480, %v479
        %v483 = vpack.c.b16 %v482, %v482
        %v501 = vunpack.c.l.b16 %v450
        %v502 = vunpack.c.l.b16 %v451
        %v503 = vunpack.c.l.b16 %v452
        %v504 = vunpack.c.l.b16 %v453
        %v505 = vunpack.c.l.b16 %v454
        %v506 = vunpack.c.l.b16 %v455
        %v507 = vunpack.c.l.b16 %v456
        %v508 = vunpack.c.l.b16 %v457
        %v509 = vunpack.c.l.b16 %v458
        %v510 = vunpack.c.l.b16 %v459
        %v511 = vunpack.c.l.b16 %v460
        %v512 = vunpack.c.l.b16 %v461
        %v513 = vunpack.c.l.b16 %v462
        %v514 = vunpack.c.l.b16 %v463
        %v515 = vunpack.c.l.b16 %v464
        %v516 = vunpack.c.l.b16 %v465
        %v517 = vpack.c.b16 %v502, %v501
        %v518 = vpack.c.b16 %v504, %v503
        %v519 = vpack.c.b16 %v506, %v505
        %v520 = vpack.c.b16 %v508, %v507
        %v521 = vpack.c.b16 %v510, %v509
        %v522 = vpack.c.b16 %v512, %v511
        %v523 = vpack.c.b16 %v514, %v513
        %v524 = vpack.c.b16 %v516, %v515
        %533 = vmatprep.subr.bf16.mxu0 0
        %534 = vmatpush1.bf16.msra.mxu0 %v517
        %535 = vmatprep.subr.bf16.mxu0 0
        %536 = vmatpush1.bf16.msra.mxu0 %v518
        %537 = vmatprep.subr.bf16.mxu0 0
        %538 = vmatpush1.bf16.msra.mxu0 %v519
        %539 = vmatprep.subr.bf16.mxu0 0
        %540 = vmatpush1.bf16.msra.mxu0 %v520
        %541 = vmatprep.subr.bf16.mxu0 0
        %542 = vmatpush1.bf16.msra.mxu0 %v521
        %543 = vmatprep.subr.bf16.mxu0 0
        %544 = vmatpush1.bf16.msra.mxu0 %v522
        %545 = vmatprep.subr.bf16.mxu0 0
        %546 = vmatpush1.bf16.msra.mxu0 %v523
        %547 = vmatprep.subr.bf16.mxu0 0
        %548 = vmatpush1.bf16.msra.mxu0 %v524
        %549 = vmatprep.subr.bf16.mxu0 0
        %550 = vmatpush1.bf16.msra.mxu0 0
        %551 = vmatprep.subr.bf16.mxu0 0
        %552 = vmatpush1.bf16.msra.mxu0 0
        %553 = vmatprep.subr.bf16.mxu0 0
        %554 = vmatpush1.bf16.msra.mxu0 0
        %555 = vmatprep.subr.bf16.mxu0 0
        %556 = vmatpush1.bf16.msra.mxu0 0
        %557 = vmatprep.subr.bf16.mxu0 0
        %558 = vmatpush1.bf16.msra.mxu0 0
        %559 = vmatprep.subr.bf16.mxu0 0
        %560 = vmatpush1.bf16.msra.mxu0 0
        %561 = vmatprep.subr.bf16.mxu0 0
        %562 = vmatpush1.bf16.msra.mxu0 0
        %563 = vmatprep.subr.bf16.mxu0 0
        %564 = vmatpush1.bf16.msra.mxu0 0
        %565 = vmatprep.mubr.bf16.mxu0 0
        %566 = vmatmul.mubr.bf16.gmra.mrb[0].mxu0 %v483
        %v567 = vpop.f32.mrb[0].mxu0
        %v568 = vadd.f32 0.0, %v567
        %v569 = vpop.f32.mrb[0].mxu0
        %v570 = vpop.f32.mrb[0].mxu0
        %v571 = vpop.f32.mrb[0].mxu0
        %572 = vdwg.mxu0
        %v573 = vld [vmem:[%s6] sm:$0xf]
        %v574 = vpack.c.bf16 %v573, %v573
        %v575 = vlaneseq
        %v576 = vshrl.u32 %v575, 7
        %v577 = vsub.s32 0, %v576
        %v578 = vrot.slane %v573, %v577
        %v579 = vmul.f32 %v568, %v578
        %vm580 = vcmask 1043456
        %v581 = vsel %vm580, %v579, 0.0
        %582 = vadd.xlane.f32.xlu0 %v581
        %v583 = vpop.xlane.xlu0 %582
        %v584 = vlaneseq
        %v585 = vshrl.u32 %v584, 7
        %v586 = vsub.s32 2, %v585
        %v587 = vrot.slane %v573, %v586
        %v588 = vmul.f32 %v568, %v587
        %v589 = vsel %vm580, %v588, 0.0
        %590 = vadd.xlane.f32.xlu0 %v589
        %v591 = vpop.xlane.xlu0 %590
        %v592 = vld [vmem:[%s432] sm:$0x3]
        %v593 = vld [vmem:[%s432 + $0x2] sm:$0x3]
        %v594 = vld [vmem:[%s432 + $0x4] sm:$0x3]
        %v595 = vld [vmem:[%s432 + $0x6] sm:$0x3]
        %v596 = vunpack.c.0.s8 %v592
        %v597 = vunpack.c.0.s8 %v593
        %v598 = vunpack.c.0.s8 %v594
        %v599 = vunpack.c.0.s8 %v595
        %vm600 = vcmp.gt.s32.totalorder %v596, 0
        %vm601 = vcmp.gt.s32.totalorder %v597, 0
        %vm602 = vcmp.gt.s32.totalorder %v598, 0
        %vm603 = vcmp.gt.s32.totalorder %v599, 0
        %v604 = vsel %vm600, 0.0, -1e+30
        %v605 = vsel %vm601, 0.0, -1e+30
        %v606 = vsel %vm602, 0.0, -1e+30
        %v607 = vsel %vm603, 0.0, -1e+30
        %v608 = vld [vmem:[%s438] sm:$0x3]
        %v609 = vld [vmem:[%s438 + $0x2] sm:$0x3]
        %v610 = vld [vmem:[%s438 + $0x4] sm:$0x3]
        %v611 = vld [vmem:[%s438 + $0x6] sm:$0x3]
        %v612 = vunpack.c.0.s8 %v608
        %v613 = vunpack.c.0.s8 %v609
        %v614 = vunpack.c.0.s8 %v610
        %v615 = vunpack.c.0.s8 %v611
        %vm616 = vcmp.gt.s32.totalorder %v612, 0
        %vm617 = vcmp.gt.s32.totalorder %v613, 0
        %vm618 = vcmp.gt.s32.totalorder %v614, 0
        %vm619 = vcmp.gt.s32.totalorder %v615, 0
        %v620 = vld [vmem:[%s356] sm:$0xf]
        %v621 = vld [vmem:[%s356 + $0x4] sm:$0xf]
        %v622 = vld [vmem:[%s356 + $0x8] sm:$0xf]
        %v623 = vld [vmem:[%s356 + $0xc] sm:$0xf]
        %v624 = vld [vmem:[%s356 + $0x10] sm:$0xf]
        %v625 = vld [vmem:[%s356 + $0x14] sm:$0xf]
        %v626 = vld [vmem:[%s356 + $0x18] sm:$0xf]
        %v627 = vld [vmem:[%s356 + $0x1c] sm:$0xf]
        %v628 = vld [vmem:[%s356 + $0x20] sm:$0xf]
        %v629 = vld [vmem:[%s356 + $0x24] sm:$0xf]
        %v630 = vld [vmem:[%s356 + $0x28] sm:$0xf]
        %v631 = vld [vmem:[%s356 + $0x2c] sm:$0xf]
        %v632 = vld [vmem:[%s356 + $0x30] sm:$0xf]
        %v633 = vld [vmem:[%s356 + $0x34] sm:$0xf]
        %v634 = vld [vmem:[%s356 + $0x38] sm:$0xf]
        %v635 = vld [vmem:[%s356 + $0x3c] sm:$0xf]
        %v636 = vld [vmem:[%s356 + $0x40] sm:$0xf]
        %v637 = vld [vmem:[%s356 + $0x44] sm:$0xf]
        %v638 = vld [vmem:[%s356 + $0x48] sm:$0xf]
        %v639 = vld [vmem:[%s356 + $0x4c] sm:$0xf]
        %v640 = vld [vmem:[%s356 + $0x50] sm:$0xf]
        %v641 = vld [vmem:[%s356 + $0x54] sm:$0xf]
        %v642 = vld [vmem:[%s356 + $0x58] sm:$0xf]
        %v643 = vld [vmem:[%s356 + $0x5c] sm:$0xf]
        %v644 = vld [vmem:[%s356 + $0x60] sm:$0xf]
        %v645 = vld [vmem:[%s356 + $0x64] sm:$0xf]
        %v646 = vld [vmem:[%s356 + $0x68] sm:$0xf]
        %v647 = vld [vmem:[%s356 + $0x6c] sm:$0xf]
        %v648 = vld [vmem:[%s356 + $0x70] sm:$0xf]
        %v649 = vld [vmem:[%s356 + $0x74] sm:$0xf]
        %v650 = vld [vmem:[%s356 + $0x78] sm:$0xf]
        %v651 = vld [vmem:[%s356 + $0x7c] sm:$0xf]
        %v653 = vshrl.u32 %v574, 16
        %v654 = vpack.i.b16 %v653, %v653
        %v656 = vlaneseq
        %v657 = vshrl.u32 %v656, 7
        %v658 = vsub.s32 1, %v657
        %v659 = vrot.slane %v654, %v658
        %v660 = vmul.bf16 %v620, %v659
        %v661 = vmul.bf16 %v621, %v659
        %v662 = vmul.bf16 %v622, %v659
        %v663 = vmul.bf16 %v623, %v659
        %v664 = vmul.bf16 %v624, %v659
        %v665 = vmul.bf16 %v625, %v659
        %v666 = vmul.bf16 %v626, %v659
        %v667 = vmul.bf16 %v627, %v659
        %v668 = vmul.bf16 %v628, %v659
        %v669 = vmul.bf16 %v629, %v659
        %v670 = vmul.bf16 %v630, %v659
        %v671 = vmul.bf16 %v631, %v659
        %v672 = vmul.bf16 %v632, %v659
        %v673 = vmul.bf16 %v633, %v659
        %v674 = vmul.bf16 %v634, %v659
        %v675 = vmul.bf16 %v635, %v659
        %v676 = vmul.bf16 %v636, %v659
        %v677 = vmul.bf16 %v637, %v659
        %v678 = vmul.bf16 %v638, %v659
        %v679 = vmul.bf16 %v639, %v659
        %v680 = vmul.bf16 %v640, %v659
        %v681 = vmul.bf16 %v641, %v659
        %v682 = vmul.bf16 %v642, %v659
        %v683 = vmul.bf16 %v643, %v659
        %v684 = vmul.bf16 %v644, %v659
        %v685 = vmul.bf16 %v645, %v659
        %v686 = vmul.bf16 %v646, %v659
        %v687 = vmul.bf16 %v647, %v659
        %v688 = vmul.bf16 %v648, %v659
        %v689 = vmul.bf16 %v649, %v659
        %v690 = vmul.bf16 %v650, %v659
        %v691 = vmul.bf16 %v651, %v659
        %v692 = vunpack.c.l.bf16 %v660
        %v693 = vunpack.c.l.bf16 %v661
        %v694 = vunpack.c.l.bf16 %v662
        %v695 = vunpack.c.l.bf16 %v663
        %v696 = vunpack.c.l.bf16 %v664
        %v697 = vunpack.c.l.bf16 %v665
        %v698 = vunpack.c.l.bf16 %v666
        %v699 = vunpack.c.l.bf16 %v667
        %v700 = vunpack.c.l.bf16 %v668
        %v701 = vunpack.c.l.bf16 %v669
        %v702 = vunpack.c.l.bf16 %v670
        %v703 = vunpack.c.l.bf16 %v671
        %v704 = vunpack.c.l.bf16 %v672
        %v705 = vunpack.c.l.bf16 %v673
        %v706 = vunpack.c.l.bf16 %v674
        %v707 = vunpack.c.l.bf16 %v675
        %v708 = vunpack.c.l.bf16 %v676
        %v709 = vunpack.c.l.bf16 %v677
        %v710 = vunpack.c.l.bf16 %v678
        %v711 = vunpack.c.l.bf16 %v679
        %v712 = vunpack.c.l.bf16 %v680
        %v713 = vunpack.c.l.bf16 %v681
        %v714 = vunpack.c.l.bf16 %v682
        %v715 = vunpack.c.l.bf16 %v683
        %v716 = vunpack.c.l.bf16 %v684
        %v717 = vunpack.c.l.bf16 %v685
        %v718 = vunpack.c.l.bf16 %v686
        %v719 = vunpack.c.l.bf16 %v687
        %v720 = vunpack.c.l.bf16 %v688
        %v721 = vunpack.c.l.bf16 %v689
        %v722 = vunpack.c.l.bf16 %v690
        %v723 = vunpack.c.l.bf16 %v691
        %724 = vadd.xlane.f32.xlu0 %v692
        %v725 = vpop.xlane.xlu0 %724
        %726 = vadd.xlane.f32.xlu0 %v693
        %v727 = vpop.xlane.xlu0 %726
        %728 = vadd.xlane.f32.xlu0 %v694
        %v729 = vpop.xlane.xlu0 %728
        %730 = vadd.xlane.f32.xlu0 %v695
        %v731 = vpop.xlane.xlu0 %730
        %732 = vadd.xlane.f32.xlu0 %v696
        %v733 = vpop.xlane.xlu0 %732
        %734 = vadd.xlane.f32.xlu0 %v697
        %v735 = vpop.xlane.xlu0 %734
        %736 = vadd.xlane.f32.xlu0 %v698
        %v737 = vpop.xlane.xlu0 %736
        %738 = vadd.xlane.f32.xlu0 %v699
        %v739 = vpop.xlane.xlu0 %738
        %740 = vadd.xlane.f32.xlu0 %v700
        %v741 = vpop.xlane.xlu0 %740
        %742 = vadd.xlane.f32.xlu0 %v701
        %v743 = vpop.xlane.xlu0 %742
        %744 = vadd.xlane.f32.xlu0 %v702
        %v745 = vpop.xlane.xlu0 %744
        %746 = vadd.xlane.f32.xlu0 %v703
        %v747 = vpop.xlane.xlu0 %746
        %748 = vadd.xlane.f32.xlu0 %v704
        %v749 = vpop.xlane.xlu0 %748
        %750 = vadd.xlane.f32.xlu0 %v705
        %v751 = vpop.xlane.xlu0 %750
        %752 = vadd.xlane.f32.xlu0 %v706
        %v753 = vpop.xlane.xlu0 %752
        %754 = vadd.xlane.f32.xlu0 %v707
        %v755 = vpop.xlane.xlu0 %754
        %756 = vadd.xlane.f32.xlu0 %v708
        %v757 = vpop.xlane.xlu0 %756
        %758 = vadd.xlane.f32.xlu0 %v709
        %v759 = vpop.xlane.xlu0 %758
        %760 = vadd.xlane.f32.xlu0 %v710
        %v761 = vpop.xlane.xlu0 %760
        %762 = vadd.xlane.f32.xlu0 %v711
        %v763 = vpop.xlane.xlu0 %762
        %764 = vadd.xlane.f32.xlu0 %v712
        %v765 = vpop.xlane.xlu0 %764
        %766 = vadd.xlane.f32.xlu0 %v713
        %v767 = vpop.xlane.xlu0 %766
        %768 = vadd.xlane.f32.xlu0 %v714
        %v769 = vpop.xlane.xlu0 %768
        %770 = vadd.xlane.f32.xlu0 %v715
        %v771 = vpop.xlane.xlu0 %770
        %772 = vadd.xlane.f32.xlu0 %v716
        %v773 = vpop.xlane.xlu0 %772
        %774 = vadd.xlane.f32.xlu0 %v717
        %v775 = vpop.xlane.xlu0 %774
        %776 = vadd.xlane.f32.xlu0 %v718
        %v777 = vpop.xlane.xlu0 %776
        %778 = vadd.xlane.f32.xlu0 %v719
        %v779 = vpop.xlane.xlu0 %778
        %780 = vadd.xlane.f32.xlu0 %v720
        %v781 = vpop.xlane.xlu0 %780
        %782 = vadd.xlane.f32.xlu0 %v721
        %v783 = vpop.xlane.xlu0 %782
        %784 = vadd.xlane.f32.xlu0 %v722
        %v785 = vpop.xlane.xlu0 %784
        %786 = vadd.xlane.f32.xlu0 %v723
        %v787 = vpop.xlane.xlu0 %786
        %v789 = vlaneseq
        %v790 = vshrl.u32 %v789, 7
        %v791 = vsub.s32 0, %v790
        %v792 = vrot.slane %v591, %v791
        %v793 = vlaneseq
        %v794 = vshrl.u32 %v793, 7
        %v795 = vsub.s32 1, %v794
        %v796 = vrot.slane %v591, %v795
        %v797 = vlaneseq
        %v798 = vshrl.u32 %v797, 7
        %v799 = vsub.s32 2, %v798
        %v800 = vrot.slane %v591, %v799
        %v801 = vlaneseq
        %v802 = vshrl.u32 %v801, 7
        %v803 = vsub.s32 3, %v802
        %v804 = vrot.slane %v591, %v803
        %v809 = vadd.f32 %v725, %v792
        %v810 = vadd.f32 %v727, %v792
        %v811 = vadd.f32 %v729, %v792
        %v812 = vadd.f32 %v731, %v792
        %v813 = vadd.f32 %v733, %v792
        %v814 = vadd.f32 %v735, %v792
        %v815 = vadd.f32 %v737, %v792
        %v816 = vadd.f32 %v739, %v792
        %v817 = vadd.f32 %v741, %v796
        %v818 = vadd.f32 %v743, %v796
        %v819 = vadd.f32 %v745, %v796
        %v820 = vadd.f32 %v747, %v796
        %v821 = vadd.f32 %v749, %v796
        %v822 = vadd.f32 %v751, %v796
        %v823 = vadd.f32 %v753, %v796
        %v824 = vadd.f32 %v755, %v796
        %v825 = vadd.f32 %v757, %v800
        %v826 = vadd.f32 %v759, %v800
        %v827 = vadd.f32 %v761, %v800
        %v828 = vadd.f32 %v763, %v800
        %v829 = vadd.f32 %v765, %v800
        %v830 = vadd.f32 %v767, %v800
        %v831 = vadd.f32 %v769, %v800
        %v832 = vadd.f32 %v771, %v800
        %v833 = vadd.f32 %v773, %v804
        %v834 = vadd.f32 %v775, %v804
        %v835 = vadd.f32 %v777, %v804
        %v836 = vadd.f32 %v779, %v804
        %v837 = vadd.f32 %v781, %v804
        %v838 = vadd.f32 %v783, %v804
        %v839 = vadd.f32 %v785, %v804
        %v840 = vadd.f32 %v787, %v804
        %v845 = vlaneseq
        %v846 = vshrl.u32 %v845, 7
        %v847 = vsub.s32 0, %v846
        %v848 = vrot.slane %v604, %v847
        %850 = vbcast.lane.b32.xlu0 %v848, 256
        %v851 = vpop.permute.xlu0 %850
        %v852 = vlaneseq
        %v853 = vshrl.u32 %v852, 7
        %v854 = vsub.s32 1, %v853
        %v855 = vrot.slane %v604, %v854
        %857 = vbcast.lane.b32.xlu0 %v855, 256
        %v858 = vpop.permute.xlu0 %857
        %v859 = vlaneseq
        %v860 = vshrl.u32 %v859, 7
        %v861 = vsub.s32 2, %v860
        %v862 = vrot.slane %v604, %v861
        %864 = vbcast.lane.b32.xlu0 %v862, 256
        %v865 = vpop.permute.xlu0 %864
        %v866 = vlaneseq
        %v867 = vshrl.u32 %v866, 7
        %v868 = vsub.s32 3, %v867
        %v869 = vrot.slane %v604, %v868
        %871 = vbcast.lane.b32.xlu0 %v869, 256
        %v872 = vpop.permute.xlu0 %871
        %v873 = vlaneseq
        %v874 = vshrl.u32 %v873, 7
        %v875 = vsub.s32 4, %v874
        %v876 = vrot.slane %v604, %v875
        %878 = vbcast.lane.b32.xlu0 %v876, 256
        %v879 = vpop.permute.xlu0 %878
        %v880 = vlaneseq
        %v881 = vshrl.u32 %v880, 7
        %v882 = vsub.s32 5, %v881
        %v883 = vrot.slane %v604, %v882
        %885 = vbcast.lane.b32.xlu0 %v883, 256
        %v886 = vpop.permute.xlu0 %885
        %v887 = vlaneseq
        %v888 = vshrl.u32 %v887, 7
        %v889 = vsub.s32 6, %v888
        %v890 = vrot.slane %v604, %v889
        %892 = vbcast.lane.b32.xlu0 %v890, 256
        %v893 = vpop.permute.xlu0 %892
        %v894 = vlaneseq
        %v895 = vshrl.u32 %v894, 7
        %v896 = vsub.s32 7, %v895
        %v897 = vrot.slane %v604, %v896
        %899 = vbcast.lane.b32.xlu0 %v897, 256
        %v900 = vpop.permute.xlu0 %899
        %v901 = vlaneseq
        %v902 = vshrl.u32 %v901, 7
        %v903 = vsub.s32 0, %v902
        %v904 = vrot.slane %v605, %v903
        %906 = vbcast.lane.b32.xlu0 %v904, 256
        %v907 = vpop.permute.xlu0 %906
        %v908 = vlaneseq
        %v909 = vshrl.u32 %v908, 7
        %v910 = vsub.s32 1, %v909
        %v911 = vrot.slane %v605, %v910
        %913 = vbcast.lane.b32.xlu0 %v911, 256
        %v914 = vpop.permute.xlu0 %913
        %v915 = vlaneseq
        %v916 = vshrl.u32 %v915, 7
        %v917 = vsub.s32 2, %v916
        %v918 = vrot.slane %v605, %v917
        %920 = vbcast.lane.b32.xlu0 %v918, 256
        %v921 = vpop.permute.xlu0 %920
        %v922 = vlaneseq
        %v923 = vshrl.u32 %v922, 7
        %v924 = vsub.s32 3, %v923
        %v925 = vrot.slane %v605, %v924
        %927 = vbcast.lane.b32.xlu0 %v925, 256
        %v928 = vpop.permute.xlu0 %927
        %v929 = vlaneseq
        %v930 = vshrl.u32 %v929, 7
        %v931 = vsub.s32 4, %v930
        %v932 = vrot.slane %v605, %v931
        %934 = vbcast.lane.b32.xlu0 %v932, 256
        %v935 = vpop.permute.xlu0 %934
        %v936 = vlaneseq
        %v937 = vshrl.u32 %v936, 7
        %v938 = vsub.s32 5, %v937
        %v939 = vrot.slane %v605, %v938
        %941 = vbcast.lane.b32.xlu0 %v939, 256
        %v942 = vpop.permute.xlu0 %941
        %v943 = vlaneseq
        %v944 = vshrl.u32 %v943, 7
        %v945 = vsub.s32 6, %v944
        %v946 = vrot.slane %v605, %v945
        %948 = vbcast.lane.b32.xlu0 %v946, 256
        %v949 = vpop.permute.xlu0 %948
        %v950 = vlaneseq
        %v951 = vshrl.u32 %v950, 7
        %v952 = vsub.s32 7, %v951
        %v953 = vrot.slane %v605, %v952
        %955 = vbcast.lane.b32.xlu0 %v953, 256
        %v956 = vpop.permute.xlu0 %955
        %v957 = vlaneseq
        %v958 = vshrl.u32 %v957, 7
        %v959 = vsub.s32 0, %v958
        %v960 = vrot.slane %v606, %v959
        %962 = vbcast.lane.b32.xlu0 %v960, 256
        %v963 = vpop.permute.xlu0 %962
        %v964 = vlaneseq
        %v965 = vshrl.u32 %v964, 7
        %v966 = vsub.s32 1, %v965
        %v967 = vrot.slane %v606, %v966
        %969 = vbcast.lane.b32.xlu0 %v967, 256
        %v970 = vpop.permute.xlu0 %969
        %v971 = vlaneseq
        %v972 = vshrl.u32 %v971, 7
        %v973 = vsub.s32 2, %v972
        %v974 = vrot.slane %v606, %v973
        %976 = vbcast.lane.b32.xlu0 %v974, 256
        %v977 = vpop.permute.xlu0 %976
        %v978 = vlaneseq
        %v979 = vshrl.u32 %v978, 7
        %v980 = vsub.s32 3, %v979
        %v981 = vrot.slane %v606, %v980
        %983 = vbcast.lane.b32.xlu0 %v981, 256
        %v984 = vpop.permute.xlu0 %983
        %v985 = vlaneseq
        %v986 = vshrl.u32 %v985, 7
        %v987 = vsub.s32 4, %v986
        %v988 = vrot.slane %v606, %v987
        %990 = vbcast.lane.b32.xlu0 %v988, 256
        %v991 = vpop.permute.xlu0 %990
        %v992 = vlaneseq
        %v993 = vshrl.u32 %v992, 7
        %v994 = vsub.s32 5, %v993
        %v995 = vrot.slane %v606, %v994
        %997 = vbcast.lane.b32.xlu0 %v995, 256
        %v998 = vpop.permute.xlu0 %997
        %v999 = vlaneseq
        %v1000 = vshrl.u32 %v999, 7
        %v1001 = vsub.s32 6, %v1000
        %v1002 = vrot.slane %v606, %v1001
        %1004 = vbcast.lane.b32.xlu0 %v1002, 256
        %v1005 = vpop.permute.xlu0 %1004
        %v1006 = vlaneseq
        %v1007 = vshrl.u32 %v1006, 7
        %v1008 = vsub.s32 7, %v1007
        %v1009 = vrot.slane %v606, %v1008
        %1011 = vbcast.lane.b32.xlu0 %v1009, 256
        %v1012 = vpop.permute.xlu0 %1011
        %v1013 = vlaneseq
        %v1014 = vshrl.u32 %v1013, 7
        %v1015 = vsub.s32 0, %v1014
        %v1016 = vrot.slane %v607, %v1015
        %1018 = vbcast.lane.b32.xlu0 %v1016, 256
        %v1019 = vpop.permute.xlu0 %1018
        %v1020 = vlaneseq
        %v1021 = vshrl.u32 %v1020, 7
        %v1022 = vsub.s32 1, %v1021
        %v1023 = vrot.slane %v607, %v1022
        %1025 = vbcast.lane.b32.xlu0 %v1023, 256
        %v1026 = vpop.permute.xlu0 %1025
        %v1027 = vlaneseq
        %v1028 = vshrl.u32 %v1027, 7
        %v1029 = vsub.s32 2, %v1028
        %v1030 = vrot.slane %v607, %v1029
        %1032 = vbcast.lane.b32.xlu0 %v1030, 256
        %v1033 = vpop.permute.xlu0 %1032
        %v1034 = vlaneseq
        %v1035 = vshrl.u32 %v1034, 7
        %v1036 = vsub.s32 3, %v1035
        %v1037 = vrot.slane %v607, %v1036
        %1039 = vbcast.lane.b32.xlu0 %v1037, 256
        %v1040 = vpop.permute.xlu0 %1039
        %v1041 = vlaneseq
        %v1042 = vshrl.u32 %v1041, 7
        %v1043 = vsub.s32 4, %v1042
        %v1044 = vrot.slane %v607, %v1043
        %1046 = vbcast.lane.b32.xlu0 %v1044, 256
        %v1047 = vpop.permute.xlu0 %1046
        %v1048 = vlaneseq
        %v1049 = vshrl.u32 %v1048, 7
        %v1050 = vsub.s32 5, %v1049
        %v1051 = vrot.slane %v607, %v1050
        %1053 = vbcast.lane.b32.xlu0 %v1051, 256
        %v1054 = vpop.permute.xlu0 %1053
        %v1055 = vlaneseq
        %v1056 = vshrl.u32 %v1055, 7
        %v1057 = vsub.s32 6, %v1056
        %v1058 = vrot.slane %v607, %v1057
        %1060 = vbcast.lane.b32.xlu0 %v1058, 256
        %v1061 = vpop.permute.xlu0 %1060
        %v1062 = vlaneseq
        %v1063 = vshrl.u32 %v1062, 7
        %v1064 = vsub.s32 7, %v1063
        %v1065 = vrot.slane %v607, %v1064
        %1067 = vbcast.lane.b32.xlu0 %v1065, 256
        %v1068 = vpop.permute.xlu0 %1067
        %v1101 = vadd.f32 %v809, %v851
        %v1102 = vadd.f32 %v810, %v858
        %v1103 = vadd.f32 %v811, %v865
        %v1104 = vadd.f32 %v812, %v872
        %v1105 = vadd.f32 %v813, %v879
        %v1106 = vadd.f32 %v814, %v886
        %v1107 = vadd.f32 %v815, %v893
        %v1108 = vadd.f32 %v816, %v900
        %v1109 = vadd.f32 %v817, %v907
        %v1110 = vadd.f32 %v818, %v914
        %v1111 = vadd.f32 %v819, %v921
        %v1112 = vadd.f32 %v820, %v928
        %v1113 = vadd.f32 %v821, %v935
        %v1114 = vadd.f32 %v822, %v942
        %v1115 = vadd.f32 %v823, %v949
        %v1116 = vadd.f32 %v824, %v956
        %v1117 = vadd.f32 %v825, %v963
        %v1118 = vadd.f32 %v826, %v970
        %v1119 = vadd.f32 %v827, %v977
        %v1120 = vadd.f32 %v828, %v984
        %v1121 = vadd.f32 %v829, %v991
        %v1122 = vadd.f32 %v830, %v998
        %v1123 = vadd.f32 %v831, %v1005
        %v1124 = vadd.f32 %v832, %v1012
        %v1125 = vadd.f32 %v833, %v1019
        %v1126 = vadd.f32 %v834, %v1026
        %v1127 = vadd.f32 %v835, %v1033
        %v1128 = vadd.f32 %v836, %v1040
        %v1129 = vadd.f32 %v837, %v1047
        %v1130 = vadd.f32 %v838, %v1054
        %v1131 = vadd.f32 %v839, %v1061
        %v1132 = vadd.f32 %v840, %v1068
        %1165 = vset.pattern.permute.xlu0 0
        %1166 = vperm.xlu0 %1165, %v1101
        %v1167 = vpop.permute.xlu0 %1166
        %1168 = vset.pattern.permute.xlu0 0
        %1169 = vperm.xlu0 %1168, %v1102
        %v1170 = vpop.permute.xlu0 %1169
        %1171 = vset.pattern.permute.xlu0 0
        %1172 = vperm.xlu0 %1171, %v1103
        %v1173 = vpop.permute.xlu0 %1172
        %1174 = vset.pattern.permute.xlu0 0
        %1175 = vperm.xlu0 %1174, %v1104
        %v1176 = vpop.permute.xlu0 %1175
        %1177 = vset.pattern.permute.xlu0 0
        %1178 = vperm.xlu0 %1177, %v1105
        %v1179 = vpop.permute.xlu0 %1178
        %1180 = vset.pattern.permute.xlu0 0
        %1181 = vperm.xlu0 %1180, %v1106
        %v1182 = vpop.permute.xlu0 %1181
        %1183 = vset.pattern.permute.xlu0 0
        %1184 = vperm.xlu0 %1183, %v1107
        %v1185 = vpop.permute.xlu0 %1184
        %1186 = vset.pattern.permute.xlu0 0
        %1187 = vperm.xlu0 %1186, %v1108
        %v1188 = vpop.permute.xlu0 %1187
        %1189 = vset.pattern.permute.xlu0 0
        %1190 = vperm.xlu0 %1189, %v1109
        %v1191 = vpop.permute.xlu0 %1190
        %1192 = vset.pattern.permute.xlu0 0
        %1193 = vperm.xlu0 %1192, %v1110
        %v1194 = vpop.permute.xlu0 %1193
        %1195 = vset.pattern.permute.xlu0 0
        %1196 = vperm.xlu0 %1195, %v1111
        %v1197 = vpop.permute.xlu0 %1196
        %1198 = vset.pattern.permute.xlu0 0
        %1199 = vperm.xlu0 %1198, %v1112
        %v1200 = vpop.permute.xlu0 %1199
        %1201 = vset.pattern.permute.xlu0 0
        %1202 = vperm.xlu0 %1201, %v1113
        %v1203 = vpop.permute.xlu0 %1202
        %1204 = vset.pattern.permute.xlu0 0
        %1205 = vperm.xlu0 %1204, %v1114
        %v1206 = vpop.permute.xlu0 %1205
        %1207 = vset.pattern.permute.xlu0 0
        %1208 = vperm.xlu0 %1207, %v1115
        %v1209 = vpop.permute.xlu0 %1208
        %1210 = vset.pattern.permute.xlu0 0
        %1211 = vperm.xlu0 %1210, %v1116
        %v1212 = vpop.permute.xlu0 %1211
        %1213 = vset.pattern.permute.xlu0 0
        %1214 = vperm.xlu0 %1213, %v1117
        %v1215 = vpop.permute.xlu0 %1214
        %1216 = vset.pattern.permute.xlu0 0
        %1217 = vperm.xlu0 %1216, %v1118
        %v1218 = vpop.permute.xlu0 %1217
        %1219 = vset.pattern.permute.xlu0 0
        %1220 = vperm.xlu0 %1219, %v1119
        %v1221 = vpop.permute.xlu0 %1220
        %1222 = vset.pattern.permute.xlu0 0
        %1223 = vperm.xlu0 %1222, %v1120
        %v1224 = vpop.permute.xlu0 %1223
        %1225 = vset.pattern.permute.xlu0 0
        %1226 = vperm.xlu0 %1225, %v1121
        %v1227 = vpop.permute.xlu0 %1226
        %1228 = vset.pattern.permute.xlu0 0
        %1229 = vperm.xlu0 %1228, %v1122
        %v1230 = vpop.permute.xlu0 %1229
        %1231 = vset.pattern.permute.xlu0 0
        %1232 = vperm.xlu0 %1231, %v1123
        %v1233 = vpop.permute.xlu0 %1232
        %1234 = vset.pattern.permute.xlu0 0
        %1235 = vperm.xlu0 %1234, %v1124
        %v1236 = vpop.permute.xlu0 %1235
        %1237 = vset.pattern.permute.xlu0 0
        %1238 = vperm.xlu0 %1237, %v1125
        %v1239 = vpop.permute.xlu0 %1238
        %1240 = vset.pattern.permute.xlu0 0
        %1241 = vperm.xlu0 %1240, %v1126
        %v1242 = vpop.permute.xlu0 %1241
        %1243 = vset.pattern.permute.xlu0 0
        %1244 = vperm.xlu0 %1243, %v1127
        %v1245 = vpop.permute.xlu0 %1244
        %1246 = vset.pattern.permute.xlu0 0
        %1247 = vperm.xlu0 %1246, %v1128
        %v1248 = vpop.permute.xlu0 %1247
        %1249 = vset.pattern.permute.xlu0 0
        %1250 = vperm.xlu0 %1249, %v1129
        %v1251 = vpop.permute.xlu0 %1250
        %1252 = vset.pattern.permute.xlu0 0
        %1253 = vperm.xlu0 %1252, %v1130
        %v1254 = vpop.permute.xlu0 %1253
        %1255 = vset.pattern.permute.xlu0 0
        %1256 = vperm.xlu0 %1255, %v1131
        %v1257 = vpop.permute.xlu0 %1256
        %1258 = vset.pattern.permute.xlu0 0
        %1259 = vperm.xlu0 %1258, %v1132
        %v1260 = vpop.permute.xlu0 %1259
        %v1261 = vlaneseq
        %v1262 = vand.u32 %v1261, 127
        %v1263 = vlaneseq
        %v1264 = vshrl.u32 %v1263, 7
        %v1265 = vsub.s32 %v1262, %v1264
        %v1266 = vrot.slane %v1167, %v1265
        %v1267 = vlaneseq
        %v1268 = vshrl.u32 %v1267, 7
        %v1269 = vsub.s32 %v1262, %v1268
        %v1270 = vrot.slane %v1170, %v1269
        %v1271 = vlaneseq
        %v1272 = vshrl.u32 %v1271, 7
        %v1273 = vsub.s32 %v1262, %v1272
        %v1274 = vrot.slane %v1173, %v1273
        %v1275 = vlaneseq
        %v1276 = vshrl.u32 %v1275, 7
        %v1277 = vsub.s32 %v1262, %v1276
        %v1278 = vrot.slane %v1176, %v1277
        %v1279 = vlaneseq
        %v1280 = vshrl.u32 %v1279, 7
        %v1281 = vsub.s32 %v1262, %v1280
        %v1282 = vrot.slane %v1179, %v1281
        %v1283 = vlaneseq
        %v1284 = vshrl.u32 %v1283, 7
        %v1285 = vsub.s32 %v1262, %v1284
        %v1286 = vrot.slane %v1182, %v1285
        %v1287 = vlaneseq
        %v1288 = vshrl.u32 %v1287, 7
        %v1289 = vsub.s32 %v1262, %v1288
        %v1290 = vrot.slane %v1185, %v1289
        %v1291 = vlaneseq
        %v1292 = vshrl.u32 %v1291, 7
        %v1293 = vsub.s32 %v1262, %v1292
        %v1294 = vrot.slane %v1188, %v1293
        %v1295 = vlaneseq
        %v1296 = vshrl.u32 %v1295, 7
        %v1297 = vsub.s32 %v1262, %v1296
        %v1298 = vrot.slane %v1191, %v1297
        %v1299 = vlaneseq
        %v1300 = vshrl.u32 %v1299, 7
        %v1301 = vsub.s32 %v1262, %v1300
        %v1302 = vrot.slane %v1194, %v1301
        %v1303 = vlaneseq
        %v1304 = vshrl.u32 %v1303, 7
        %v1305 = vsub.s32 %v1262, %v1304
        %v1306 = vrot.slane %v1197, %v1305
        %v1307 = vlaneseq
        %v1308 = vshrl.u32 %v1307, 7
        %v1309 = vsub.s32 %v1262, %v1308
        %v1310 = vrot.slane %v1200, %v1309
        %v1311 = vlaneseq
        %v1312 = vshrl.u32 %v1311, 7
        %v1313 = vsub.s32 %v1262, %v1312
        %v1314 = vrot.slane %v1203, %v1313
        %v1315 = vlaneseq
        %v1316 = vshrl.u32 %v1315, 7
        %v1317 = vsub.s32 %v1262, %v1316
        %v1318 = vrot.slane %v1206, %v1317
        %v1319 = vlaneseq
        %v1320 = vshrl.u32 %v1319, 7
        %v1321 = vsub.s32 %v1262, %v1320
        %v1322 = vrot.slane %v1209, %v1321
        %v1323 = vlaneseq
        %v1324 = vshrl.u32 %v1323, 7
        %v1325 = vsub.s32 %v1262, %v1324
        %v1326 = vrot.slane %v1212, %v1325
        %v1327 = vlaneseq
        %v1328 = vshrl.u32 %v1327, 7
        %v1329 = vsub.s32 %v1262, %v1328
        %v1330 = vrot.slane %v1215, %v1329
        %v1331 = vlaneseq
        %v1332 = vshrl.u32 %v1331, 7
        %v1333 = vsub.s32 %v1262, %v1332
        %v1334 = vrot.slane %v1218, %v1333
        %v1335 = vlaneseq
        %v1336 = vshrl.u32 %v1335, 7
        %v1337 = vsub.s32 %v1262, %v1336
        %v1338 = vrot.slane %v1221, %v1337
        %v1339 = vlaneseq
        %v1340 = vshrl.u32 %v1339, 7
        %v1341 = vsub.s32 %v1262, %v1340
        %v1342 = vrot.slane %v1224, %v1341
        %v1343 = vlaneseq
        %v1344 = vshrl.u32 %v1343, 7
        %v1345 = vsub.s32 %v1262, %v1344
        %v1346 = vrot.slane %v1227, %v1345
        %v1347 = vlaneseq
        %v1348 = vshrl.u32 %v1347, 7
        %v1349 = vsub.s32 %v1262, %v1348
        %v1350 = vrot.slane %v1230, %v1349
        %v1351 = vlaneseq
        %v1352 = vshrl.u32 %v1351, 7
        %v1353 = vsub.s32 %v1262, %v1352
        %v1354 = vrot.slane %v1233, %v1353
        %v1355 = vlaneseq
        %v1356 = vshrl.u32 %v1355, 7
        %v1357 = vsub.s32 %v1262, %v1356
        %v1358 = vrot.slane %v1236, %v1357
        %v1359 = vlaneseq
        %v1360 = vshrl.u32 %v1359, 7
        %v1361 = vsub.s32 %v1262, %v1360
        %v1362 = vrot.slane %v1239, %v1361
        %v1363 = vlaneseq
        %v1364 = vshrl.u32 %v1363, 7
        %v1365 = vsub.s32 %v1262, %v1364
        %v1366 = vrot.slane %v1242, %v1365
        %v1367 = vlaneseq
        %v1368 = vshrl.u32 %v1367, 7
        %v1369 = vsub.s32 %v1262, %v1368
        %v1370 = vrot.slane %v1245, %v1369
        %v1371 = vlaneseq
        %v1372 = vshrl.u32 %v1371, 7
        %v1373 = vsub.s32 %v1262, %v1372
        %v1374 = vrot.slane %v1248, %v1373
        %v1375 = vlaneseq
        %v1376 = vshrl.u32 %v1375, 7
        %v1377 = vsub.s32 %v1262, %v1376
        %v1378 = vrot.slane %v1251, %v1377
        %v1379 = vlaneseq
        %v1380 = vshrl.u32 %v1379, 7
        %v1381 = vsub.s32 %v1262, %v1380
        %v1382 = vrot.slane %v1254, %v1381
        %v1383 = vlaneseq
        %v1384 = vshrl.u32 %v1383, 7
        %v1385 = vsub.s32 %v1262, %v1384
        %v1386 = vrot.slane %v1257, %v1385
        %v1387 = vlaneseq
        %v1388 = vshrl.u32 %v1387, 7
        %v1389 = vsub.s32 %v1262, %v1388
        %v1390 = vrot.slane %v1260, %v1389
        %v1391 = vsel %vm475, %v1270, %v1266
        %v1392 = vsel %vm478, %v1274, %v1391
        %v1393 = vsel %vm481, %v1278, %v1392
        %vm1394 = vcmask 1044484
        %v1395 = vsel %vm1394, %v1282, %v1393
        %vm1396 = vcmask 1045509
        %v1397 = vsel %vm1396, %v1286, %v1395
        %vm1398 = vcmask 1046534
        %v1399 = vsel %vm1398, %v1290, %v1397
        %vm1400 = vcmask 1047559
        %v1401 = vsel %vm1400, %v1294, %v1399
        %v1402 = vsel %vm475, %v1302, %v1298
        %v1403 = vsel %vm478, %v1306, %v1402
        %v1404 = vsel %vm481, %v1310, %v1403
        %v1405 = vsel %vm1394, %v1314, %v1404
        %v1406 = vsel %vm1396, %v1318, %v1405
        %v1407 = vsel %vm1398, %v1322, %v1406
        %v1408 = vsel %vm1400, %v1326, %v1407
        %v1409 = vsel %vm475, %v1334, %v1330
        %v1410 = vsel %vm478, %v1338, %v1409
        %v1411 = vsel %vm481, %v1342, %v1410
        %v1412 = vsel %vm1394, %v1346, %v1411
        %v1413 = vsel %vm1396, %v1350, %v1412
        %v1414 = vsel %vm1398, %v1354, %v1413
        %v1415 = vsel %vm1400, %v1358, %v1414
        %v1416 = vsel %vm475, %v1366, %v1362
        %v1417 = vsel %vm478, %v1370, %v1416
        %v1418 = vsel %vm481, %v1374, %v1417
        %v1419 = vsel %vm1394, %v1378, %v1418
        %v1420 = vsel %vm1396, %v1382, %v1419
        %v1421 = vsel %vm1398, %v1386, %v1420
        %v1422 = vsel %vm1400, %v1390, %v1421
        %vm1427 = vcmask 64512
        %v1428 = vsel %vm1427, %v1401, -inf
        %1429 = vmax.xlane.f32.xlu0 %v1428
        %v1430 = vpop.xlane.xlu0 %1429
        %v1431 = vsel %vm1427, %v1408, -inf
        %1432 = vmax.xlane.f32.xlu0 %v1431
        %v1433 = vpop.xlane.xlu0 %1432
        %v1434 = vsel %vm1427, %v1415, -inf
        %1435 = vmax.xlane.f32.xlu0 %v1434
        %v1436 = vpop.xlane.xlu0 %1435
        %v1437 = vsel %vm1427, %v1422, -inf
        %1438 = vmax.xlane.f32.xlu0 %v1437
        %v1439 = vpop.xlane.xlu0 %1438
        %v1440 = vld [vmem:[%s425] sm:$0xf]
        %v1441 = vld [vmem:[%s425 + $0x4] sm:$0xf]
        %v1442 = vld [vmem:[%s425 + $0x8] sm:$0xf]
        %v1443 = vld [vmem:[%s425 + $0xc] sm:$0xf]
        %v1444 = vunpack.c.l.bf16 %v1440
        %v1445 = vunpack.c.l.bf16 %v1441
        %v1446 = vunpack.c.l.bf16 %v1442
        %v1447 = vunpack.c.l.bf16 %v1443
        %v1448 = vld [vmem:[#allocation7] sm:$0xf]
        %v1449 = vld [vmem:[#allocation7 + $0x4] sm:$0xf]
        %v1450 = vld [vmem:[#allocation7 + $0x8] sm:$0xf]
        %v1451 = vld [vmem:[#allocation7 + $0xc] sm:$0xf]
        %v1452 = vld [vmem:[#allocation7 + $0x10] sm:$0xf]
        %v1453 = vld [vmem:[#allocation7 + $0x14] sm:$0xf]
        %v1454 = vld [vmem:[#allocation7 + $0x18] sm:$0xf]
        %v1455 = vld [vmem:[#allocation7 + $0x1c] sm:$0xf]
        %v1456 = vld [vmem:[#allocation7 + $0x20] sm:$0xf]
        %v1457 = vld [vmem:[#allocation7 + $0x24] sm:$0xf]
        %v1458 = vld [vmem:[#allocation7 + $0x28] sm:$0xf]
        %v1459 = vld [vmem:[#allocation7 + $0x2c] sm:$0xf]
        %v1460 = vld [vmem:[#allocation7 + $0x30] sm:$0xf]
        %v1461 = vld [vmem:[#allocation7 + $0x34] sm:$0xf]
        %v1462 = vld [vmem:[#allocation7 + $0x38] sm:$0xf]
        %v1463 = vld [vmem:[#allocation7 + $0x3c] sm:$0xf]
        %v1464 = vld [vmem:[#allocation7 + $0x40] sm:$0xf]
        %v1465 = vld [vmem:[#allocation7 + $0x44] sm:$0xf]
        %v1466 = vld [vmem:[#allocation7 + $0x48] sm:$0xf]
        %v1467 = vld [vmem:[#allocation7 + $0x4c] sm:$0xf]
        %v1468 = vld [vmem:[#allocation7 + $0x50] sm:$0xf]
        %v1469 = vld [vmem:[#allocation7 + $0x54] sm:$0xf]
        %v1470 = vld [vmem:[#allocation7 + $0x58] sm:$0xf]
        %v1471 = vld [vmem:[#allocation7 + $0x5c] sm:$0xf]
        %v1472 = vld [vmem:[#allocation7 + $0x60] sm:$0xf]
        %v1473 = vld [vmem:[#allocation7 + $0x64] sm:$0xf]
        %v1474 = vld [vmem:[#allocation7 + $0x68] sm:$0xf]
        %v1475 = vld [vmem:[#allocation7 + $0x6c] sm:$0xf]
        %v1476 = vld [vmem:[#allocation7 + $0x70] sm:$0xf]
        %v1477 = vld [vmem:[#allocation7 + $0x74] sm:$0xf]
        %v1478 = vld [vmem:[#allocation7 + $0x78] sm:$0xf]
        %v1479 = vld [vmem:[#allocation7 + $0x7c] sm:$0xf]
        %v1480 = vpack.c.bf16 %v1444, %v1444
        %v1481 = vpack.c.bf16 %v1445, %v1445
        %v1482 = vpack.c.bf16 %v1446, %v1446
        %v1483 = vpack.c.bf16 %v1447, %v1447
        %v1484 = vlaneseq
        %v1485 = vshrl.u32 %v1484, 7
        %v1486 = vsub.s32 1, %v1485
        %v1487 = vrot.slane %v573, %v1486
        %v1488 = vmul.f32 %v1444, %v1487
        %v1489 = vmul.f32 %v1445, %v1487
        %v1490 = vmul.f32 %v1446, %v1487
        %v1491 = vmul.f32 %v1447, %v1487
        %1492 = vadd.xlane.f32.xlu0 %v1488
        %v1493 = vpop.xlane.xlu0 %1492
        %1494 = vadd.xlane.f32.xlu0 %v1489
        %v1495 = vpop.xlane.xlu0 %1494
        %1496 = vadd.xlane.f32.xlu0 %v1490
        %v1497 = vpop.xlane.xlu0 %1496
        %1498 = vadd.xlane.f32.xlu0 %v1491
        %v1499 = vpop.xlane.xlu0 %1498
        %v1501 = vlaneseq
        %v1502 = vshrl.u32 %v1501, 7
        %v1503 = vsub.s32 0, %v1502
        %v1504 = vrot.slane %v583, %v1503
        %v1505 = vlaneseq
        %v1506 = vshrl.u32 %v1505, 7
        %v1507 = vsub.s32 1, %v1506
        %v1508 = vrot.slane %v583, %v1507
        %v1509 = vlaneseq
        %v1510 = vshrl.u32 %v1509, 7
        %v1511 = vsub.s32 2, %v1510
        %v1512 = vrot.slane %v583, %v1511
        %v1513 = vlaneseq
        %v1514 = vshrl.u32 %v1513, 7
        %v1515 = vsub.s32 3, %v1514
        %v1516 = vrot.slane %v583, %v1515
        %v1521 = vadd.f32 %v1493, %v1504
        %v1522 = vadd.f32 %v1495, %v1508
        %v1523 = vadd.f32 %v1497, %v1512
        %v1524 = vadd.f32 %v1499, %v1516
        %v1525 = vadd.f32 %v1521, %v851
        %v1526 = vadd.f32 %v1521, %v858
        %v1527 = vadd.f32 %v1521, %v865
        %v1528 = vadd.f32 %v1521, %v872
        %v1529 = vadd.f32 %v1521, %v879
        %v1530 = vadd.f32 %v1521, %v886
        %v1531 = vadd.f32 %v1521, %v893
        %v1532 = vadd.f32 %v1521, %v900
        %v1533 = vadd.f32 %v1522, %v907
        %v1534 = vadd.f32 %v1522, %v914
        %v1535 = vadd.f32 %v1522, %v921
        %v1536 = vadd.f32 %v1522, %v928
        %v1537 = vadd.f32 %v1522, %v935
        %v1538 = vadd.f32 %v1522, %v942
        %v1539 = vadd.f32 %v1522, %v949
        %v1540 = vadd.f32 %v1522, %v956
        %v1541 = vadd.f32 %v1523, %v963
        %v1542 = vadd.f32 %v1523, %v970
        %v1543 = vadd.f32 %v1523, %v977
        %v1544 = vadd.f32 %v1523, %v984
        %v1545 = vadd.f32 %v1523, %v991
        %v1546 = vadd.f32 %v1523, %v998
        %v1547 = vadd.f32 %v1523, %v1005
        %v1548 = vadd.f32 %v1523, %v1012
        %v1549 = vadd.f32 %v1524, %v1019
        %v1550 = vadd.f32 %v1524, %v1026
        %v1551 = vadd.f32 %v1524, %v1033
        %v1552 = vadd.f32 %v1524, %v1040
        %v1553 = vadd.f32 %v1524, %v1047
        %v1554 = vadd.f32 %v1524, %v1054
        %v1555 = vadd.f32 %v1524, %v1061
        %v1556 = vadd.f32 %v1524, %v1068
        %1589 = vset.pattern.permute.xlu0 0
        %1590 = vperm.xlu0 %1589, %v1525
        %v1591 = vpop.permute.xlu0 %1590
        %1592 = vset.pattern.permute.xlu0 0
        %1593 = vperm.xlu0 %1592, %v1526
        %v1594 = vpop.permute.xlu0 %1593
        %1595 = vset.pattern.permute.xlu0 0
        %1596 = vperm.xlu0 %1595, %v1527
        %v1597 = vpop.permute.xlu0 %1596
        %1598 = vset.pattern.permute.xlu0 0
        %1599 = vperm.xlu0 %1598, %v1528
        %v1600 = vpop.permute.xlu0 %1599
        %1601 = vset.pattern.permute.xlu0 0
        %1602 = vperm.xlu0 %1601, %v1529
        %v1603 = vpop.permute.xlu0 %1602
        %1604 = vset.pattern.permute.xlu0 0
        %1605 = vperm.xlu0 %1604, %v1530
        %v1606 = vpop.permute.xlu0 %1605
        %1607 = vset.pattern.permute.xlu0 0
        %1608 = vperm.xlu0 %1607, %v1531
        %v1609 = vpop.permute.xlu0 %1608
        %1610 = vset.pattern.permute.xlu0 0
        %1611 = vperm.xlu0 %1610, %v1532
        %v1612 = vpop.permute.xlu0 %1611
        %1613 = vset.pattern.permute.xlu0 0
        %1614 = vperm.xlu0 %1613, %v1533
        %v1615 = vpop.permute.xlu0 %1614
        %1616 = vset.pattern.permute.xlu0 0
        %1617 = vperm.xlu0 %1616, %v1534
        %v1618 = vpop.permute.xlu0 %1617
        %1619 = vset.pattern.permute.xlu0 0
        %1620 = vperm.xlu0 %1619, %v1535
        %v1621 = vpop.permute.xlu0 %1620
        %1622 = vset.pattern.permute.xlu0 0
        %1623 = vperm.xlu0 %1622, %v1536
        %v1624 = vpop.permute.xlu0 %1623
        %1625 = vset.pattern.permute.xlu0 0
        %1626 = vperm.xlu0 %1625, %v1537
        %v1627 = vpop.permute.xlu0 %1626
        %1628 = vset.pattern.permute.xlu0 0
        %1629 = vperm.xlu0 %1628, %v1538
        %v1630 = vpop.permute.xlu0 %1629
        %1631 = vset.pattern.permute.xlu0 0
        %1632 = vperm.xlu0 %1631, %v1539
        %v1633 = vpop.permute.xlu0 %1632
        %1634 = vset.pattern.permute.xlu0 0
        %1635 = vperm.xlu0 %1634, %v1540
        %v1636 = vpop.permute.xlu0 %1635
        %1637 = vset.pattern.permute.xlu0 0
        %1638 = vperm.xlu0 %1637, %v1541
        %v1639 = vpop.permute.xlu0 %1638
        %1640 = vset.pattern.permute.xlu0 0
        %1641 = vperm.xlu0 %1640, %v1542
        %v1642 = vpop.permute.xlu0 %1641
        %1643 = vset.pattern.permute.xlu0 0
        %1644 = vperm.xlu0 %1643, %v1543
        %v1645 = vpop.permute.xlu0 %1644
        %1646 = vset.pattern.permute.xlu0 0
        %1647 = vperm.xlu0 %1646, %v1544
        %v1648 = vpop.permute.xlu0 %1647
        %1649 = vset.pattern.permute.xlu0 0
        %1650 = vperm.xlu0 %1649, %v1545
        %v1651 = vpop.permute.xlu0 %1650
        %1652 = vset.pattern.permute.xlu0 0
        %1653 = vperm.xlu0 %1652, %v1546
        %v1654 = vpop.permute.xlu0 %1653
        %1655 = vset.pattern.permute.xlu0 0
        %1656 = vperm.xlu0 %1655, %v1547
        %v1657 = vpop.permute.xlu0 %1656
        %1658 = vset.pattern.permute.xlu0 0
        %1659 = vperm.xlu0 %1658, %v1548
        %v1660 = vpop.permute.xlu0 %1659
        %1661 = vset.pattern.permute.xlu0 0
        %1662 = vperm.xlu0 %1661, %v1549
        %v1663 = vpop.permute.xlu0 %1662
        %1664 = vset.pattern.permute.xlu0 0
        %1665 = vperm.xlu0 %1664, %v1550
        %v1666 = vpop.permute.xlu0 %1665
        %1667 = vset.pattern.permute.xlu0 0
        %1668 = vperm.xlu0 %1667, %v1551
        %v1669 = vpop.permute.xlu0 %1668
        %1670 = vset.pattern.permute.xlu0 0
        %1671 = vperm.xlu0 %1670, %v1552
        %v1672 = vpop.permute.xlu0 %1671
        %1673 = vset.pattern.permute.xlu0 0
        %1674 = vperm.xlu0 %1673, %v1553
        %v1675 = vpop.permute.xlu0 %1674
        %1676 = vset.pattern.permute.xlu0 0
        %1677 = vperm.xlu0 %1676, %v1554
        %v1678 = vpop.permute.xlu0 %1677
        %1679 = vset.pattern.permute.xlu0 0
        %1680 = vperm.xlu0 %1679, %v1555
        %v1681 = vpop.permute.xlu0 %1680
        %1682 = vset.pattern.permute.xlu0 0
        %1683 = vperm.xlu0 %1682, %v1556
        %v1684 = vpop.permute.xlu0 %1683
        %v1685 = vlaneseq
        %v1686 = vshrl.u32 %v1685, 7
        %v1687 = vsub.s32 %v1262, %v1686
        %v1688 = vrot.slane %v1591, %v1687
        %v1689 = vlaneseq
        %v1690 = vshrl.u32 %v1689, 7
        %v1691 = vsub.s32 %v1262, %v1690
        %v1692 = vrot.slane %v1594, %v1691
        %v1693 = vlaneseq
        %v1694 = vshrl.u32 %v1693, 7
        %v1695 = vsub.s32 %v1262, %v1694
        %v1696 = vrot.slane %v1597, %v1695
        %v1697 = vlaneseq
        %v1698 = vshrl.u32 %v1697, 7
        %v1699 = vsub.s32 %v1262, %v1698
        %v1700 = vrot.slane %v1600, %v1699
        %v1701 = vlaneseq
        %v1702 = vshrl.u32 %v1701, 7
        %v1703 = vsub.s32 %v1262, %v1702
        %v1704 = vrot.slane %v1603, %v1703
        %v1705 = vlaneseq
        %v1706 = vshrl.u32 %v1705, 7
        %v1707 = vsub.s32 %v1262, %v1706
        %v1708 = vrot.slane %v1606, %v1707
        %v1709 = vlaneseq
        %v1710 = vshrl.u32 %v1709, 7
        %v1711 = vsub.s32 %v1262, %v1710
        %v1712 = vrot.slane %v1609, %v1711
        %v1713 = vlaneseq
        %v1714 = vshrl.u32 %v1713, 7
        %v1715 = vsub.s32 %v1262, %v1714
        %v1716 = vrot.slane %v1612, %v1715
        %v1717 = vlaneseq
        %v1718 = vshrl.u32 %v1717, 7
        %v1719 = vsub.s32 %v1262, %v1718
        %v1720 = vrot.slane %v1615, %v1719
        %v1721 = vlaneseq
        %v1722 = vshrl.u32 %v1721, 7
        %v1723 = vsub.s32 %v1262, %v1722
        %v1724 = vrot.slane %v1618, %v1723
        %v1725 = vlaneseq
        %v1726 = vshrl.u32 %v1725, 7
        %v1727 = vsub.s32 %v1262, %v1726
        %v1728 = vrot.slane %v1621, %v1727
        %v1729 = vlaneseq
        %v1730 = vshrl.u32 %v1729, 7
        %v1731 = vsub.s32 %v1262, %v1730
        %v1732 = vrot.slane %v1624, %v1731
        %v1733 = vlaneseq
        %v1734 = vshrl.u32 %v1733, 7
        %v1735 = vsub.s32 %v1262, %v1734
        %v1736 = vrot.slane %v1627, %v1735
        %v1737 = vlaneseq
        %v1738 = vshrl.u32 %v1737, 7
        %v1739 = vsub.s32 %v1262, %v1738
        %v1740 = vrot.slane %v1630, %v1739
        %v1741 = vlaneseq
        %v1742 = vshrl.u32 %v1741, 7
        %v1743 = vsub.s32 %v1262, %v1742
        %v1744 = vrot.slane %v1633, %v1743
        %v1745 = vlaneseq
        %v1746 = vshrl.u32 %v1745, 7
        %v1747 = vsub.s32 %v1262, %v1746
        %v1748 = vrot.slane %v1636, %v1747
        %v1749 = vlaneseq
        %v1750 = vshrl.u32 %v1749, 7
        %v1751 = vsub.s32 %v1262, %v1750
        %v1752 = vrot.slane %v1639, %v1751
        %v1753 = vlaneseq
        %v1754 = vshrl.u32 %v1753, 7
        %v1755 = vsub.s32 %v1262, %v1754
        %v1756 = vrot.slane %v1642, %v1755
        %v1757 = vlaneseq
        %v1758 = vshrl.u32 %v1757, 7
        %v1759 = vsub.s32 %v1262, %v1758
        %v1760 = vrot.slane %v1645, %v1759
        %v1761 = vlaneseq
        %v1762 = vshrl.u32 %v1761, 7
        %v1763 = vsub.s32 %v1262, %v1762
        %v1764 = vrot.slane %v1648, %v1763
        %v1765 = vlaneseq
        %v1766 = vshrl.u32 %v1765, 7
        %v1767 = vsub.s32 %v1262, %v1766
        %v1768 = vrot.slane %v1651, %v1767
        %v1769 = vlaneseq
        %v1770 = vshrl.u32 %v1769, 7
        %v1771 = vsub.s32 %v1262, %v1770
        %v1772 = vrot.slane %v1654, %v1771
        %v1773 = vlaneseq
        %v1774 = vshrl.u32 %v1773, 7
        %v1775 = vsub.s32 %v1262, %v1774
        %v1776 = vrot.slane %v1657, %v1775
        %v1777 = vlaneseq
        %v1778 = vshrl.u32 %v1777, 7
        %v1779 = vsub.s32 %v1262, %v1778
        %v1780 = vrot.slane %v1660, %v1779
        %v1781 = vlaneseq
        %v1782 = vshrl.u32 %v1781, 7
        %v1783 = vsub.s32 %v1262, %v1782
        %v1784 = vrot.slane %v1663, %v1783
        %v1785 = vlaneseq
        %v1786 = vshrl.u32 %v1785, 7
        %v1787 = vsub.s32 %v1262, %v1786
        %v1788 = vrot.slane %v1666, %v1787
        %v1789 = vlaneseq
        %v1790 = vshrl.u32 %v1789, 7
        %v1791 = vsub.s32 %v1262, %v1790
        %v1792 = vrot.slane %v1669, %v1791
        %v1793 = vlaneseq
        %v1794 = vshrl.u32 %v1793, 7
        %v1795 = vsub.s32 %v1262, %v1794
        %v1796 = vrot.slane %v1672, %v1795
        %v1797 = vlaneseq
        %v1798 = vshrl.u32 %v1797, 7
        %v1799 = vsub.s32 %v1262, %v1798
        %v1800 = vrot.slane %v1675, %v1799
        %v1801 = vlaneseq
        %v1802 = vshrl.u32 %v1801, 7
        %v1803 = vsub.s32 %v1262, %v1802
        %v1804 = vrot.slane %v1678, %v1803
        %v1805 = vlaneseq
        %v1806 = vshrl.u32 %v1805, 7
        %v1807 = vsub.s32 %v1262, %v1806
        %v1808 = vrot.slane %v1681, %v1807
        %v1809 = vlaneseq
        %v1810 = vshrl.u32 %v1809, 7
        %v1811 = vsub.s32 %v1262, %v1810
        %v1812 = vrot.slane %v1684, %v1811
        %v1813 = vsel %vm475, %v1692, %v1688
        %v1814 = vsel %vm478, %v1696, %v1813
        %v1815 = vsel %vm481, %v1700, %v1814
        %v1816 = vsel %vm1394, %v1704, %v1815
        %v1817 = vsel %vm1396, %v1708, %v1816
        %v1818 = vsel %vm1398, %v1712, %v1817
        %v1819 = vsel %vm1400, %v1716, %v1818
        %v1820 = vsel %vm475, %v1724, %v1720
        %v1821 = vsel %vm478, %v1728, %v1820
        %v1822 = vsel %vm481, %v1732, %v1821
        %v1823 = vsel %vm1394, %v1736, %v1822
        %v1824 = vsel %vm1396, %v1740, %v1823
        %v1825 = vsel %vm1398, %v1744, %v1824
        %v1826 = vsel %vm1400, %v1748, %v1825
        %v1827 = vsel %vm475, %v1756, %v1752
        %v1828 = vsel %vm478, %v1760, %v1827
        %v1829 = vsel %vm481, %v1764, %v1828
        %v1830 = vsel %vm1394, %v1768, %v1829
        %v1831 = vsel %vm1396, %v1772, %v1830
        %v1832 = vsel %vm1398, %v1776, %v1831
        %v1833 = vsel %vm1400, %v1780, %v1832
        %v1834 = vsel %vm475, %v1788, %v1784
        %v1835 = vsel %vm478, %v1792, %v1834
        %v1836 = vsel %vm481, %v1796, %v1835
        %v1837 = vsel %vm1394, %v1800, %v1836
        %v1838 = vsel %vm1396, %v1804, %v1837
        %v1839 = vsel %vm1398, %v1808, %v1838
        %v1840 = vsel %vm1400, %v1812, %v1839
        %v1845 = vsel %vm1427, %v1819, -inf
        %1846 = vmax.xlane.f32.xlu0 %v1845
        %v1847 = vpop.xlane.xlu0 %1846
        %v1848 = vsel %vm1427, %v1826, -inf
        %1849 = vmax.xlane.f32.xlu0 %v1848
        %v1850 = vpop.xlane.xlu0 %1849
        %v1851 = vsel %vm1427, %v1833, -inf
        %1852 = vmax.xlane.f32.xlu0 %v1851
        %v1853 = vpop.xlane.xlu0 %1852
        %v1854 = vsel %vm1427, %v1840, -inf
        %1855 = vmax.xlane.f32.xlu0 %v1854
        %v1856 = vpop.xlane.xlu0 %1855
        %v1857 = vmax.f32 %v1847, %v1430
        %v1858 = vmax.f32 %v1850, %v1433
        %v1859 = vmax.f32 %v1853, %v1436
        %v1860 = vmax.f32 %v1856, %v1439
        %v1865 = vlaneseq
        %v1866 = vshrl.u32 %v1865, 7
        %v1867 = vsub.s32 0, %v1866
        %v1868 = vrot.slane %v1857, %v1867
        %v1869 = vlaneseq
        %v1870 = vshrl.u32 %v1869, 7
        %v1871 = vsub.s32 1, %v1870
        %v1872 = vrot.slane %v1857, %v1871
        %v1873 = vlaneseq
        %v1874 = vshrl.u32 %v1873, 7
        %v1875 = vsub.s32 2, %v1874
        %v1876 = vrot.slane %v1857, %v1875
        %v1877 = vlaneseq
        %v1878 = vshrl.u32 %v1877, 7
        %v1879 = vsub.s32 3, %v1878
        %v1880 = vrot.slane %v1857, %v1879
        %v1881 = vlaneseq
        %v1882 = vshrl.u32 %v1881, 7
        %v1883 = vsub.s32 4, %v1882
        %v1884 = vrot.slane %v1857, %v1883
        %v1885 = vlaneseq
        %v1886 = vshrl.u32 %v1885, 7
        %v1887 = vsub.s32 5, %v1886
        %v1888 = vrot.slane %v1857, %v1887
        %v1889 = vlaneseq
        %v1890 = vshrl.u32 %v1889, 7
        %v1891 = vsub.s32 6, %v1890
        %v1892 = vrot.slane %v1857, %v1891
        %v1893 = vlaneseq
        %v1894 = vshrl.u32 %v1893, 7
        %v1895 = vsub.s32 7, %v1894
        %v1896 = vrot.slane %v1857, %v1895
        %v1897 = vlaneseq
        %v1898 = vshrl.u32 %v1897, 7
        %v1899 = vsub.s32 0, %v1898
        %v1900 = vrot.slane %v1858, %v1899
        %v1901 = vlaneseq
        %v1902 = vshrl.u32 %v1901, 7
        %v1903 = vsub.s32 1, %v1902
        %v1904 = vrot.slane %v1858, %v1903
        %v1905 = vlaneseq
        %v1906 = vshrl.u32 %v1905, 7
        %v1907 = vsub.s32 2, %v1906
        %v1908 = vrot.slane %v1858, %v1907
        %v1909 = vlaneseq
        %v1910 = vshrl.u32 %v1909, 7
        %v1911 = vsub.s32 3, %v1910
        %v1912 = vrot.slane %v1858, %v1911
        %v1913 = vlaneseq
        %v1914 = vshrl.u32 %v1913, 7
        %v1915 = vsub.s32 4, %v1914
        %v1916 = vrot.slane %v1858, %v1915
        %v1917 = vlaneseq
        %v1918 = vshrl.u32 %v1917, 7
        %v1919 = vsub.s32 5, %v1918
        %v1920 = vrot.slane %v1858, %v1919
        %v1921 = vlaneseq
        %v1922 = vshrl.u32 %v1921, 7
        %v1923 = vsub.s32 6, %v1922
        %v1924 = vrot.slane %v1858, %v1923
        %v1925 = vlaneseq
        %v1926 = vshrl.u32 %v1925, 7
        %v1927 = vsub.s32 7, %v1926
        %v1928 = vrot.slane %v1858, %v1927
        %v1929 = vlaneseq
        %v1930 = vshrl.u32 %v1929, 7
        %v1931 = vsub.s32 0, %v1930
        %v1932 = vrot.slane %v1859, %v1931
        %v1933 = vlaneseq
        %v1934 = vshrl.u32 %v1933, 7
        %v1935 = vsub.s32 1, %v1934
        %v1936 = vrot.slane %v1859, %v1935
        %v1937 = vlaneseq
        %v1938 = vshrl.u32 %v1937, 7
        %v1939 = vsub.s32 2, %v1938
        %v1940 = vrot.slane %v1859, %v1939
        %v1941 = vlaneseq
        %v1942 = vshrl.u32 %v1941, 7
        %v1943 = vsub.s32 3, %v1942
        %v1944 = vrot.slane %v1859, %v1943
        %v1945 = vlaneseq
        %v1946 = vshrl.u32 %v1945, 7
        %v1947 = vsub.s32 4, %v1946
        %v1948 = vrot.slane %v1859, %v1947
        %v1949 = vlaneseq
        %v1950 = vshrl.u32 %v1949, 7
        %v1951 = vsub.s32 5, %v1950
        %v1952 = vrot.slane %v1859, %v1951
        %v1953 = vlaneseq
        %v1954 = vshrl.u32 %v1953, 7
        %v1955 = vsub.s32 6, %v1954
        %v1956 = vrot.slane %v1859, %v1955
        %v1957 = vlaneseq
        %v1958 = vshrl.u32 %v1957, 7
        %v1959 = vsub.s32 7, %v1958
        %v1960 = vrot.slane %v1859, %v1959
        %v1961 = vlaneseq
        %v1962 = vshrl.u32 %v1961, 7
        %v1963 = vsub.s32 0, %v1962
        %v1964 = vrot.slane %v1860, %v1963
        %v1965 = vlaneseq
        %v1966 = vshrl.u32 %v1965, 7
        %v1967 = vsub.s32 1, %v1966
        %v1968 = vrot.slane %v1860, %v1967
        %v1969 = vlaneseq
        %v1970 = vshrl.u32 %v1969, 7
        %v1971 = vsub.s32 2, %v1970
        %v1972 = vrot.slane %v1860, %v1971
        %v1973 = vlaneseq
        %v1974 = vshrl.u32 %v1973, 7
        %v1975 = vsub.s32 3, %v1974
        %v1976 = vrot.slane %v1860, %v1975
        %v1977 = vlaneseq
        %v1978 = vshrl.u32 %v1977, 7
        %v1979 = vsub.s32 4, %v1978
        %v1980 = vrot.slane %v1860, %v1979
        %v1981 = vlaneseq
        %v1982 = vshrl.u32 %v1981, 7
        %v1983 = vsub.s32 5, %v1982
        %v1984 = vrot.slane %v1860, %v1983
        %v1985 = vlaneseq
        %v1986 = vshrl.u32 %v1985, 7
        %v1987 = vsub.s32 6, %v1986
        %v1988 = vrot.slane %v1860, %v1987
        %v1989 = vlaneseq
        %v1990 = vshrl.u32 %v1989, 7
        %v1991 = vsub.s32 7, %v1990
        %v1992 = vrot.slane %v1860, %v1991
        %v2025 = vsub.f32 %v1525, %v1868
        %v2026 = vsub.f32 %v1526, %v1872
        %v2027 = vsub.f32 %v1527, %v1876
        %v2028 = vsub.f32 %v1528, %v1880
        %v2029 = vsub.f32 %v1529, %v1884
        %v2030 = vsub.f32 %v1530, %v1888
        %v2031 = vsub.f32 %v1531, %v1892
        %v2032 = vsub.f32 %v1532, %v1896
        %v2033 = vsub.f32 %v1533, %v1900
        %v2034 = vsub.f32 %v1534, %v1904
        %v2035 = vsub.f32 %v1535, %v1908
        %v2036 = vsub.f32 %v1536, %v1912
        %v2037 = vsub.f32 %v1537, %v1916
        %v2038 = vsub.f32 %v1538, %v1920
        %v2039 = vsub.f32 %v1539, %v1924
        %v2040 = vsub.f32 %v1540, %v1928
        %v2041 = vsub.f32 %v1541, %v1932
        %v2042 = vsub.f32 %v1542, %v1936
        %v2043 = vsub.f32 %v1543, %v1940
        %v2044 = vsub.f32 %v1544, %v1944
        %v2045 = vsub.f32 %v1545, %v1948
        %v2046 = vsub.f32 %v1546, %v1952
        %v2047 = vsub.f32 %v1547, %v1956
        %v2048 = vsub.f32 %v1548, %v1960
        %v2049 = vsub.f32 %v1549, %v1964
        %v2050 = vsub.f32 %v1550, %v1968
        %v2051 = vsub.f32 %v1551, %v1972
        %v2052 = vsub.f32 %v1552, %v1976
        %v2053 = vsub.f32 %v1553, %v1980
        %v2054 = vsub.f32 %v1554, %v1984
        %v2055 = vsub.f32 %v1555, %v1988
        %v2056 = vsub.f32 %v1556, %v1992
        %v2057 = vmul.f32 %v2025, 1.442695
        %v2058 = vpow.pop %v2057
        %v2059 = vmul.f32 %v2026, 1.442695
        %v2060 = vpow.pop %v2059
        %v2061 = vmul.f32 %v2027, 1.442695
        %v2062 = vpow.pop %v2061
        %v2063 = vmul.f32 %v2028, 1.442695
        %v2064 = vpow.pop %v2063
        %v2065 = vmul.f32 %v2029, 1.442695
        %v2066 = vpow.pop %v2065
        %v2067 = vmul.f32 %v2030, 1.442695
        %v2068 = vpow.pop %v2067
        %v2069 = vmul.f32 %v2031, 1.442695
        %v2070 = vpow.pop %v2069
        %v2071 = vmul.f32 %v2032, 1.442695
        %v2072 = vpow.pop %v2071
        %v2073 = vmul.f32 %v2033, 1.442695
        %v2074 = vpow.pop %v2073
        %v2075 = vmul.f32 %v2034, 1.442695
        %v2076 = vpow.pop %v2075
        %v2077 = vmul.f32 %v2035, 1.442695
        %v2078 = vpow.pop %v2077
        %v2079 = vmul.f32 %v2036, 1.442695
        %v2080 = vpow.pop %v2079
        %v2081 = vmul.f32 %v2037, 1.442695
        %v2082 = vpow.pop %v2081
        %v2083 = vmul.f32 %v2038, 1.442695
        %v2084 = vpow.pop %v2083
        %v2085 = vmul.f32 %v2039, 1.442695
        %v2086 = vpow.pop %v2085
        %v2087 = vmul.f32 %v2040, 1.442695
        %v2088 = vpow.pop %v2087
        %v2089 = vmul.f32 %v2041, 1.442695
        %v2090 = vpow.pop %v2089
        %v2091 = vmul.f32 %v2042, 1.442695
        %v2092 = vpow.pop %v2091
        %v2093 = vmul.f32 %v2043, 1.442695
        %v2094 = vpow.pop %v2093
        %v2095 = vmul.f32 %v2044, 1.442695
        %v2096 = vpow.pop %v2095
        %v2097 = vmul.f32 %v2045, 1.442695
        %v2098 = vpow.pop %v2097
        %v2099 = vmul.f32 %v2046, 1.442695
        %v2100 = vpow.pop %v2099
        %v2101 = vmul.f32 %v2047, 1.442695
        %v2102 = vpow.pop %v2101
        %v2103 = vmul.f32 %v2048, 1.442695
        %v2104 = vpow.pop %v2103
        %v2105 = vmul.f32 %v2049, 1.442695
        %v2106 = vpow.pop %v2105
        %v2107 = vmul.f32 %v2050, 1.442695
        %v2108 = vpow.pop %v2107
        %v2109 = vmul.f32 %v2051, 1.442695
        %v2110 = vpow.pop %v2109
        %v2111 = vmul.f32 %v2052, 1.442695
        %v2112 = vpow.pop %v2111
        %v2113 = vmul.f32 %v2053, 1.442695
        %v2114 = vpow.pop %v2113
        %v2115 = vmul.f32 %v2054, 1.442695
        %v2116 = vpow.pop %v2115
        %v2117 = vmul.f32 %v2055, 1.442695
        %v2118 = vpow.pop %v2117
        %v2119 = vmul.f32 %v2056, 1.442695
        %v2120 = vpow.pop %v2119
        %v2121 = vsub.f32 %v1101, %v1868
        %v2122 = vsub.f32 %v1102, %v1872
        %v2123 = vsub.f32 %v1103, %v1876
        %v2124 = vsub.f32 %v1104, %v1880
        %v2125 = vsub.f32 %v1105, %v1884
        %v2126 = vsub.f32 %v1106, %v1888
        %v2127 = vsub.f32 %v1107, %v1892
        %v2128 = vsub.f32 %v1108, %v1896
        %v2129 = vsub.f32 %v1109, %v1900
        %v2130 = vsub.f32 %v1110, %v1904
        %v2131 = vsub.f32 %v1111, %v1908
        %v2132 = vsub.f32 %v1112, %v1912
        %v2133 = vsub.f32 %v1113, %v1916
        %v2134 = vsub.f32 %v1114, %v1920
        %v2135 = vsub.f32 %v1115, %v1924
        %v2136 = vsub.f32 %v1116, %v1928
        %v2137 = vsub.f32 %v1117, %v1932
        %v2138 = vsub.f32 %v1118, %v1936
        %v2139 = vsub.f32 %v1119, %v1940
        %v2140 = vsub.f32 %v1120, %v1944
        %v2141 = vsub.f32 %v1121, %v1948
        %v2142 = vsub.f32 %v1122, %v1952
        %v2143 = vsub.f32 %v1123, %v1956
        %v2144 = vsub.f32 %v1124, %v1960
        %v2145 = vsub.f32 %v1125, %v1964
        %v2146 = vsub.f32 %v1126, %v1968
        %v2147 = vsub.f32 %v1127, %v1972
        %v2148 = vsub.f32 %v1128, %v1976
        %v2149 = vsub.f32 %v1129, %v1980
        %v2150 = vsub.f32 %v1130, %v1984
        %v2151 = vsub.f32 %v1131, %v1988
        %v2152 = vsub.f32 %v1132, %v1992
        %v2153 = vmul.f32 %v2121, 1.442695
        %v2154 = vpow.pop %v2153
        %v2155 = vmul.f32 %v2122, 1.442695
        %v2156 = vpow.pop %v2155
        %v2157 = vmul.f32 %v2123, 1.442695
        %v2158 = vpow.pop %v2157
        %v2159 = vmul.f32 %v2124, 1.442695
        %v2160 = vpow.pop %v2159
        %v2161 = vmul.f32 %v2125, 1.442695
        %v2162 = vpow.pop %v2161
        %v2163 = vmul.f32 %v2126, 1.442695
        %v2164 = vpow.pop %v2163
        %v2165 = vmul.f32 %v2127, 1.442695
        %v2166 = vpow.pop %v2165
        %v2167 = vmul.f32 %v2128, 1.442695
        %v2168 = vpow.pop %v2167
        %v2169 = vmul.f32 %v2129, 1.442695
        %v2170 = vpow.pop %v2169
        %v2171 = vmul.f32 %v2130, 1.442695
        %v2172 = vpow.pop %v2171
        %v2173 = vmul.f32 %v2131, 1.442695
        %v2174 = vpow.pop %v2173
        %v2175 = vmul.f32 %v2132, 1.442695
        %v2176 = vpow.pop %v2175
        %v2177 = vmul.f32 %v2133, 1.442695
        %v2178 = vpow.pop %v2177
        %v2179 = vmul.f32 %v2134, 1.442695
        %v2180 = vpow.pop %v2179
        %v2181 = vmul.f32 %v2135, 1.442695
        %v2182 = vpow.pop %v2181
        %v2183 = vmul.f32 %v2136, 1.442695
        %v2184 = vpow.pop %v2183
        %v2185 = vmul.f32 %v2137, 1.442695
        %v2186 = vpow.pop %v2185
        %v2187 = vmul.f32 %v2138, 1.442695
        %v2188 = vpow.pop %v2187
        %v2189 = vmul.f32 %v2139, 1.442695
        %v2190 = vpow.pop %v2189
        %v2191 = vmul.f32 %v2140, 1.442695
        %v2192 = vpow.pop %v2191
        %v2193 = vmul.f32 %v2141, 1.442695
        %v2194 = vpow.pop %v2193
        %v2195 = vmul.f32 %v2142, 1.442695
        %v2196 = vpow.pop %v2195
        %v2197 = vmul.f32 %v2143, 1.442695
        %v2198 = vpow.pop %v2197
        %v2199 = vmul.f32 %v2144, 1.442695
        %v2200 = vpow.pop %v2199
        %v2201 = vmul.f32 %v2145, 1.442695
        %v2202 = vpow.pop %v2201
        %v2203 = vmul.f32 %v2146, 1.442695
        %v2204 = vpow.pop %v2203
        %v2205 = vmul.f32 %v2147, 1.442695
        %v2206 = vpow.pop %v2205
        %v2207 = vmul.f32 %v2148, 1.442695
        %v2208 = vpow.pop %v2207
        %v2209 = vmul.f32 %v2149, 1.442695
        %v2210 = vpow.pop %v2209
        %v2211 = vmul.f32 %v2150, 1.442695
        %v2212 = vpow.pop %v2211
        %v2213 = vmul.f32 %v2151, 1.442695
        %v2214 = vpow.pop %v2213
        %v2215 = vmul.f32 %v2152, 1.442695
        %v2216 = vpow.pop %v2215
        %2249 = vset.pattern.permute.xlu0 0
        %2250 = vperm.xlu0 %2249, %v2058
        %v2251 = vpop.permute.xlu0 %2250
        %2252 = vset.pattern.permute.xlu0 0
        %2253 = vperm.xlu0 %2252, %v2060
        %v2254 = vpop.permute.xlu0 %2253
        %2255 = vset.pattern.permute.xlu0 0
        %2256 = vperm.xlu0 %2255, %v2062
        %v2257 = vpop.permute.xlu0 %2256
        %2258 = vset.pattern.permute.xlu0 0
        %2259 = vperm.xlu0 %2258, %v2064
        %v2260 = vpop.permute.xlu0 %2259
        %2261 = vset.pattern.permute.xlu0 0
        %2262 = vperm.xlu0 %2261, %v2066
        %v2263 = vpop.permute.xlu0 %2262
        %2264 = vset.pattern.permute.xlu0 0
        %2265 = vperm.xlu0 %2264, %v2068
        %v2266 = vpop.permute.xlu0 %2265
        %2267 = vset.pattern.permute.xlu0 0
        %2268 = vperm.xlu0 %2267, %v2070
        %v2269 = vpop.permute.xlu0 %2268
        %2270 = vset.pattern.permute.xlu0 0
        %2271 = vperm.xlu0 %2270, %v2072
        %v2272 = vpop.permute.xlu0 %2271
        %2273 = vset.pattern.permute.xlu0 0
        %2274 = vperm.xlu0 %2273, %v2074
        %v2275 = vpop.permute.xlu0 %2274
        %2276 = vset.pattern.permute.xlu0 0
        %2277 = vperm.xlu0 %2276, %v2076
        %v2278 = vpop.permute.xlu0 %2277
        %2279 = vset.pattern.permute.xlu0 0
        %2280 = vperm.xlu0 %2279, %v2078
        %v2281 = vpop.permute.xlu0 %2280
        %2282 = vset.pattern.permute.xlu0 0
        %2283 = vperm.xlu0 %2282, %v2080
        %v2284 = vpop.permute.xlu0 %2283
        %2285 = vset.pattern.permute.xlu0 0
        %2286 = vperm.xlu0 %2285, %v2082
        %v2287 = vpop.permute.xlu0 %2286
        %2288 = vset.pattern.permute.xlu0 0
        %2289 = vperm.xlu0 %2288, %v2084
        %v2290 = vpop.permute.xlu0 %2289
        %2291 = vset.pattern.permute.xlu0 0
        %2292 = vperm.xlu0 %2291, %v2086
        %v2293 = vpop.permute.xlu0 %2292
        %2294 = vset.pattern.permute.xlu0 0
        %2295 = vperm.xlu0 %2294, %v2088
        %v2296 = vpop.permute.xlu0 %2295
        %2297 = vset.pattern.permute.xlu0 0
        %2298 = vperm.xlu0 %2297, %v2090
        %v2299 = vpop.permute.xlu0 %2298
        %2300 = vset.pattern.permute.xlu0 0
        %2301 = vperm.xlu0 %2300, %v2092
        %v2302 = vpop.permute.xlu0 %2301
        %2303 = vset.pattern.permute.xlu0 0
        %2304 = vperm.xlu0 %2303, %v2094
        %v2305 = vpop.permute.xlu0 %2304
        %2306 = vset.pattern.permute.xlu0 0
        %2307 = vperm.xlu0 %2306, %v2096
        %v2308 = vpop.permute.xlu0 %2307
        %2309 = vset.pattern.permute.xlu0 0
        %2310 = vperm.xlu0 %2309, %v2098
        %v2311 = vpop.permute.xlu0 %2310
        %2312 = vset.pattern.permute.xlu0 0
        %2313 = vperm.xlu0 %2312, %v2100
        %v2314 = vpop.permute.xlu0 %2313
        %2315 = vset.pattern.permute.xlu0 0
        %2316 = vperm.xlu0 %2315, %v2102
        %v2317 = vpop.permute.xlu0 %2316
        %2318 = vset.pattern.permute.xlu0 0
        %2319 = vperm.xlu0 %2318, %v2104
        %v2320 = vpop.permute.xlu0 %2319
        %2321 = vset.pattern.permute.xlu0 0
        %2322 = vperm.xlu0 %2321, %v2106
        %v2323 = vpop.permute.xlu0 %2322
        %2324 = vset.pattern.permute.xlu0 0
        %2325 = vperm.xlu0 %2324, %v2108
        %v2326 = vpop.permute.xlu0 %2325
        %2327 = vset.pattern.permute.xlu0 0
        %2328 = vperm.xlu0 %2327, %v2110
        %v2329 = vpop.permute.xlu0 %2328
        %2330 = vset.pattern.permute.xlu0 0
        %2331 = vperm.xlu0 %2330, %v2112
        %v2332 = vpop.permute.xlu0 %2331
        %2333 = vset.pattern.permute.xlu0 0
        %2334 = vperm.xlu0 %2333, %v2114
        %v2335 = vpop.permute.xlu0 %2334
        %2336 = vset.pattern.permute.xlu0 0
        %2337 = vperm.xlu0 %2336, %v2116
        %v2338 = vpop.permute.xlu0 %2337
        %2339 = vset.pattern.permute.xlu0 0
        %2340 = vperm.xlu0 %2339, %v2118
        %v2341 = vpop.permute.xlu0 %2340
        %2342 = vset.pattern.permute.xlu0 0
        %2343 = vperm.xlu0 %2342, %v2120
        %v2344 = vpop.permute.xlu0 %2343
        %v2345 = vlaneseq
        %v2346 = vshrl.u32 %v2345, 7
        %v2347 = vsub.s32 %v1262, %v2346
        %v2348 = vrot.slane %v2251, %v2347
        %v2349 = vlaneseq
        %v2350 = vshrl.u32 %v2349, 7
        %v2351 = vsub.s32 %v1262, %v2350
        %v2352 = vrot.slane %v2254, %v2351
        %v2353 = vlaneseq
        %v2354 = vshrl.u32 %v2353, 7
        %v2355 = vsub.s32 %v1262, %v2354
        %v2356 = vrot.slane %v2257, %v2355
        %v2357 = vlaneseq
        %v2358 = vshrl.u32 %v2357, 7
        %v2359 = vsub.s32 %v1262, %v2358
        %v2360 = vrot.slane %v2260, %v2359
        %v2361 = vlaneseq
        %v2362 = vshrl.u32 %v2361, 7
        %v2363 = vsub.s32 %v1262, %v2362
        %v2364 = vrot.slane %v2263, %v2363
        %v2365 = vlaneseq
        %v2366 = vshrl.u32 %v2365, 7
        %v2367 = vsub.s32 %v1262, %v2366
        %v2368 = vrot.slane %v2266, %v2367
        %v2369 = vlaneseq
        %v2370 = vshrl.u32 %v2369, 7
        %v2371 = vsub.s32 %v1262, %v2370
        %v2372 = vrot.slane %v2269, %v2371
        %v2373 = vlaneseq
        %v2374 = vshrl.u32 %v2373, 7
        %v2375 = vsub.s32 %v1262, %v2374
        %v2376 = vrot.slane %v2272, %v2375
        %v2377 = vlaneseq
        %v2378 = vshrl.u32 %v2377, 7
        %v2379 = vsub.s32 %v1262, %v2378
        %v2380 = vrot.slane %v2275, %v2379
        %v2381 = vlaneseq
        %v2382 = vshrl.u32 %v2381, 7
        %v2383 = vsub.s32 %v1262, %v2382
        %v2384 = vrot.slane %v2278, %v2383
        %v2385 = vlaneseq
        %v2386 = vshrl.u32 %v2385, 7
        %v2387 = vsub.s32 %v1262, %v2386
        %v2388 = vrot.slane %v2281, %v2387
        %v2389 = vlaneseq
        %v2390 = vshrl.u32 %v2389, 7
        %v2391 = vsub.s32 %v1262, %v2390
        %v2392 = vrot.slane %v2284, %v2391
        %v2393 = vlaneseq
        %v2394 = vshrl.u32 %v2393, 7
        %v2395 = vsub.s32 %v1262, %v2394
        %v2396 = vrot.slane %v2287, %v2395
        %v2397 = vlaneseq
        %v2398 = vshrl.u32 %v2397, 7
        %v2399 = vsub.s32 %v1262, %v2398
        %v2400 = vrot.slane %v2290, %v2399
        %v2401 = vlaneseq
        %v2402 = vshrl.u32 %v2401, 7
        %v2403 = vsub.s32 %v1262, %v2402
        %v2404 = vrot.slane %v2293, %v2403
        %v2405 = vlaneseq
        %v2406 = vshrl.u32 %v2405, 7
        %v2407 = vsub.s32 %v1262, %v2406
        %v2408 = vrot.slane %v2296, %v2407
        %v2409 = vlaneseq
        %v2410 = vshrl.u32 %v2409, 7
        %v2411 = vsub.s32 %v1262, %v2410
        %v2412 = vrot.slane %v2299, %v2411
        %v2413 = vlaneseq
        %v2414 = vshrl.u32 %v2413, 7
        %v2415 = vsub.s32 %v1262, %v2414
        %v2416 = vrot.slane %v2302, %v2415
        %v2417 = vlaneseq
        %v2418 = vshrl.u32 %v2417, 7
        %v2419 = vsub.s32 %v1262, %v2418
        %v2420 = vrot.slane %v2305, %v2419
        %v2421 = vlaneseq
        %v2422 = vshrl.u32 %v2421, 7
        %v2423 = vsub.s32 %v1262, %v2422
        %v2424 = vrot.slane %v2308, %v2423
        %v2425 = vlaneseq
        %v2426 = vshrl.u32 %v2425, 7
        %v2427 = vsub.s32 %v1262, %v2426
        %v2428 = vrot.slane %v2311, %v2427
        %v2429 = vlaneseq
        %v2430 = vshrl.u32 %v2429, 7
        %v2431 = vsub.s32 %v1262, %v2430
        %v2432 = vrot.slane %v2314, %v2431
        %v2433 = vlaneseq
        %v2434 = vshrl.u32 %v2433, 7
        %v2435 = vsub.s32 %v1262, %v2434
        %v2436 = vrot.slane %v2317, %v2435
        %v2437 = vlaneseq
        %v2438 = vshrl.u32 %v2437, 7
        %v2439 = vsub.s32 %v1262, %v2438
        %v2440 = vrot.slane %v2320, %v2439
        %v2441 = vlaneseq
        %v2442 = vshrl.u32 %v2441, 7
        %v2443 = vsub.s32 %v1262, %v2442
        %v2444 = vrot.slane %v2323, %v2443
        %v2445 = vlaneseq
        %v2446 = vshrl.u32 %v2445, 7
        %v2447 = vsub.s32 %v1262, %v2446
        %v2448 = vrot.slane %v2326, %v2447
        %v2449 = vlaneseq
        %v2450 = vshrl.u32 %v2449, 7
        %v2451 = vsub.s32 %v1262, %v2450
        %v2452 = vrot.slane %v2329, %v2451
        %v2453 = vlaneseq
        %v2454 = vshrl.u32 %v2453, 7
        %v2455 = vsub.s32 %v1262, %v2454
        %v2456 = vrot.slane %v2332, %v2455
        %v2457 = vlaneseq
        %v2458 = vshrl.u32 %v2457, 7
        %v2459 = vsub.s32 %v1262, %v2458
        %v2460 = vrot.slane %v2335, %v2459
        %v2461 = vlaneseq
        %v2462 = vshrl.u32 %v2461, 7
        %v2463 = vsub.s32 %v1262, %v2462
        %v2464 = vrot.slane %v2338, %v2463
        %v2465 = vlaneseq
        %v2466 = vshrl.u32 %v2465, 7
        %v2467 = vsub.s32 %v1262, %v2466
        %v2468 = vrot.slane %v2341, %v2467
        %v2469 = vlaneseq
        %v2470 = vshrl.u32 %v2469, 7
        %v2471 = vsub.s32 %v1262, %v2470
        %v2472 = vrot.slane %v2344, %v2471
        %v2473 = vsel %vm475, %v2352, %v2348
        %v2474 = vsel %vm478, %v2356, %v2473
        %v2475 = vsel %vm481, %v2360, %v2474
        %v2476 = vsel %vm1394, %v2364, %v2475
        %v2477 = vsel %vm1396, %v2368, %v2476
        %v2478 = vsel %vm1398, %v2372, %v2477
        %v2479 = vsel %vm1400, %v2376, %v2478
        %v2480 = vsel %vm475, %v2384, %v2380
        %v2481 = vsel %vm478, %v2388, %v2480
        %v2482 = vsel %vm481, %v2392, %v2481
        %v2483 = vsel %vm1394, %v2396, %v2482
        %v2484 = vsel %vm1396, %v2400, %v2483
        %v2485 = vsel %vm1398, %v2404, %v2484
        %v2486 = vsel %vm1400, %v2408, %v2485
        %v2487 = vsel %vm475, %v2416, %v2412
        %v2488 = vsel %vm478, %v2420, %v2487
        %v2489 = vsel %vm481, %v2424, %v2488
        %v2490 = vsel %vm1394, %v2428, %v2489
        %v2491 = vsel %vm1396, %v2432, %v2490
        %v2492 = vsel %vm1398, %v2436, %v2491
        %v2493 = vsel %vm1400, %v2440, %v2492
        %v2494 = vsel %vm475, %v2448, %v2444
        %v2495 = vsel %vm478, %v2452, %v2494
        %v2496 = vsel %vm481, %v2456, %v2495
        %v2497 = vsel %vm1394, %v2460, %v2496
        %v2498 = vsel %vm1396, %v2464, %v2497
        %v2499 = vsel %vm1398, %v2468, %v2498
        %v2500 = vsel %vm1400, %v2472, %v2499
        %v2505 = vsel %vm1427, %v2479, 0.0
        %2506 = vadd.xlane.f32.xlu0 %v2505
        %v2507 = vpop.xlane.xlu0 %2506
        %v2508 = vsel %vm1427, %v2486, 0.0
        %2509 = vadd.xlane.f32.xlu0 %v2508
        %v2510 = vpop.xlane.xlu0 %2509
        %v2511 = vsel %vm1427, %v2493, 0.0
        %2512 = vadd.xlane.f32.xlu0 %v2511
        %v2513 = vpop.xlane.xlu0 %2512
        %v2514 = vsel %vm1427, %v2500, 0.0
        %2515 = vadd.xlane.f32.xlu0 %v2514
        %v2516 = vpop.xlane.xlu0 %2515
        %2549 = vset.pattern.permute.xlu0 0
        %2550 = vperm.xlu0 %2549, %v2154
        %v2551 = vpop.permute.xlu0 %2550
        %2552 = vset.pattern.permute.xlu0 0
        %2553 = vperm.xlu0 %2552, %v2156
        %v2554 = vpop.permute.xlu0 %2553
        %2555 = vset.pattern.permute.xlu0 0
        %2556 = vperm.xlu0 %2555, %v2158
        %v2557 = vpop.permute.xlu0 %2556
        %2558 = vset.pattern.permute.xlu0 0
        %2559 = vperm.xlu0 %2558, %v2160
        %v2560 = vpop.permute.xlu0 %2559
        %2561 = vset.pattern.permute.xlu0 0
        %2562 = vperm.xlu0 %2561, %v2162
        %v2563 = vpop.permute.xlu0 %2562
        %2564 = vset.pattern.permute.xlu0 0
        %2565 = vperm.xlu0 %2564, %v2164
        %v2566 = vpop.permute.xlu0 %2565
        %2567 = vset.pattern.permute.xlu0 0
        %2568 = vperm.xlu0 %2567, %v2166
        %v2569 = vpop.permute.xlu0 %2568
        %2570 = vset.pattern.permute.xlu0 0
        %2571 = vperm.xlu0 %2570, %v2168
        %v2572 = vpop.permute.xlu0 %2571
        %2573 = vset.pattern.permute.xlu0 0
        %2574 = vperm.xlu0 %2573, %v2170
        %v2575 = vpop.permute.xlu0 %2574
        %2576 = vset.pattern.permute.xlu0 0
        %2577 = vperm.xlu0 %2576, %v2172
        %v2578 = vpop.permute.xlu0 %2577
        %2579 = vset.pattern.permute.xlu0 0
        %2580 = vperm.xlu0 %2579, %v2174
        %v2581 = vpop.permute.xlu0 %2580
        %2582 = vset.pattern.permute.xlu0 0
        %2583 = vperm.xlu0 %2582, %v2176
        %v2584 = vpop.permute.xlu0 %2583
        %2585 = vset.pattern.permute.xlu0 0
        %2586 = vperm.xlu0 %2585, %v2178
        %v2587 = vpop.permute.xlu0 %2586
        %2588 = vset.pattern.permute.xlu0 0
        %2589 = vperm.xlu0 %2588, %v2180
        %v2590 = vpop.permute.xlu0 %2589
        %2591 = vset.pattern.permute.xlu0 0
        %2592 = vperm.xlu0 %2591, %v2182
        %v2593 = vpop.permute.xlu0 %2592
        %2594 = vset.pattern.permute.xlu0 0
        %2595 = vperm.xlu0 %2594, %v2184
        %v2596 = vpop.permute.xlu0 %2595
        %2597 = vset.pattern.permute.xlu0 0
        %2598 = vperm.xlu0 %2597, %v2186
        %v2599 = vpop.permute.xlu0 %2598
        %2600 = vset.pattern.permute.xlu0 0
        %2601 = vperm.xlu0 %2600, %v2188
        %v2602 = vpop.permute.xlu0 %2601
        %2603 = vset.pattern.permute.xlu0 0
        %2604 = vperm.xlu0 %2603, %v2190
        %v2605 = vpop.permute.xlu0 %2604
        %2606 = vset.pattern.permute.xlu0 0
        %2607 = vperm.xlu0 %2606, %v2192
        %v2608 = vpop.permute.xlu0 %2607
        %2609 = vset.pattern.permute.xlu0 0
        %2610 = vperm.xlu0 %2609, %v2194
        %v2611 = vpop.permute.xlu0 %2610
        %2612 = vset.pattern.permute.xlu0 0
        %2613 = vperm.xlu0 %2612, %v2196
        %v2614 = vpop.permute.xlu0 %2613
        %2615 = vset.pattern.permute.xlu0 0
        %2616 = vperm.xlu0 %2615, %v2198
        %v2617 = vpop.permute.xlu0 %2616
        %2618 = vset.pattern.permute.xlu0 0
        %2619 = vperm.xlu0 %2618, %v2200
        %v2620 = vpop.permute.xlu0 %2619
        %2621 = vset.pattern.permute.xlu0 0
        %2622 = vperm.xlu0 %2621, %v2202
        %v2623 = vpop.permute.xlu0 %2622
        %2624 = vset.pattern.permute.xlu0 0
        %2625 = vperm.xlu0 %2624, %v2204
        %v2626 = vpop.permute.xlu0 %2625
        %2627 = vset.pattern.permute.xlu0 0
        %2628 = vperm.xlu0 %2627, %v2206
        %v2629 = vpop.permute.xlu0 %2628
        %2630 = vset.pattern.permute.xlu0 0
        %2631 = vperm.xlu0 %2630, %v2208
        %v2632 = vpop.permute.xlu0 %2631
        %2633 = vset.pattern.permute.xlu0 0
        %2634 = vperm.xlu0 %2633, %v2210
        %v2635 = vpop.permute.xlu0 %2634
        %2636 = vset.pattern.permute.xlu0 0
        %2637 = vperm.xlu0 %2636, %v2212
        %v2638 = vpop.permute.xlu0 %2637
        %2639 = vset.pattern.permute.xlu0 0
        %2640 = vperm.xlu0 %2639, %v2214
        %v2641 = vpop.permute.xlu0 %2640
        %2642 = vset.pattern.permute.xlu0 0
        %2643 = vperm.xlu0 %2642, %v2216
        %v2644 = vpop.permute.xlu0 %2643
        %v2645 = vlaneseq
        %v2646 = vshrl.u32 %v2645, 7
        %v2647 = vsub.s32 %v1262, %v2646
        %v2648 = vrot.slane %v2551, %v2647
        %v2649 = vlaneseq
        %v2650 = vshrl.u32 %v2649, 7
        %v2651 = vsub.s32 %v1262, %v2650
        %v2652 = vrot.slane %v2554, %v2651
        %v2653 = vlaneseq
        %v2654 = vshrl.u32 %v2653, 7
        %v2655 = vsub.s32 %v1262, %v2654
        %v2656 = vrot.slane %v2557, %v2655
        %v2657 = vlaneseq
        %v2658 = vshrl.u32 %v2657, 7
        %v2659 = vsub.s32 %v1262, %v2658
        %v2660 = vrot.slane %v2560, %v2659
        %v2661 = vlaneseq
        %v2662 = vshrl.u32 %v2661, 7
        %v2663 = vsub.s32 %v1262, %v2662
        %v2664 = vrot.slane %v2563, %v2663
        %v2665 = vlaneseq
        %v2666 = vshrl.u32 %v2665, 7
        %v2667 = vsub.s32 %v1262, %v2666
        %v2668 = vrot.slane %v2566, %v2667
        %v2669 = vlaneseq
        %v2670 = vshrl.u32 %v2669, 7
        %v2671 = vsub.s32 %v1262, %v2670
        %v2672 = vrot.slane %v2569, %v2671
        %v2673 = vlaneseq
        %v2674 = vshrl.u32 %v2673, 7
        %v2675 = vsub.s32 %v1262, %v2674
        %v2676 = vrot.slane %v2572, %v2675
        %v2677 = vlaneseq
        %v2678 = vshrl.u32 %v2677, 7
        %v2679 = vsub.s32 %v1262, %v2678
        %v2680 = vrot.slane %v2575, %v2679
        %v2681 = vlaneseq
        %v2682 = vshrl.u32 %v2681, 7
        %v2683 = vsub.s32 %v1262, %v2682
        %v2684 = vrot.slane %v2578, %v2683
        %v2685 = vlaneseq
        %v2686 = vshrl.u32 %v2685, 7
        %v2687 = vsub.s32 %v1262, %v2686
        %v2688 = vrot.slane %v2581, %v2687
        %v2689 = vlaneseq
        %v2690 = vshrl.u32 %v2689, 7
        %v2691 = vsub.s32 %v1262, %v2690
        %v2692 = vrot.slane %v2584, %v2691
        %v2693 = vlaneseq
        %v2694 = vshrl.u32 %v2693, 7
        %v2695 = vsub.s32 %v1262, %v2694
        %v2696 = vrot.slane %v2587, %v2695
        %v2697 = vlaneseq
        %v2698 = vshrl.u32 %v2697, 7
        %v2699 = vsub.s32 %v1262, %v2698
        %v2700 = vrot.slane %v2590, %v2699
        %v2701 = vlaneseq
        %v2702 = vshrl.u32 %v2701, 7
        %v2703 = vsub.s32 %v1262, %v2702
        %v2704 = vrot.slane %v2593, %v2703
        %v2705 = vlaneseq
        %v2706 = vshrl.u32 %v2705, 7
        %v2707 = vsub.s32 %v1262, %v2706
        %v2708 = vrot.slane %v2596, %v2707
        %v2709 = vlaneseq
        %v2710 = vshrl.u32 %v2709, 7
        %v2711 = vsub.s32 %v1262, %v2710
        %v2712 = vrot.slane %v2599, %v2711
        %v2713 = vlaneseq
        %v2714 = vshrl.u32 %v2713, 7
        %v2715 = vsub.s32 %v1262, %v2714
        %v2716 = vrot.slane %v2602, %v2715
        %v2717 = vlaneseq
        %v2718 = vshrl.u32 %v2717, 7
        %v2719 = vsub.s32 %v1262, %v2718
        %v2720 = vrot.slane %v2605, %v2719
        %v2721 = vlaneseq
        %v2722 = vshrl.u32 %v2721, 7
        %v2723 = vsub.s32 %v1262, %v2722
        %v2724 = vrot.slane %v2608, %v2723
        %v2725 = vlaneseq
        %v2726 = vshrl.u32 %v2725, 7
        %v2727 = vsub.s32 %v1262, %v2726
        %v2728 = vrot.slane %v2611, %v2727
        %v2729 = vlaneseq
        %v2730 = vshrl.u32 %v2729, 7
        %v2731 = vsub.s32 %v1262, %v2730
        %v2732 = vrot.slane %v2614, %v2731
        %v2733 = vlaneseq
        %v2734 = vshrl.u32 %v2733, 7
        %v2735 = vsub.s32 %v1262, %v2734
        %v2736 = vrot.slane %v2617, %v2735
        %v2737 = vlaneseq
        %v2738 = vshrl.u32 %v2737, 7
        %v2739 = vsub.s32 %v1262, %v2738
        %v2740 = vrot.slane %v2620, %v2739
        %v2741 = vlaneseq
        %v2742 = vshrl.u32 %v2741, 7
        %v2743 = vsub.s32 %v1262, %v2742
        %v2744 = vrot.slane %v2623, %v2743
        %v2745 = vlaneseq
        %v2746 = vshrl.u32 %v2745, 7
        %v2747 = vsub.s32 %v1262, %v2746
        %v2748 = vrot.slane %v2626, %v2747
        %v2749 = vlaneseq
        %v2750 = vshrl.u32 %v2749, 7
        %v2751 = vsub.s32 %v1262, %v2750
        %v2752 = vrot.slane %v2629, %v2751
        %v2753 = vlaneseq
        %v2754 = vshrl.u32 %v2753, 7
        %v2755 = vsub.s32 %v1262, %v2754
        %v2756 = vrot.slane %v2632, %v2755
        %v2757 = vlaneseq
        %v2758 = vshrl.u32 %v2757, 7
        %v2759 = vsub.s32 %v1262, %v2758
        %v2760 = vrot.slane %v2635, %v2759
        %v2761 = vlaneseq
        %v2762 = vshrl.u32 %v2761, 7
        %v2763 = vsub.s32 %v1262, %v2762
        %v2764 = vrot.slane %v2638, %v2763
        %v2765 = vlaneseq
        %v2766 = vshrl.u32 %v2765, 7
        %v2767 = vsub.s32 %v1262, %v2766
        %v2768 = vrot.slane %v2641, %v2767
        %v2769 = vlaneseq
        %v2770 = vshrl.u32 %v2769, 7
        %v2771 = vsub.s32 %v1262, %v2770
        %v2772 = vrot.slane %v2644, %v2771
        %v2773 = vsel %vm475, %v2652, %v2648
        %v2774 = vsel %vm478, %v2656, %v2773
        %v2775 = vsel %vm481, %v2660, %v2774
        %v2776 = vsel %vm1394, %v2664, %v2775
        %v2777 = vsel %vm1396, %v2668, %v2776
        %v2778 = vsel %vm1398, %v2672, %v2777
        %v2779 = vsel %vm1400, %v2676, %v2778
        %v2780 = vsel %vm475, %v2684, %v2680
        %v2781 = vsel %vm478, %v2688, %v2780
        %v2782 = vsel %vm481, %v2692, %v2781
        %v2783 = vsel %vm1394, %v2696, %v2782
        %v2784 = vsel %vm1396, %v2700, %v2783
        %v2785 = vsel %vm1398, %v2704, %v2784
        %v2786 = vsel %vm1400, %v2708, %v2785
        %v2787 = vsel %vm475, %v2716, %v2712
        %v2788 = vsel %vm478, %v2720, %v2787
        %v2789 = vsel %vm481, %v2724, %v2788
        %v2790 = vsel %vm1394, %v2728, %v2789
        %v2791 = vsel %vm1396, %v2732, %v2790
        %v2792 = vsel %vm1398, %v2736, %v2791
        %v2793 = vsel %vm1400, %v2740, %v2792
        %v2794 = vsel %vm475, %v2748, %v2744
        %v2795 = vsel %vm478, %v2752, %v2794
        %v2796 = vsel %vm481, %v2756, %v2795
        %v2797 = vsel %vm1394, %v2760, %v2796
        %v2798 = vsel %vm1396, %v2764, %v2797
        %v2799 = vsel %vm1398, %v2768, %v2798
        %v2800 = vsel %vm1400, %v2772, %v2799
        %v2805 = vsel %vm1427, %v2779, 0.0
        %2806 = vadd.xlane.f32.xlu0 %v2805
        %v2807 = vpop.xlane.xlu0 %2806
        %v2808 = vsel %vm1427, %v2786, 0.0
        %2809 = vadd.xlane.f32.xlu0 %v2808
        %v2810 = vpop.xlane.xlu0 %2809
        %v2811 = vsel %vm1427, %v2793, 0.0
        %2812 = vadd.xlane.f32.xlu0 %v2811
        %v2813 = vpop.xlane.xlu0 %2812
        %v2814 = vsel %vm1427, %v2800, 0.0
        %2815 = vadd.xlane.f32.xlu0 %v2814
        %v2816 = vpop.xlane.xlu0 %2815
        %v2817 = vadd.f32 %v2507, %v2807
        %v2818 = vadd.f32 %v2510, %v2810
        %v2819 = vadd.f32 %v2513, %v2813
        %v2820 = vadd.f32 %v2516, %v2816
        %v2821 = vmax.f32 %v2817, 1e-20
        %v2822 = vmax.f32 %v2818, 1e-20
        %v2823 = vmax.f32 %v2819, 1e-20
        %v2824 = vmax.f32 %v2820, 1e-20
        %v2825 = vrcp.pop %v2821
        %v2826 = vmul.f32 1.0, %v2825
        %v2827 = vrcp.pop %v2822
        %v2828 = vmul.f32 1.0, %v2827
        %v2829 = vrcp.pop %v2823
        %v2830 = vmul.f32 1.0, %v2829
        %v2831 = vrcp.pop %v2824
        %v2832 = vmul.f32 1.0, %v2831
        %v2837 = vlaneseq
        %v2838 = vshrl.u32 %v2837, 7
        %v2839 = vsub.s32 0, %v2838
        %v2840 = vrot.slane %v2826, %v2839
        %v2841 = vlaneseq
        %v2842 = vshrl.u32 %v2841, 7
        %v2843 = vsub.s32 1, %v2842
        %v2844 = vrot.slane %v2826, %v2843
        %v2845 = vlaneseq
        %v2846 = vshrl.u32 %v2845, 7
        %v2847 = vsub.s32 2, %v2846
        %v2848 = vrot.slane %v2826, %v2847
        %v2849 = vlaneseq
        %v2850 = vshrl.u32 %v2849, 7
        %v2851 = vsub.s32 3, %v2850
        %v2852 = vrot.slane %v2826, %v2851
        %v2853 = vlaneseq
        %v2854 = vshrl.u32 %v2853, 7
        %v2855 = vsub.s32 4, %v2854
        %v2856 = vrot.slane %v2826, %v2855
        %v2857 = vlaneseq
        %v2858 = vshrl.u32 %v2857, 7
        %v2859 = vsub.s32 5, %v2858
        %v2860 = vrot.slane %v2826, %v2859
        %v2861 = vlaneseq
        %v2862 = vshrl.u32 %v2861, 7
        %v2863 = vsub.s32 6, %v2862
        %v2864 = vrot.slane %v2826, %v2863
        %v2865 = vlaneseq
        %v2866 = vshrl.u32 %v2865, 7
        %v2867 = vsub.s32 7, %v2866
        %v2868 = vrot.slane %v2826, %v2867
        %v2869 = vlaneseq
        %v2870 = vshrl.u32 %v2869, 7
        %v2871 = vsub.s32 0, %v2870
        %v2872 = vrot.slane %v2828, %v2871
        %v2873 = vlaneseq
        %v2874 = vshrl.u32 %v2873, 7
        %v2875 = vsub.s32 1, %v2874
        %v2876 = vrot.slane %v2828, %v2875
        %v2877 = vlaneseq
        %v2878 = vshrl.u32 %v2877, 7
        %v2879 = vsub.s32 2, %v2878
        %v2880 = vrot.slane %v2828, %v2879
        %v2881 = vlaneseq
        %v2882 = vshrl.u32 %v2881, 7
        %v2883 = vsub.s32 3, %v2882
        %v2884 = vrot.slane %v2828, %v2883
        %v2885 = vlaneseq
        %v2886 = vshrl.u32 %v2885, 7
        %v2887 = vsub.s32 4, %v2886
        %v2888 = vrot.slane %v2828, %v2887
        %v2889 = vlaneseq
        %v2890 = vshrl.u32 %v2889, 7
        %v2891 = vsub.s32 5, %v2890
        %v2892 = vrot.slane %v2828, %v2891
        %v2893 = vlaneseq
        %v2894 = vshrl.u32 %v2893, 7
        %v2895 = vsub.s32 6, %v2894
        %v2896 = vrot.slane %v2828, %v2895
        %v2897 = vlaneseq
        %v2898 = vshrl.u32 %v2897, 7
        %v2899 = vsub.s32 7, %v2898
        %v2900 = vrot.slane %v2828, %v2899
        %v2901 = vlaneseq
        %v2902 = vshrl.u32 %v2901, 7
        %v2903 = vsub.s32 0, %v2902
        %v2904 = vrot.slane %v2830, %v2903
        %v2905 = vlaneseq
        %v2906 = vshrl.u32 %v2905, 7
        %v2907 = vsub.s32 1, %v2906
        %v2908 = vrot.slane %v2830, %v2907
        %v2909 = vlaneseq
        %v2910 = vshrl.u32 %v2909, 7
        %v2911 = vsub.s32 2, %v2910
        %v2912 = vrot.slane %v2830, %v2911
        %v2913 = vlaneseq
        %v2914 = vshrl.u32 %v2913, 7
        %v2915 = vsub.s32 3, %v2914
        %v2916 = vrot.slane %v2830, %v2915
        %v2917 = vlaneseq
        %v2918 = vshrl.u32 %v2917, 7
        %v2919 = vsub.s32 4, %v2918
        %v2920 = vrot.slane %v2830, %v2919
        %v2921 = vlaneseq
        %v2922 = vshrl.u32 %v2921, 7
        %v2923 = vsub.s32 5, %v2922
        %v2924 = vrot.slane %v2830, %v2923
        %v2925 = vlaneseq
        %v2926 = vshrl.u32 %v2925, 7
        %v2927 = vsub.s32 6, %v2926
        %v2928 = vrot.slane %v2830, %v2927
        %v2929 = vlaneseq
        %v2930 = vshrl.u32 %v2929, 7
        %v2931 = vsub.s32 7, %v2930
        %v2932 = vrot.slane %v2830, %v2931
        %v2933 = vlaneseq
        %v2934 = vshrl.u32 %v2933, 7
        %v2935 = vsub.s32 0, %v2934
        %v2936 = vrot.slane %v2832, %v2935
        %v2937 = vlaneseq
        %v2938 = vshrl.u32 %v2937, 7
        %v2939 = vsub.s32 1, %v2938
        %v2940 = vrot.slane %v2832, %v2939
        %v2941 = vlaneseq
        %v2942 = vshrl.u32 %v2941, 7
        %v2943 = vsub.s32 2, %v2942
        %v2944 = vrot.slane %v2832, %v2943
        %v2945 = vlaneseq
        %v2946 = vshrl.u32 %v2945, 7
        %v2947 = vsub.s32 3, %v2946
        %v2948 = vrot.slane %v2832, %v2947
        %v2949 = vlaneseq
        %v2950 = vshrl.u32 %v2949, 7
        %v2951 = vsub.s32 4, %v2950
        %v2952 = vrot.slane %v2832, %v2951
        %v2953 = vlaneseq
        %v2954 = vshrl.u32 %v2953, 7
        %v2955 = vsub.s32 5, %v2954
        %v2956 = vrot.slane %v2832, %v2955
        %v2957 = vlaneseq
        %v2958 = vshrl.u32 %v2957, 7
        %v2959 = vsub.s32 6, %v2958
        %v2960 = vrot.slane %v2832, %v2959
        %v2961 = vlaneseq
        %v2962 = vshrl.u32 %v2961, 7
        %v2963 = vsub.s32 7, %v2962
        %v2964 = vrot.slane %v2832, %v2963
        %v2997 = vmul.f32 %v2058, %v2840
        %v2998 = vmul.f32 %v2060, %v2844
        %v2999 = vmul.f32 %v2062, %v2848
        %v3000 = vmul.f32 %v2064, %v2852
        %v3001 = vmul.f32 %v2066, %v2856
        %v3002 = vmul.f32 %v2068, %v2860
        %v3003 = vmul.f32 %v2070, %v2864
        %v3004 = vmul.f32 %v2072, %v2868
        %v3005 = vmul.f32 %v2074, %v2872
        %v3006 = vmul.f32 %v2076, %v2876
        %v3007 = vmul.f32 %v2078, %v2880
        %v3008 = vmul.f32 %v2080, %v2884
        %v3009 = vmul.f32 %v2082, %v2888
        %v3010 = vmul.f32 %v2084, %v2892
        %v3011 = vmul.f32 %v2086, %v2896
        %v3012 = vmul.f32 %v2088, %v2900
        %v3013 = vmul.f32 %v2090, %v2904
        %v3014 = vmul.f32 %v2092, %v2908
        %v3015 = vmul.f32 %v2094, %v2912
        %v3016 = vmul.f32 %v2096, %v2916
        %v3017 = vmul.f32 %v2098, %v2920
        %v3018 = vmul.f32 %v2100, %v2924
        %v3019 = vmul.f32 %v2102, %v2928
        %v3020 = vmul.f32 %v2104, %v2932
        %v3021 = vmul.f32 %v2106, %v2936
        %v3022 = vmul.f32 %v2108, %v2940
        %v3023 = vmul.f32 %v2110, %v2944
        %v3024 = vmul.f32 %v2112, %v2948
        %v3025 = vmul.f32 %v2114, %v2952
        %v3026 = vmul.f32 %v2116, %v2956
        %v3027 = vmul.f32 %v2118, %v2960
        %v3028 = vmul.f32 %v2120, %v2964
        %v3029 = vpack.c.bf16 %v2997, %v2997
        %v3030 = vpack.c.bf16 %v2998, %v2998
        %v3031 = vpack.c.bf16 %v2999, %v2999
        %v3032 = vpack.c.bf16 %v3000, %v3000
        %v3033 = vpack.c.bf16 %v3001, %v3001
        %v3034 = vpack.c.bf16 %v3002, %v3002
        %v3035 = vpack.c.bf16 %v3003, %v3003
        %v3036 = vpack.c.bf16 %v3004, %v3004
        %v3037 = vpack.c.bf16 %v3005, %v3005
        %v3038 = vpack.c.bf16 %v3006, %v3006
        %v3039 = vpack.c.bf16 %v3007, %v3007
        %v3040 = vpack.c.bf16 %v3008, %v3008
        %v3041 = vpack.c.bf16 %v3009, %v3009
        %v3042 = vpack.c.bf16 %v3010, %v3010
        %v3043 = vpack.c.bf16 %v3011, %v3011
        %v3044 = vpack.c.bf16 %v3012, %v3012
        %v3045 = vpack.c.bf16 %v3013, %v3013
        %v3046 = vpack.c.bf16 %v3014, %v3014
        %v3047 = vpack.c.bf16 %v3015, %v3015
        %v3048 = vpack.c.bf16 %v3016, %v3016
        %v3049 = vpack.c.bf16 %v3017, %v3017
        %v3050 = vpack.c.bf16 %v3018, %v3018
        %v3051 = vpack.c.bf16 %v3019, %v3019
        %v3052 = vpack.c.bf16 %v3020, %v3020
        %v3053 = vpack.c.bf16 %v3021, %v3021
        %v3054 = vpack.c.bf16 %v3022, %v3022
        %v3055 = vpack.c.bf16 %v3023, %v3023
        %v3056 = vpack.c.bf16 %v3024, %v3024
        %v3057 = vpack.c.bf16 %v3025, %v3025
        %v3058 = vpack.c.bf16 %v3026, %v3026
        %v3059 = vpack.c.bf16 %v3027, %v3027
        %v3060 = vpack.c.bf16 %v3028, %v3028
        %v3061 = vmul.f32 %v2154, %v2840
        %v3062 = vmul.f32 %v2156, %v2844
        %v3063 = vmul.f32 %v2158, %v2848
        %v3064 = vmul.f32 %v2160, %v2852
        %v3065 = vmul.f32 %v2162, %v2856
        %v3066 = vmul.f32 %v2164, %v2860
        %v3067 = vmul.f32 %v2166, %v2864
        %v3068 = vmul.f32 %v2168, %v2868
        %v3069 = vmul.f32 %v2170, %v2872
        %v3070 = vmul.f32 %v2172, %v2876
        %v3071 = vmul.f32 %v2174, %v2880
        %v3072 = vmul.f32 %v2176, %v2884
        %v3073 = vmul.f32 %v2178, %v2888
        %v3074 = vmul.f32 %v2180, %v2892
        %v3075 = vmul.f32 %v2182, %v2896
        %v3076 = vmul.f32 %v2184, %v2900
        %v3077 = vmul.f32 %v2186, %v2904
        %v3078 = vmul.f32 %v2188, %v2908
        %v3079 = vmul.f32 %v2190, %v2912
        %v3080 = vmul.f32 %v2192, %v2916
        %v3081 = vmul.f32 %v2194, %v2920
        %v3082 = vmul.f32 %v2196, %v2924
        %v3083 = vmul.f32 %v2198, %v2928
        %v3084 = vmul.f32 %v2200, %v2932
        %v3085 = vmul.f32 %v2202, %v2936
        %v3086 = vmul.f32 %v2204, %v2940
        %v3087 = vmul.f32 %v2206, %v2944
        %v3088 = vmul.f32 %v2208, %v2948
        %v3089 = vmul.f32 %v2210, %v2952
        %v3090 = vmul.f32 %v2212, %v2956
        %v3091 = vmul.f32 %v2214, %v2960
        %v3092 = vmul.f32 %v2216, %v2964
        %v3093 = vpack.c.bf16 %v3061, %v3061
        %v3094 = vpack.c.bf16 %v3062, %v3062
        %v3095 = vpack.c.bf16 %v3063, %v3063
        %v3096 = vpack.c.bf16 %v3064, %v3064
        %v3097 = vpack.c.bf16 %v3065, %v3065
        %v3098 = vpack.c.bf16 %v3066, %v3066
        %v3099 = vpack.c.bf16 %v3067, %v3067
        %v3100 = vpack.c.bf16 %v3068, %v3068
        %v3101 = vpack.c.bf16 %v3069, %v3069
        %v3102 = vpack.c.bf16 %v3070, %v3070
        %v3103 = vpack.c.bf16 %v3071, %v3071
        %v3104 = vpack.c.bf16 %v3072, %v3072
        %v3105 = vpack.c.bf16 %v3073, %v3073
        %v3106 = vpack.c.bf16 %v3074, %v3074
        %v3107 = vpack.c.bf16 %v3075, %v3075
        %v3108 = vpack.c.bf16 %v3076, %v3076
        %v3109 = vpack.c.bf16 %v3077, %v3077
        %v3110 = vpack.c.bf16 %v3078, %v3078
        %v3111 = vpack.c.bf16 %v3079, %v3079
        %v3112 = vpack.c.bf16 %v3080, %v3080
        %v3113 = vpack.c.bf16 %v3081, %v3081
        %v3114 = vpack.c.bf16 %v3082, %v3082
        %v3115 = vpack.c.bf16 %v3083, %v3083
        %v3116 = vpack.c.bf16 %v3084, %v3084
        %v3117 = vpack.c.bf16 %v3085, %v3085
        %v3118 = vpack.c.bf16 %v3086, %v3086
        %v3119 = vpack.c.bf16 %v3087, %v3087
        %v3120 = vpack.c.bf16 %v3088, %v3088
        %v3121 = vpack.c.bf16 %v3089, %v3089
        %v3122 = vpack.c.bf16 %v3090, %v3090
        %v3123 = vpack.c.bf16 %v3091, %v3091
        %v3124 = vpack.c.bf16 %v3092, %v3092
        %3126 = vset.pattern.permute.xlu0 0
        %3127 = vperm.xlu0 %3126, %v3029
        %v3128 = vpop.permute.xlu0 %3127
        %3131 = vset.pattern.permute.xlu0 0
        %3132 = vperm.xlu0 %3131, %v3030
        %v3133 = vpop.permute.xlu0 %3132
        %3136 = vset.pattern.permute.xlu0 0
        %3137 = vperm.xlu0 %3136, %v3031
        %v3138 = vpop.permute.xlu0 %3137
        %3141 = vset.pattern.permute.xlu0 0
        %3142 = vperm.xlu0 %3141, %v3032
        %v3143 = vpop.permute.xlu0 %3142
        %3146 = vset.pattern.permute.xlu0 0
        %3147 = vperm.xlu0 %3146, %v3033
        %v3148 = vpop.permute.xlu0 %3147
        %3151 = vset.pattern.permute.xlu0 0
        %3152 = vperm.xlu0 %3151, %v3034
        %v3153 = vpop.permute.xlu0 %3152
        %3156 = vset.pattern.permute.xlu0 0
        %3157 = vperm.xlu0 %3156, %v3035
        %v3158 = vpop.permute.xlu0 %3157
        %3161 = vset.pattern.permute.xlu0 0
        %3162 = vperm.xlu0 %3161, %v3036
        %v3163 = vpop.permute.xlu0 %3162
        %3166 = vset.pattern.permute.xlu0 0
        %3167 = vperm.xlu0 %3166, %v3037
        %v3168 = vpop.permute.xlu0 %3167
        %3171 = vset.pattern.permute.xlu0 0
        %3172 = vperm.xlu0 %3171, %v3038
        %v3173 = vpop.permute.xlu0 %3172
        %3176 = vset.pattern.permute.xlu0 0
        %3177 = vperm.xlu0 %3176, %v3039
        %v3178 = vpop.permute.xlu0 %3177
        %3181 = vset.pattern.permute.xlu0 0
        %3182 = vperm.xlu0 %3181, %v3040
        %v3183 = vpop.permute.xlu0 %3182
        %3186 = vset.pattern.permute.xlu0 0
        %3187 = vperm.xlu0 %3186, %v3041
        %v3188 = vpop.permute.xlu0 %3187
        %3191 = vset.pattern.permute.xlu0 0
        %3192 = vperm.xlu0 %3191, %v3042
        %v3193 = vpop.permute.xlu0 %3192
        %3196 = vset.pattern.permute.xlu0 0
        %3197 = vperm.xlu0 %3196, %v3043
        %v3198 = vpop.permute.xlu0 %3197
        %3201 = vset.pattern.permute.xlu0 0
        %3202 = vperm.xlu0 %3201, %v3044
        %v3203 = vpop.permute.xlu0 %3202
        %3206 = vset.pattern.permute.xlu0 0
        %3207 = vperm.xlu0 %3206, %v3045
        %v3208 = vpop.permute.xlu0 %3207
        %3211 = vset.pattern.permute.xlu0 0
        %3212 = vperm.xlu0 %3211, %v3046
        %v3213 = vpop.permute.xlu0 %3212
        %3216 = vset.pattern.permute.xlu0 0
        %3217 = vperm.xlu0 %3216, %v3047
        %v3218 = vpop.permute.xlu0 %3217
        %3221 = vset.pattern.permute.xlu0 0
        %3222 = vperm.xlu0 %3221, %v3048
        %v3223 = vpop.permute.xlu0 %3222
        %3226 = vset.pattern.permute.xlu0 0
        %3227 = vperm.xlu0 %3226, %v3049
        %v3228 = vpop.permute.xlu0 %3227
        %3231 = vset.pattern.permute.xlu0 0
        %3232 = vperm.xlu0 %3231, %v3050
        %v3233 = vpop.permute.xlu0 %3232
        %3236 = vset.pattern.permute.xlu0 0
        %3237 = vperm.xlu0 %3236, %v3051
        %v3238 = vpop.permute.xlu0 %3237
        %3241 = vset.pattern.permute.xlu0 0
        %3242 = vperm.xlu0 %3241, %v3052
        %v3243 = vpop.permute.xlu0 %3242
        %3246 = vset.pattern.permute.xlu0 0
        %3247 = vperm.xlu0 %3246, %v3053
        %v3248 = vpop.permute.xlu0 %3247
        %3251 = vset.pattern.permute.xlu0 0
        %3252 = vperm.xlu0 %3251, %v3054
        %v3253 = vpop.permute.xlu0 %3252
        %3256 = vset.pattern.permute.xlu0 0
        %3257 = vperm.xlu0 %3256, %v3055
        %v3258 = vpop.permute.xlu0 %3257
        %3261 = vset.pattern.permute.xlu0 0
        %3262 = vperm.xlu0 %3261, %v3056
        %v3263 = vpop.permute.xlu0 %3262
        %3266 = vset.pattern.permute.xlu0 0
        %3267 = vperm.xlu0 %3266, %v3057
        %v3268 = vpop.permute.xlu0 %3267
        %3271 = vset.pattern.permute.xlu0 0
        %3272 = vperm.xlu0 %3271, %v3058
        %v3273 = vpop.permute.xlu0 %3272
        %3276 = vset.pattern.permute.xlu0 0
        %3277 = vperm.xlu0 %3276, %v3059
        %v3278 = vpop.permute.xlu0 %3277
        %3281 = vset.pattern.permute.xlu0 0
        %3282 = vperm.xlu0 %3281, %v3060
        %v3283 = vpop.permute.xlu0 %3282
        %v3285 = vmul.bf16 %v3128, %v1480
        %v3286 = vmul.bf16 %v3133, %v1480
        %v3287 = vmul.bf16 %v3138, %v1480
        %v3288 = vmul.bf16 %v3143, %v1480
        %v3289 = vmul.bf16 %v3148, %v1480
        %v3290 = vmul.bf16 %v3153, %v1480
        %v3291 = vmul.bf16 %v3158, %v1480
        %v3292 = vmul.bf16 %v3163, %v1480
        %v3293 = vmul.bf16 %v3168, %v1481
        %v3294 = vmul.bf16 %v3173, %v1481
        %v3295 = vmul.bf16 %v3178, %v1481
        %v3296 = vmul.bf16 %v3183, %v1481
        %v3297 = vmul.bf16 %v3188, %v1481
        %v3298 = vmul.bf16 %v3193, %v1481
        %v3299 = vmul.bf16 %v3198, %v1481
        %v3300 = vmul.bf16 %v3203, %v1481
        %v3301 = vmul.bf16 %v3208, %v1482
        %v3302 = vmul.bf16 %v3213, %v1482
        %v3303 = vmul.bf16 %v3218, %v1482
        %v3304 = vmul.bf16 %v3223, %v1482
        %v3305 = vmul.bf16 %v3228, %v1482
        %v3306 = vmul.bf16 %v3233, %v1482
        %v3307 = vmul.bf16 %v3238, %v1482
        %v3308 = vmul.bf16 %v3243, %v1482
        %v3309 = vmul.bf16 %v3248, %v1483
        %v3310 = vmul.bf16 %v3253, %v1483
        %v3311 = vmul.bf16 %v3258, %v1483
        %v3312 = vmul.bf16 %v3263, %v1483
        %v3313 = vmul.bf16 %v3268, %v1483
        %v3314 = vmul.bf16 %v3273, %v1483
        %v3315 = vmul.bf16 %v3278, %v1483
        %v3316 = vmul.bf16 %v3283, %v1483
        %v3317 = vunpack.c.l.bf16 %v3285
        %v3318 = vunpack.c.l.bf16 %v3286
        %v3319 = vunpack.c.l.bf16 %v3287
        %v3320 = vunpack.c.l.bf16 %v3288
        %v3321 = vunpack.c.l.bf16 %v3289
        %v3322 = vunpack.c.l.bf16 %v3290
        %v3323 = vunpack.c.l.bf16 %v3291
        %v3324 = vunpack.c.l.bf16 %v3292
        %v3325 = vunpack.c.l.bf16 %v3293
        %v3326 = vunpack.c.l.bf16 %v3294
        %v3327 = vunpack.c.l.bf16 %v3295
        %v3328 = vunpack.c.l.bf16 %v3296
        %v3329 = vunpack.c.l.bf16 %v3297
        %v3330 = vunpack.c.l.bf16 %v3298
        %v3331 = vunpack.c.l.bf16 %v3299
        %v3332 = vunpack.c.l.bf16 %v3300
        %v3333 = vunpack.c.l.bf16 %v3301
        %v3334 = vunpack.c.l.bf16 %v3302
        %v3335 = vunpack.c.l.bf16 %v3303
        %v3336 = vunpack.c.l.bf16 %v3304
        %v3337 = vunpack.c.l.bf16 %v3305
        %v3338 = vunpack.c.l.bf16 %v3306
        %v3339 = vunpack.c.l.bf16 %v3307
        %v3340 = vunpack.c.l.bf16 %v3308
        %v3341 = vunpack.c.l.bf16 %v3309
        %v3342 = vunpack.c.l.bf16 %v3310
        %v3343 = vunpack.c.l.bf16 %v3311
        %v3344 = vunpack.c.l.bf16 %v3312
        %v3345 = vunpack.c.l.bf16 %v3313
        %v3346 = vunpack.c.l.bf16 %v3314
        %v3347 = vunpack.c.l.bf16 %v3315
        %v3348 = vunpack.c.l.bf16 %v3316
        %v3349 = vrot.slane %v3317, 4
        %v3350 = vadd.f32 %v3317, %v3349
        %v3351 = vrot.slane %v3350, 2
        %v3352 = vadd.f32 %v3350, %v3351
        %v3353 = vrot.slane %v3352, 1
        %v3354 = vadd.f32 %v3352, %v3353
        %v3355 = vrot.slane %v3318, 4
        %v3356 = vadd.f32 %v3318, %v3355
        %v3357 = vrot.slane %v3356, 2
        %v3358 = vadd.f32 %v3356, %v3357
        %v3359 = vrot.slane %v3358, 1
        %v3360 = vadd.f32 %v3358, %v3359
        %v3361 = vrot.slane %v3319, 4
        %v3362 = vadd.f32 %v3319, %v3361
        %v3363 = vrot.slane %v3362, 2
        %v3364 = vadd.f32 %v3362, %v3363
        %v3365 = vrot.slane %v3364, 1
        %v3366 = vadd.f32 %v3364, %v3365
        %v3367 = vrot.slane %v3320, 4
        %v3368 = vadd.f32 %v3320, %v3367
        %v3369 = vrot.slane %v3368, 2
        %v3370 = vadd.f32 %v3368, %v3369
        %v3371 = vrot.slane %v3370, 1
        %v3372 = vadd.f32 %v3370, %v3371
        %v3373 = vrot.slane %v3321, 4
        %v3374 = vadd.f32 %v3321, %v3373
        %v3375 = vrot.slane %v3374, 2
        %v3376 = vadd.f32 %v3374, %v3375
        %v3377 = vrot.slane %v3376, 1
        %v3378 = vadd.f32 %v3376, %v3377
        %v3379 = vrot.slane %v3322, 4
        %v3380 = vadd.f32 %v3322, %v3379
        %v3381 = vrot.slane %v3380, 2
        %v3382 = vadd.f32 %v3380, %v3381
        %v3383 = vrot.slane %v3382, 1
        %v3384 = vadd.f32 %v3382, %v3383
        %v3385 = vrot.slane %v3323, 4
        %v3386 = vadd.f32 %v3323, %v3385
        %v3387 = vrot.slane %v3386, 2
        %v3388 = vadd.f32 %v3386, %v3387
        %v3389 = vrot.slane %v3388, 1
        %v3390 = vadd.f32 %v3388, %v3389
        %v3391 = vrot.slane %v3324, 4
        %v3392 = vadd.f32 %v3324, %v3391
        %v3393 = vrot.slane %v3392, 2
        %v3394 = vadd.f32 %v3392, %v3393
        %v3395 = vrot.slane %v3394, 1
        %v3396 = vadd.f32 %v3394, %v3395
        %v3397 = vrot.slane %v3325, 4
        %v3398 = vadd.f32 %v3325, %v3397
        %v3399 = vrot.slane %v3398, 2
        %v3400 = vadd.f32 %v3398, %v3399
        %v3401 = vrot.slane %v3400, 1
        %v3402 = vadd.f32 %v3400, %v3401
        %v3403 = vrot.slane %v3326, 4
        %v3404 = vadd.f32 %v3326, %v3403
        %v3405 = vrot.slane %v3404, 2
        %v3406 = vadd.f32 %v3404, %v3405
        %v3407 = vrot.slane %v3406, 1
        %v3408 = vadd.f32 %v3406, %v3407
        %v3409 = vrot.slane %v3327, 4
        %v3410 = vadd.f32 %v3327, %v3409
        %v3411 = vrot.slane %v3410, 2
        %v3412 = vadd.f32 %v3410, %v3411
        %v3413 = vrot.slane %v3412, 1
        %v3414 = vadd.f32 %v3412, %v3413
        %v3415 = vrot.slane %v3328, 4
        %v3416 = vadd.f32 %v3328, %v3415
        %v3417 = vrot.slane %v3416, 2
        %v3418 = vadd.f32 %v3416, %v3417
        %v3419 = vrot.slane %v3418, 1
        %v3420 = vadd.f32 %v3418, %v3419
        %v3421 = vrot.slane %v3329, 4
        %v3422 = vadd.f32 %v3329, %v3421
        %v3423 = vrot.slane %v3422, 2
        %v3424 = vadd.f32 %v3422, %v3423
        %v3425 = vrot.slane %v3424, 1
        %v3426 = vadd.f32 %v3424, %v3425
        %v3427 = vrot.slane %v3330, 4
        %v3428 = vadd.f32 %v3330, %v3427
        %v3429 = vrot.slane %v3428, 2
        %v3430 = vadd.f32 %v3428, %v3429
        %v3431 = vrot.slane %v3430, 1
        %v3432 = vadd.f32 %v3430, %v3431
        %v3433 = vrot.slane %v3331, 4
        %v3434 = vadd.f32 %v3331, %v3433
        %v3435 = vrot.slane %v3434, 2
        %v3436 = vadd.f32 %v3434, %v3435
        %v3437 = vrot.slane %v3436, 1
        %v3438 = vadd.f32 %v3436, %v3437
        %v3439 = vrot.slane %v3332, 4
        %v3440 = vadd.f32 %v3332, %v3439
        %v3441 = vrot.slane %v3440, 2
        %v3442 = vadd.f32 %v3440, %v3441
        %v3443 = vrot.slane %v3442, 1
        %v3444 = vadd.f32 %v3442, %v3443
        %v3445 = vrot.slane %v3333, 4
        %v3446 = vadd.f32 %v3333, %v3445
        %v3447 = vrot.slane %v3446, 2
        %v3448 = vadd.f32 %v3446, %v3447
        %v3449 = vrot.slane %v3448, 1
        %v3450 = vadd.f32 %v3448, %v3449
        %v3451 = vrot.slane %v3334, 4
        %v3452 = vadd.f32 %v3334, %v3451
        %v3453 = vrot.slane %v3452, 2
        %v3454 = vadd.f32 %v3452, %v3453
        %v3455 = vrot.slane %v3454, 1
        %v3456 = vadd.f32 %v3454, %v3455
        %v3457 = vrot.slane %v3335, 4
        %v3458 = vadd.f32 %v3335, %v3457
        %v3459 = vrot.slane %v3458, 2
        %v3460 = vadd.f32 %v3458, %v3459
        %v3461 = vrot.slane %v3460, 1
        %v3462 = vadd.f32 %v3460, %v3461
        %v3463 = vrot.slane %v3336, 4
        %v3464 = vadd.f32 %v3336, %v3463
        %v3465 = vrot.slane %v3464, 2
        %v3466 = vadd.f32 %v3464, %v3465
        %v3467 = vrot.slane %v3466, 1
        %v3468 = vadd.f32 %v3466, %v3467
        %v3469 = vrot.slane %v3337, 4
        %v3470 = vadd.f32 %v3337, %v3469
        %v3471 = vrot.slane %v3470, 2
        %v3472 = vadd.f32 %v3470, %v3471
        %v3473 = vrot.slane %v3472, 1
        %v3474 = vadd.f32 %v3472, %v3473
        %v3475 = vrot.slane %v3338, 4
        %v3476 = vadd.f32 %v3338, %v3475
        %v3477 = vrot.slane %v3476, 2
        %v3478 = vadd.f32 %v3476, %v3477
        %v3479 = vrot.slane %v3478, 1
        %v3480 = vadd.f32 %v3478, %v3479
        %v3481 = vrot.slane %v3339, 4
        %v3482 = vadd.f32 %v3339, %v3481
        %v3483 = vrot.slane %v3482, 2
        %v3484 = vadd.f32 %v3482, %v3483
        %v3485 = vrot.slane %v3484, 1
        %v3486 = vadd.f32 %v3484, %v3485
        %v3487 = vrot.slane %v3340, 4
        %v3488 = vadd.f32 %v3340, %v3487
        %v3489 = vrot.slane %v3488, 2
        %v3490 = vadd.f32 %v3488, %v3489
        %v3491 = vrot.slane %v3490, 1
        %v3492 = vadd.f32 %v3490, %v3491
        %v3493 = vrot.slane %v3341, 4
        %v3494 = vadd.f32 %v3341, %v3493
        %v3495 = vrot.slane %v3494, 2
        %v3496 = vadd.f32 %v3494, %v3495
        %v3497 = vrot.slane %v3496, 1
        %v3498 = vadd.f32 %v3496, %v3497
        %v3499 = vrot.slane %v3342, 4
        %v3500 = vadd.f32 %v3342, %v3499
        %v3501 = vrot.slane %v3500, 2
        %v3502 = vadd.f32 %v3500, %v3501
        %v3503 = vrot.slane %v3502, 1
        %v3504 = vadd.f32 %v3502, %v3503
        %v3505 = vrot.slane %v3343, 4
        %v3506 = vadd.f32 %v3343, %v3505
        %v3507 = vrot.slane %v3506, 2
        %v3508 = vadd.f32 %v3506, %v3507
        %v3509 = vrot.slane %v3508, 1
        %v3510 = vadd.f32 %v3508, %v3509
        %v3511 = vrot.slane %v3344, 4
        %v3512 = vadd.f32 %v3344, %v3511
        %v3513 = vrot.slane %v3512, 2
        %v3514 = vadd.f32 %v3512, %v3513
        %v3515 = vrot.slane %v3514, 1
        %v3516 = vadd.f32 %v3514, %v3515
        %v3517 = vrot.slane %v3345, 4
        %v3518 = vadd.f32 %v3345, %v3517
        %v3519 = vrot.slane %v3518, 2
        %v3520 = vadd.f32 %v3518, %v3519
        %v3521 = vrot.slane %v3520, 1
        %v3522 = vadd.f32 %v3520, %v3521
        %v3523 = vrot.slane %v3346, 4
        %v3524 = vadd.f32 %v3346, %v3523
        %v3525 = vrot.slane %v3524, 2
        %v3526 = vadd.f32 %v3524, %v3525
        %v3527 = vrot.slane %v3526, 1
        %v3528 = vadd.f32 %v3526, %v3527
        %v3529 = vrot.slane %v3347, 4
        %v3530 = vadd.f32 %v3347, %v3529
        %v3531 = vrot.slane %v3530, 2
        %v3532 = vadd.f32 %v3530, %v3531
        %v3533 = vrot.slane %v3532, 1
        %v3534 = vadd.f32 %v3532, %v3533
        %v3535 = vrot.slane %v3348, 4
        %v3536 = vadd.f32 %v3348, %v3535
        %v3537 = vrot.slane %v3536, 2
        %v3538 = vadd.f32 %v3536, %v3537
        %v3539 = vrot.slane %v3538, 1
        %v3540 = vadd.f32 %v3538, %v3539
        %3542 = vset.pattern.permute.xlu0 0
        %3543 = vperm.xlu0 %3542, %v3093
        %v3544 = vpop.permute.xlu0 %3543
        %3547 = vset.pattern.permute.xlu0 0
        %3548 = vperm.xlu0 %3547, %v3094
        %v3549 = vpop.permute.xlu0 %3548
        %3552 = vset.pattern.permute.xlu0 0
        %3553 = vperm.xlu0 %3552, %v3095
        %v3554 = vpop.permute.xlu0 %3553
        %3557 = vset.pattern.permute.xlu0 0
        %3558 = vperm.xlu0 %3557, %v3096
        %v3559 = vpop.permute.xlu0 %3558
        %3562 = vset.pattern.permute.xlu0 0
        %3563 = vperm.xlu0 %3562, %v3097
        %v3564 = vpop.permute.xlu0 %3563
        %3567 = vset.pattern.permute.xlu0 0
        %3568 = vperm.xlu0 %3567, %v3098
        %v3569 = vpop.permute.xlu0 %3568
        %3572 = vset.pattern.permute.xlu0 0
        %3573 = vperm.xlu0 %3572, %v3099
        %v3574 = vpop.permute.xlu0 %3573
        %3577 = vset.pattern.permute.xlu0 0
        %3578 = vperm.xlu0 %3577, %v3100
        %v3579 = vpop.permute.xlu0 %3578
        %3582 = vset.pattern.permute.xlu0 0
        %3583 = vperm.xlu0 %3582, %v3101
        %v3584 = vpop.permute.xlu0 %3583
        %3587 = vset.pattern.permute.xlu0 0
        %3588 = vperm.xlu0 %3587, %v3102
        %v3589 = vpop.permute.xlu0 %3588
        %3592 = vset.pattern.permute.xlu0 0
        %3593 = vperm.xlu0 %3592, %v3103
        %v3594 = vpop.permute.xlu0 %3593
        %3597 = vset.pattern.permute.xlu0 0
        %3598 = vperm.xlu0 %3597, %v3104
        %v3599 = vpop.permute.xlu0 %3598
        %3602 = vset.pattern.permute.xlu0 0
        %3603 = vperm.xlu0 %3602, %v3105
        %v3604 = vpop.permute.xlu0 %3603
        %3607 = vset.pattern.permute.xlu0 0
        %3608 = vperm.xlu0 %3607, %v3106
        %v3609 = vpop.permute.xlu0 %3608
        %3612 = vset.pattern.permute.xlu0 0
        %3613 = vperm.xlu0 %3612, %v3107
        %v3614 = vpop.permute.xlu0 %3613
        %3617 = vset.pattern.permute.xlu0 0
        %3618 = vperm.xlu0 %3617, %v3108
        %v3619 = vpop.permute.xlu0 %3618
        %3622 = vset.pattern.permute.xlu0 0
        %3623 = vperm.xlu0 %3622, %v3109
        %v3624 = vpop.permute.xlu0 %3623
        %3627 = vset.pattern.permute.xlu0 0
        %3628 = vperm.xlu0 %3627, %v3110
        %v3629 = vpop.permute.xlu0 %3628
        %3632 = vset.pattern.permute.xlu0 0
        %3633 = vperm.xlu0 %3632, %v3111
        %v3634 = vpop.permute.xlu0 %3633
        %3637 = vset.pattern.permute.xlu0 0
        %3638 = vperm.xlu0 %3637, %v3112
        %v3639 = vpop.permute.xlu0 %3638
        %3642 = vset.pattern.permute.xlu0 0
        %3643 = vperm.xlu0 %3642, %v3113
        %v3644 = vpop.permute.xlu0 %3643
        %3647 = vset.pattern.permute.xlu0 0
        %3648 = vperm.xlu0 %3647, %v3114
        %v3649 = vpop.permute.xlu0 %3648
        %3652 = vset.pattern.permute.xlu0 0
        %3653 = vperm.xlu0 %3652, %v3115
        %v3654 = vpop.permute.xlu0 %3653
        %3657 = vset.pattern.permute.xlu0 0
        %3658 = vperm.xlu0 %3657, %v3116
        %v3659 = vpop.permute.xlu0 %3658
        %3662 = vset.pattern.permute.xlu0 0
        %3663 = vperm.xlu0 %3662, %v3117
        %v3664 = vpop.permute.xlu0 %3663
        %3667 = vset.pattern.permute.xlu0 0
        %3668 = vperm.xlu0 %3667, %v3118
        %v3669 = vpop.permute.xlu0 %3668
        %3672 = vset.pattern.permute.xlu0 0
        %3673 = vperm.xlu0 %3672, %v3119
        %v3674 = vpop.permute.xlu0 %3673
        %3677 = vset.pattern.permute.xlu0 0
        %3678 = vperm.xlu0 %3677, %v3120
        %v3679 = vpop.permute.xlu0 %3678
        %3682 = vset.pattern.permute.xlu0 0
        %3683 = vperm.xlu0 %3682, %v3121
        %v3684 = vpop.permute.xlu0 %3683
        %3687 = vset.pattern.permute.xlu0 0
        %3688 = vperm.xlu0 %3687, %v3122
        %v3689 = vpop.permute.xlu0 %3688
        %3692 = vset.pattern.permute.xlu0 0
        %3693 = vperm.xlu0 %3692, %v3123
        %v3694 = vpop.permute.xlu0 %3693
        %3697 = vset.pattern.permute.xlu0 0
        %3698 = vperm.xlu0 %3697, %v3124
        %v3699 = vpop.permute.xlu0 %3698
        %v3701 = vmul.bf16 %v3544, %v620
        %v3702 = vmul.bf16 %v3549, %v621
        %v3703 = vmul.bf16 %v3554, %v622
        %v3704 = vmul.bf16 %v3559, %v623
        %v3705 = vmul.bf16 %v3564, %v624
        %v3706 = vmul.bf16 %v3569, %v625
        %v3707 = vmul.bf16 %v3574, %v626
        %v3708 = vmul.bf16 %v3579, %v627
        %v3709 = vmul.bf16 %v3584, %v628
        %v3710 = vmul.bf16 %v3589, %v629
        %v3711 = vmul.bf16 %v3594, %v630
        %v3712 = vmul.bf16 %v3599, %v631
        %v3713 = vmul.bf16 %v3604, %v632
        %v3714 = vmul.bf16 %v3609, %v633
        %v3715 = vmul.bf16 %v3614, %v634
        %v3716 = vmul.bf16 %v3619, %v635
        %v3717 = vmul.bf16 %v3624, %v636
        %v3718 = vmul.bf16 %v3629, %v637
        %v3719 = vmul.bf16 %v3634, %v638
        %v3720 = vmul.bf16 %v3639, %v639
        %v3721 = vmul.bf16 %v3644, %v640
        %v3722 = vmul.bf16 %v3649, %v641
        %v3723 = vmul.bf16 %v3654, %v642
        %v3724 = vmul.bf16 %v3659, %v643
        %v3725 = vmul.bf16 %v3664, %v644
        %v3726 = vmul.bf16 %v3669, %v645
        %v3727 = vmul.bf16 %v3674, %v646
        %v3728 = vmul.bf16 %v3679, %v647
        %v3729 = vmul.bf16 %v3684, %v648
        %v3730 = vmul.bf16 %v3689, %v649
        %v3731 = vmul.bf16 %v3694, %v650
        %v3732 = vmul.bf16 %v3699, %v651
        %v3733 = vunpack.c.l.bf16 %v3701
        %v3734 = vunpack.c.l.bf16 %v3702
        %v3735 = vunpack.c.l.bf16 %v3703
        %v3736 = vunpack.c.l.bf16 %v3704
        %v3737 = vunpack.c.l.bf16 %v3705
        %v3738 = vunpack.c.l.bf16 %v3706
        %v3739 = vunpack.c.l.bf16 %v3707
        %v3740 = vunpack.c.l.bf16 %v3708
        %v3741 = vunpack.c.l.bf16 %v3709
        %v3742 = vunpack.c.l.bf16 %v3710
        %v3743 = vunpack.c.l.bf16 %v3711
        %v3744 = vunpack.c.l.bf16 %v3712
        %v3745 = vunpack.c.l.bf16 %v3713
        %v3746 = vunpack.c.l.bf16 %v3714
        %v3747 = vunpack.c.l.bf16 %v3715
        %v3748 = vunpack.c.l.bf16 %v3716
        %v3749 = vunpack.c.l.bf16 %v3717
        %v3750 = vunpack.c.l.bf16 %v3718
        %v3751 = vunpack.c.l.bf16 %v3719
        %v3752 = vunpack.c.l.bf16 %v3720
        %v3753 = vunpack.c.l.bf16 %v3721
        %v3754 = vunpack.c.l.bf16 %v3722
        %v3755 = vunpack.c.l.bf16 %v3723
        %v3756 = vunpack.c.l.bf16 %v3724
        %v3757 = vunpack.c.l.bf16 %v3725
        %v3758 = vunpack.c.l.bf16 %v3726
        %v3759 = vunpack.c.l.bf16 %v3727
        %v3760 = vunpack.c.l.bf16 %v3728
        %v3761 = vunpack.c.l.bf16 %v3729
        %v3762 = vunpack.c.l.bf16 %v3730
        %v3763 = vunpack.c.l.bf16 %v3731
        %v3764 = vunpack.c.l.bf16 %v3732
        %v3765 = vrot.slane %v3733, 4
        %v3766 = vadd.f32 %v3733, %v3765
        %v3767 = vrot.slane %v3766, 2
        %v3768 = vadd.f32 %v3766, %v3767
        %v3769 = vrot.slane %v3768, 1
        %v3770 = vadd.f32 %v3768, %v3769
        %v3771 = vrot.slane %v3734, 4
        %v3772 = vadd.f32 %v3734, %v3771
        %v3773 = vrot.slane %v3772, 2
        %v3774 = vadd.f32 %v3772, %v3773
        %v3775 = vrot.slane %v3774, 1
        %v3776 = vadd.f32 %v3774, %v3775
        %v3777 = vrot.slane %v3735, 4
        %v3778 = vadd.f32 %v3735, %v3777
        %v3779 = vrot.slane %v3778, 2
        %v3780 = vadd.f32 %v3778, %v3779
        %v3781 = vrot.slane %v3780, 1
        %v3782 = vadd.f32 %v3780, %v3781
        %v3783 = vrot.slane %v3736, 4
        %v3784 = vadd.f32 %v3736, %v3783
        %v3785 = vrot.slane %v3784, 2
        %v3786 = vadd.f32 %v3784, %v3785
        %v3787 = vrot.slane %v3786, 1
        %v3788 = vadd.f32 %v3786, %v3787
        %v3789 = vrot.slane %v3737, 4
        %v3790 = vadd.f32 %v3737, %v3789
        %v3791 = vrot.slane %v3790, 2
        %v3792 = vadd.f32 %v3790, %v3791
        %v3793 = vrot.slane %v3792, 1
        %v3794 = vadd.f32 %v3792, %v3793
        %v3795 = vrot.slane %v3738, 4
        %v3796 = vadd.f32 %v3738, %v3795
        %v3797 = vrot.slane %v3796, 2
        %v3798 = vadd.f32 %v3796, %v3797
        %v3799 = vrot.slane %v3798, 1
        %v3800 = vadd.f32 %v3798, %v3799
        %v3801 = vrot.slane %v3739, 4
        %v3802 = vadd.f32 %v3739, %v3801
        %v3803 = vrot.slane %v3802, 2
        %v3804 = vadd.f32 %v3802, %v3803
        %v3805 = vrot.slane %v3804, 1
        %v3806 = vadd.f32 %v3804, %v3805
        %v3807 = vrot.slane %v3740, 4
        %v3808 = vadd.f32 %v3740, %v3807
        %v3809 = vrot.slane %v3808, 2
        %v3810 = vadd.f32 %v3808, %v3809
        %v3811 = vrot.slane %v3810, 1
        %v3812 = vadd.f32 %v3810, %v3811
        %v3813 = vrot.slane %v3741, 4
        %v3814 = vadd.f32 %v3741, %v3813
        %v3815 = vrot.slane %v3814, 2
        %v3816 = vadd.f32 %v3814, %v3815
        %v3817 = vrot.slane %v3816, 1
        %v3818 = vadd.f32 %v3816, %v3817
        %v3819 = vrot.slane %v3742, 4
        %v3820 = vadd.f32 %v3742, %v3819
        %v3821 = vrot.slane %v3820, 2
        %v3822 = vadd.f32 %v3820, %v3821
        %v3823 = vrot.slane %v3822, 1
        %v3824 = vadd.f32 %v3822, %v3823
        %v3825 = vrot.slane %v3743, 4
        %v3826 = vadd.f32 %v3743, %v3825
        %v3827 = vrot.slane %v3826, 2
        %v3828 = vadd.f32 %v3826, %v3827
        %v3829 = vrot.slane %v3828, 1
        %v3830 = vadd.f32 %v3828, %v3829
        %v3831 = vrot.slane %v3744, 4
        %v3832 = vadd.f32 %v3744, %v3831
        %v3833 = vrot.slane %v3832, 2
        %v3834 = vadd.f32 %v3832, %v3833
        %v3835 = vrot.slane %v3834, 1
        %v3836 = vadd.f32 %v3834, %v3835
        %v3837 = vrot.slane %v3745, 4
        %v3838 = vadd.f32 %v3745, %v3837
        %v3839 = vrot.slane %v3838, 2
        %v3840 = vadd.f32 %v3838, %v3839
        %v3841 = vrot.slane %v3840, 1
        %v3842 = vadd.f32 %v3840, %v3841
        %v3843 = vrot.slane %v3746, 4
        %v3844 = vadd.f32 %v3746, %v3843
        %v3845 = vrot.slane %v3844, 2
        %v3846 = vadd.f32 %v3844, %v3845
        %v3847 = vrot.slane %v3846, 1
        %v3848 = vadd.f32 %v3846, %v3847
        %v3849 = vrot.slane %v3747, 4
        %v3850 = vadd.f32 %v3747, %v3849
        %v3851 = vrot.slane %v3850, 2
        %v3852 = vadd.f32 %v3850, %v3851
        %v3853 = vrot.slane %v3852, 1
        %v3854 = vadd.f32 %v3852, %v3853
        %v3855 = vrot.slane %v3748, 4
        %v3856 = vadd.f32 %v3748, %v3855
        %v3857 = vrot.slane %v3856, 2
        %v3858 = vadd.f32 %v3856, %v3857
        %v3859 = vrot.slane %v3858, 1
        %v3860 = vadd.f32 %v3858, %v3859
        %v3861 = vrot.slane %v3749, 4
        %v3862 = vadd.f32 %v3749, %v3861
        %v3863 = vrot.slane %v3862, 2
        %v3864 = vadd.f32 %v3862, %v3863
        %v3865 = vrot.slane %v3864, 1
        %v3866 = vadd.f32 %v3864, %v3865
        %v3867 = vrot.slane %v3750, 4
        %v3868 = vadd.f32 %v3750, %v3867
        %v3869 = vrot.slane %v3868, 2
        %v3870 = vadd.f32 %v3868, %v3869
        %v3871 = vrot.slane %v3870, 1
        %v3872 = vadd.f32 %v3870, %v3871
        %v3873 = vrot.slane %v3751, 4
        %v3874 = vadd.f32 %v3751, %v3873
        %v3875 = vrot.slane %v3874, 2
        %v3876 = vadd.f32 %v3874, %v3875
        %v3877 = vrot.slane %v3876, 1
        %v3878 = vadd.f32 %v3876, %v3877
        %v3879 = vrot.slane %v3752, 4
        %v3880 = vadd.f32 %v3752, %v3879
        %v3881 = vrot.slane %v3880, 2
        %v3882 = vadd.f32 %v3880, %v3881
        %v3883 = vrot.slane %v3882, 1
        %v3884 = vadd.f32 %v3882, %v3883
        %v3885 = vrot.slane %v3753, 4
        %v3886 = vadd.f32 %v3753, %v3885
        %v3887 = vrot.slane %v3886, 2
        %v3888 = vadd.f32 %v3886, %v3887
        %v3889 = vrot.slane %v3888, 1
        %v3890 = vadd.f32 %v3888, %v3889
        %v3891 = vrot.slane %v3754, 4
        %v3892 = vadd.f32 %v3754, %v3891
        %v3893 = vrot.slane %v3892, 2
        %v3894 = vadd.f32 %v3892, %v3893
        %v3895 = vrot.slane %v3894, 1
        %v3896 = vadd.f32 %v3894, %v3895
        %v3897 = vrot.slane %v3755, 4
        %v3898 = vadd.f32 %v3755, %v3897
        %v3899 = vrot.slane %v3898, 2
        %v3900 = vadd.f32 %v3898, %v3899
        %v3901 = vrot.slane %v3900, 1
        %v3902 = vadd.f32 %v3900, %v3901
        %v3903 = vrot.slane %v3756, 4
        %v3904 = vadd.f32 %v3756, %v3903
        %v3905 = vrot.slane %v3904, 2
        %v3906 = vadd.f32 %v3904, %v3905
        %v3907 = vrot.slane %v3906, 1
        %v3908 = vadd.f32 %v3906, %v3907
        %v3909 = vrot.slane %v3757, 4
        %v3910 = vadd.f32 %v3757, %v3909
        %v3911 = vrot.slane %v3910, 2
        %v3912 = vadd.f32 %v3910, %v3911
        %v3913 = vrot.slane %v3912, 1
        %v3914 = vadd.f32 %v3912, %v3913
        %v3915 = vrot.slane %v3758, 4
        %v3916 = vadd.f32 %v3758, %v3915
        %v3917 = vrot.slane %v3916, 2
        %v3918 = vadd.f32 %v3916, %v3917
        %v3919 = vrot.slane %v3918, 1
        %v3920 = vadd.f32 %v3918, %v3919
        %v3921 = vrot.slane %v3759, 4
        %v3922 = vadd.f32 %v3759, %v3921
        %v3923 = vrot.slane %v3922, 2
        %v3924 = vadd.f32 %v3922, %v3923
        %v3925 = vrot.slane %v3924, 1
        %v3926 = vadd.f32 %v3924, %v3925
        %v3927 = vrot.slane %v3760, 4
        %v3928 = vadd.f32 %v3760, %v3927
        %v3929 = vrot.slane %v3928, 2
        %v3930 = vadd.f32 %v3928, %v3929
        %v3931 = vrot.slane %v3930, 1
        %v3932 = vadd.f32 %v3930, %v3931
        %v3933 = vrot.slane %v3761, 4
        %v3934 = vadd.f32 %v3761, %v3933
        %v3935 = vrot.slane %v3934, 2
        %v3936 = vadd.f32 %v3934, %v3935
        %v3937 = vrot.slane %v3936, 1
        %v3938 = vadd.f32 %v3936, %v3937
        %v3939 = vrot.slane %v3762, 4
        %v3940 = vadd.f32 %v3762, %v3939
        %v3941 = vrot.slane %v3940, 2
        %v3942 = vadd.f32 %v3940, %v3941
        %v3943 = vrot.slane %v3942, 1
        %v3944 = vadd.f32 %v3942, %v3943
        %v3945 = vrot.slane %v3763, 4
        %v3946 = vadd.f32 %v3763, %v3945
        %v3947 = vrot.slane %v3946, 2
        %v3948 = vadd.f32 %v3946, %v3947
        %v3949 = vrot.slane %v3948, 1
        %v3950 = vadd.f32 %v3948, %v3949
        %v3951 = vrot.slane %v3764, 4
        %v3952 = vadd.f32 %v3764, %v3951
        %v3953 = vrot.slane %v3952, 2
        %v3954 = vadd.f32 %v3952, %v3953
        %v3955 = vrot.slane %v3954, 1
        %v3956 = vadd.f32 %v3954, %v3955
        %v3957 = vadd.f32 %v3354, %v3770
        %v3958 = vadd.f32 %v3360, %v3776
        %v3959 = vadd.f32 %v3366, %v3782
        %v3960 = vadd.f32 %v3372, %v3788
        %v3961 = vadd.f32 %v3378, %v3794
        %v3962 = vadd.f32 %v3384, %v3800
        %v3963 = vadd.f32 %v3390, %v3806
        %v3964 = vadd.f32 %v3396, %v3812
        %v3965 = vadd.f32 %v3402, %v3818
        %v3966 = vadd.f32 %v3408, %v3824
        %v3967 = vadd.f32 %v3414, %v3830
        %v3968 = vadd.f32 %v3420, %v3836
        %v3969 = vadd.f32 %v3426, %v3842
        %v3970 = vadd.f32 %v3432, %v3848
        %v3971 = vadd.f32 %v3438, %v3854
        %v3972 = vadd.f32 %v3444, %v3860
        %v3973 = vadd.f32 %v3450, %v3866
        %v3974 = vadd.f32 %v3456, %v3872
        %v3975 = vadd.f32 %v3462, %v3878
        %v3976 = vadd.f32 %v3468, %v3884
        %v3977 = vadd.f32 %v3474, %v3890
        %v3978 = vadd.f32 %v3480, %v3896
        %v3979 = vadd.f32 %v3486, %v3902
        %v3980 = vadd.f32 %v3492, %v3908
        %v3981 = vadd.f32 %v3498, %v3914
        %v3982 = vadd.f32 %v3504, %v3920
        %v3983 = vadd.f32 %v3510, %v3926
        %v3984 = vadd.f32 %v3516, %v3932
        %v3985 = vadd.f32 %v3522, %v3938
        %v3986 = vadd.f32 %v3528, %v3944
        %v3987 = vadd.f32 %v3534, %v3950
        %v3988 = vadd.f32 %v3540, %v3956
        %v4021 = vsel %vm475, %v3958, %v3957
        %v4022 = vsel %vm478, %v3959, %v4021
        %v4023 = vsel %vm481, %v3960, %v4022
        %v4024 = vsel %vm1394, %v3961, %v4023
        %v4025 = vsel %vm1396, %v3962, %v4024
        %v4026 = vsel %vm1398, %v3963, %v4025
        %v4027 = vsel %vm1400, %v3964, %v4026
        %v4028 = vsel %vm475, %v3966, %v3965
        %v4029 = vsel %vm478, %v3967, %v4028
        %v4030 = vsel %vm481, %v3968, %v4029
        %v4031 = vsel %vm1394, %v3969, %v4030
        %v4032 = vsel %vm1396, %v3970, %v4031
        %v4033 = vsel %vm1398, %v3971, %v4032
        %v4034 = vsel %vm1400, %v3972, %v4033
        %v4035 = vsel %vm475, %v3974, %v3973
        %v4036 = vsel %vm478, %v3975, %v4035
        %v4037 = vsel %vm481, %v3976, %v4036
        %v4038 = vsel %vm1394, %v3977, %v4037
        %v4039 = vsel %vm1396, %v3978, %v4038
        %v4040 = vsel %vm1398, %v3979, %v4039
        %v4041 = vsel %vm1400, %v3980, %v4040
        %v4042 = vsel %vm475, %v3982, %v3981
        %v4043 = vsel %vm478, %v3983, %v4042
        %v4044 = vsel %vm481, %v3984, %v4043
        %v4045 = vsel %vm1394, %v3985, %v4044
        %v4046 = vsel %vm1396, %v3986, %v4045
        %v4047 = vsel %vm1398, %v3987, %v4046
        %v4048 = vsel %vm1400, %v3988, %v4047
        %v4053 = vpack.c.bf16 %v4034, %v4027
        %v4054 = vpack.c.bf16 %v1445, %v1444
        %v4055 = vpack.c.bf16 %v4048, %v4041
        %v4056 = vpack.c.bf16 %v1447, %v1446
        %v4089 = vunpack.c.l.b16 %v1448
        %v4090 = vunpack.c.l.b16 %v1449
        %v4091 = vunpack.c.l.b16 %v1450
        %v4092 = vunpack.c.l.b16 %v1451
        %v4093 = vunpack.c.l.b16 %v1452
        %v4094 = vunpack.c.l.b16 %v1453
        %v4095 = vunpack.c.l.b16 %v1454
        %v4096 = vunpack.c.l.b16 %v1455
        %v4097 = vunpack.c.l.b16 %v1456
        %v4098 = vunpack.c.l.b16 %v1457
        %v4099 = vunpack.c.l.b16 %v1458
        %v4100 = vunpack.c.l.b16 %v1459
        %v4101 = vunpack.c.l.b16 %v1460
        %v4102 = vunpack.c.l.b16 %v1461
        %v4103 = vunpack.c.l.b16 %v1462
        %v4104 = vunpack.c.l.b16 %v1463
        %v4105 = vunpack.c.l.b16 %v1464
        %v4106 = vunpack.c.l.b16 %v1465
        %v4107 = vunpack.c.l.b16 %v1466
        %v4108 = vunpack.c.l.b16 %v1467
        %v4109 = vunpack.c.l.b16 %v1468
        %v4110 = vunpack.c.l.b16 %v1469
        %v4111 = vunpack.c.l.b16 %v1470
        %v4112 = vunpack.c.l.b16 %v1471
        %v4113 = vunpack.c.l.b16 %v1472
        %v4114 = vunpack.c.l.b16 %v1473
        %v4115 = vunpack.c.l.b16 %v1474
        %v4116 = vunpack.c.l.b16 %v1475
        %v4117 = vunpack.c.l.b16 %v1476
        %v4118 = vunpack.c.l.b16 %v1477
        %v4119 = vunpack.c.l.b16 %v1478
        %v4120 = vunpack.c.l.b16 %v1479
        %v4121 = vpack.c.b16 %v4090, %v4089
        %v4122 = vpack.c.b16 %v4092, %v4091
        %v4123 = vpack.c.b16 %v4094, %v4093
        %v4124 = vpack.c.b16 %v4096, %v4095
        %v4125 = vpack.c.b16 %v4098, %v4097
        %v4126 = vpack.c.b16 %v4100, %v4099
        %v4127 = vpack.c.b16 %v4102, %v4101
        %v4128 = vpack.c.b16 %v4104, %v4103
        %v4129 = vpack.c.b16 %v4106, %v4105
        %v4130 = vpack.c.b16 %v4108, %v4107
        %v4131 = vpack.c.b16 %v4110, %v4109
        %v4132 = vpack.c.b16 %v4112, %v4111
        %v4133 = vpack.c.b16 %v4114, %v4113
        %v4134 = vpack.c.b16 %v4116, %v4115
        %v4135 = vpack.c.b16 %v4118, %v4117
        %v4136 = vpack.c.b16 %v4120, %v4119
        %4153 = vmatprep.subr.bf16.mxu0 0
        %4154 = vmatpush1.bf16.msra.mxu0 %v4121
        %4155 = vmatprep.subr.bf16.mxu0 0
        %4156 = vmatpush1.bf16.msra.mxu0 %v4122
        %4157 = vmatprep.subr.bf16.mxu0 0
        %4158 = vmatpush1.bf16.msra.mxu0 %v4123
        %4159 = vmatprep.subr.bf16.mxu0 0
        %4160 = vmatpush1.bf16.msra.mxu0 %v4124
        %4161 = vmatprep.subr.bf16.mxu0 0
        %4162 = vmatpush1.bf16.msra.mxu0 %v4125
        %4163 = vmatprep.subr.bf16.mxu0 0
        %4164 = vmatpush1.bf16.msra.mxu0 %v4126
        %4165 = vmatprep.subr.bf16.mxu0 0
        %4166 = vmatpush1.bf16.msra.mxu0 %v4127
        %4167 = vmatprep.subr.bf16.mxu0 0
        %4168 = vmatpush1.bf16.msra.mxu0 %v4128
        %4169 = vmatprep.subr.bf16.mxu0 0
        %4170 = vmatpush1.bf16.msra.mxu0 %v4129
        %4171 = vmatprep.subr.bf16.mxu0 0
        %4172 = vmatpush1.bf16.msra.mxu0 %v4130
        %4173 = vmatprep.subr.bf16.mxu0 0
        %4174 = vmatpush1.bf16.msra.mxu0 %v4131
        %4175 = vmatprep.subr.bf16.mxu0 0
        %4176 = vmatpush1.bf16.msra.mxu0 %v4132
        %4177 = vmatprep.subr.bf16.mxu0 0
        %4178 = vmatpush1.bf16.msra.mxu0 %v4133
        %4179 = vmatprep.subr.bf16.mxu0 0
        %4180 = vmatpush1.bf16.msra.mxu0 %v4134
        %4181 = vmatprep.subr.bf16.mxu0 0
        %4182 = vmatpush1.bf16.msra.mxu0 %v4135
        %4183 = vmatprep.subr.bf16.mxu0 0
        %4184 = vmatpush1.bf16.msra.mxu0 %v4136
        %4185 = vmatprep.mubr.bf16.mxu0 %v4054
        %4186 = vmatmul.mubr.bf16.gmra.mrb[0].mxu0 %v4053
        %v4187 = vpop.f32.mrb[0].mxu0
        %v4188 = vadd.f32 0.0, %v4187
        %v4189 = vpop.f32.mrb[0].mxu0
        %v4190 = vpop.f32.mrb[0].mxu0
        %v4191 = vadd.f32 0.0, %v4190
        %v4192 = vpop.f32.mrb[0].mxu0
        %4193 = vmatprep.mubr.bf16.mxu0 %v4056
        %4194 = vmatmul.mubr.bf16.gmra.mrb[0].mxu0 %v4055
        %v4195 = vpop.f32.mrb[0].mxu0
        %v4196 = vadd.f32 0.0, %v4195
        %v4197 = vpop.f32.mrb[0].mxu0
        %v4198 = vpop.f32.mrb[0].mxu0
        %v4199 = vadd.f32 0.0, %v4198
        %v4200 = vpop.f32.mrb[0].mxu0
        %4201 = vdwg.mxu0
        %v4202 = vmax.f32 %v4188, 0.0
        %v4203 = vmax.f32 %v4191, 0.0
        %v4204 = vmax.f32 %v4196, 0.0
        %v4205 = vmax.f32 %v4199, 0.0
        %v4206 = vsel %vm616, 1, 0
        %v4207 = vsel %vm617, 1, 0
        %v4208 = vsel %vm618, 1, 0
        %v4209 = vsel %vm619, 1, 0
        %4210 = vset.pattern.permute.xlu0 0
        %4211 = vperm.xlu0 %4210, %v4206
        %v4212 = vpop.permute.xlu0 %4211
        %4213 = vset.pattern.permute.xlu0 0
        %4214 = vperm.xlu0 %4213, %v4207
        %v4215 = vpop.permute.xlu0 %4214
        %4216 = vset.pattern.permute.xlu0 0
        %4217 = vperm.xlu0 %4216, %v4208
        %v4218 = vpop.permute.xlu0 %4217
        %4219 = vset.pattern.permute.xlu0 0
        %4220 = vperm.xlu0 %4219, %v4209
        %v4221 = vpop.permute.xlu0 %4220
        %vm4222 = vcmp.eq.s32.totalorder %v4212, 1
        %vm4223 = vcmp.eq.s32.totalorder %v4215, 1
        %vm4224 = vcmp.eq.s32.totalorder %v4218, 1
        %vm4225 = vcmp.eq.s32.totalorder %v4221, 1
        %v4226 = vsel %vm4222, %v4202, 0.0
        %v4227 = vsel %vm4223, %v4203, 0.0
        %v4228 = vsel %vm4224, %v4204, 0.0
        %v4229 = vsel %vm4225, %v4205, 0.0
        %v4230 = vpack.c.bf16 %v4227, %v4226
        %v4231 = vpack.c.bf16 %v4229, %v4228
        %v4234 = vunpack.c.l.b16 %v4230
        %v4235 = vunpack.c.h.b16 %v4230
        %v4236 = vunpack.c.l.b16 %v4231
        %v4237 = vunpack.c.h.b16 %v4231
        %v4238 = vpack.c.b16 %v4234, %v4234
        %v4239 = vpack.c.b16 %v4235, %v4235
        %v4240 = vpack.c.b16 %v4236, %v4236
        %v4241 = vpack.c.b16 %v4237, %v4237
        %4246 = vst [vmem:[%s415] sm:$0xf] %v4238
        %4247 = vst [vmem:[%s415 + $0x4] sm:$0xf] %v4239
        %4248 = vst [vmem:[%s415 + $0x8] sm:$0xf] %v4240
        %4249 = vst [vmem:[%s415 + $0xc] sm:$0xf] %v4241
        %s4250 = sand.u32 %s227, 1
        %s4251 = scalar_lea.sflag [#allocation4], %s4250
        %s4252 = sand.u32 %s227, 1
        %s4253 = smul.addr %s4252, 16
        %s4254 = scalar_lea.vmem [#allocation8], %s4253
        // Predicated region
        $region65: #{tpu_custom_call.1} parent=51 // pred_check
          %p4255 = pneg %p237
        $region66: #{tpu_custom_call.1} parent=51 // pred_check_branch
          %4257 = sbr.rel (%p4255) target = $region68
        $region67: #{tpu_custom_call.1} parent=51 // pred_region
          %s4258 = smul.u32 4, %s26
          %s4260 = ssub.s32 256, 256
          %4261 = vsyncadd %s4251, %s4260
          %s4262 = smul.addr %s4258, 64
          %s4263 = scalar_lea.hbm %s8, %s4262
          %s4264 = sshll.u32 %s4254, 4
          %s4265 = int_to_ptr.vmem [resolvable:$true] %s4264
          %4270 = dma.vmem_to_hbm [thread:$0]  %s4265, 256, %s4263, %s4251, 64, 64, 4
        $region68: #{tpu_custom_call.1} parent=51 // pred_fallthru
          _
      $region52: #{tpu_custom_call.1} parent=5 // pred_fallthru
        _
      %p4271 = scmp.le.s32.totalorder 2, %s21
      // Predicated region
      $region69: #{tpu_custom_call.1} parent=5 // pred_check
        %p4272 = pneg %p4271
      $region70: #{tpu_custom_call.1} parent=5 // pred_check_branch
        %4274 = sbr.rel (%p4272) target = $region72
      $region71: #{tpu_custom_call.1} parent=5 // pred_region
        %s4275 = ssub.s32 %s21, 2
        // Predicated region
        $region73: #{tpu_custom_call.1} parent=71 // pred_check
          %p4276 = pneg %p243
        $region74: #{tpu_custom_call.1} parent=71 // pred_check_branch
          %4278 = sbr.rel (%p4276) target = $region76
        $region75: #{tpu_custom_call.1} parent=71 // pred_region
          %s4279 = sand.u32 %s228, 1
          %s4280 = scalar_lea.sflag [#allocation4], %s4279
          %s4281 = sand.u32 %s228, 1
          %s4282 = smul.addr %s4281, 16
          %s4283 = scalar_lea.vmem [#allocation8], %s4282
          %4284 = dma.done %s4280, 256
        $region76: #{tpu_custom_call.1} parent=71 // pred_fallthru
          _
      $region72: #{tpu_custom_call.1} parent=5 // pred_fallthru
        _
    $region6: #{tpu_custom_call.1} parent=1 // loop_footer
      %s25 = sadd.s32 1, %s21
    $region7: #{tpu_custom_call.1} parent=1 // loop_footer_branch
      %20 = sbr.rel target = $region3
    $region8: #{tpu_custom_call.1} parent=1 // loop_exit
      _
    %4285 = vsyncpa [#allocation3], 1
    %s4286 = scalar_lea.sflag [#allocation3], 1
    %4287 = vsyncpa %s4286, 1
    %4288 = vsyncpa [#allocation6], 1
    %4289 = vsyncpa [#allocation4], 1
    %s4290 = scalar_lea.sflag [#allocation4], 1
    %4291 = vsyncpa %s4290, 1

</llo_original>
